<compile_context>
chip_gen: v5e
topology: v5e:2x2
jax: 0.10.0
libtpu: 0.0.40
codegen_flags: <defaults>
</compile_context>

<pallas_src>
import functools

import jax
import jax.numpy as jnp
from jax.experimental import pallas as pl
from jax.experimental.pallas import tpu as pltpu

G1, G2, G3 = 256, 512, 1024  # hidden sizes from the PyTorch module


def _round_up(a, m):
    return ((a + m - 1) // m) * m


def _default_act_dtype():
    """bf16 activations on bf16-capable VPUs (v6e/v7x); f32 on older chips."""
    try:
        kind = jax.devices()[0].device_kind.lower()
    except Exception:
        return jnp.bfloat16
    if any(tag in kind for tag in ("v2", "v3", "v4", "v5")):
        return jnp.float32
    return jnp.bfloat16


def _leaky_relu(z_f32, leak, act_dtype):
    """LeakyReLU (0 <= leak < 1) -> bf16 operand for the next matmul."""
    z = z_f32.astype(act_dtype)
    z = jnp.maximum(z, jnp.asarray(leak, act_dtype) * z)
    return z.astype(jnp.bfloat16)


# ----------------------------------------------------------------------------
# Fused MLP kernel: one batch-tile per grid step, all weights VMEM-resident.
# ----------------------------------------------------------------------------
def _generator_kernel(x_ref,
                      w0_ref, b0_ref,
                      w1_ref, b1_ref,
                      w2_ref, b2_ref,
                      w3_ref, b3_ref,
                      o_ref,
                      *, leak, act_dtype):
    # bf16 matmul operands, f32 MXU accumulation + bias.
    x = x_ref[...].astype(jnp.bfloat16)            # in-kernel downcast
    h = jnp.dot(x, w0_ref[...], preferred_element_type=jnp.float32) + b0_ref[...]
    h = _leaky_relu(h, leak, act_dtype)

    h = jnp.dot(h, w1_ref[...], preferred_element_type=jnp.float32) + b1_ref[...]
    h = _leaky_relu(h, leak, act_dtype)

    h = jnp.dot(h, w2_ref[...], preferred_element_type=jnp.float32) + b2_ref[...]
    h = _leaky_relu(h, leak, act_dtype)

    h = jnp.dot(h, w3_ref[...], preferred_element_type=jnp.float32) + b3_ref[...]
    o_ref[...] = jnp.tanh(h).astype(o_ref.dtype)   # f32 tanh on EUP, bf16 store


# ----------------------------------------------------------------------------
# One-time parameter prep (do NOT re-cast per forward call).
# ----------------------------------------------------------------------------
def prepare_params(params_f32):
    """bf16 weights (half the DMA, 2x MXU rate), f32 biases."""
    prepped = {}
    for i in range(4):
        prepped[f"w{i}"] = params_f32[f"w{i}"].astype(jnp.bfloat16)
        prepped[f"b{i}"] = params_f32[f"b{i}"].astype(jnp.float32)
    return prepped


# ----------------------------------------------------------------------------
# Wrapper: flatten -> batch-tiled pallas_call -> reshape (mirrors the module).
# `params` must already be prepared with prepare_params().
# ----------------------------------------------------------------------------
def simple_generator_forward(x, params, output_shape, leak, act_dtype=None):
    if act_dtype is None:
        act_dtype = _default_act_dtype()

    nfeatures = params["w0"].shape[0]
    n_out_flat = params["w3"].shape[1]

    x2d = jnp.reshape(x, (-1, nfeatures))          # free (contiguous view)
    B = x2d.shape[0]

    # Batch tile: multiple of 8 sublanes; 512 amortizes the ~0.35us per-step
    # overhead and the per-layer MXU weight pushes, while staying well under
    # VMEM even on v7x (64 MiB).  No wrapper-side padding: pl.cdiv + masked
    # partial last tile.
    TB = min(512, _round_up(B, 8))
    grid = (pl.cdiv(B, TB),)

    # Weights/biases: constant index_map -> stay VMEM-resident across the grid.
    const_spec = lambda shape: pl.BlockSpec(shape, lambda i: (0, 0))
    in_specs = [
        pl.BlockSpec((TB, nfeatures), lambda i: (i, 0)),
        const_spec(params["w0"].shape), const_spec(params["b0"].shape),
        const_spec(params["w1"].shape), const_spec(params["b1"].shape),
        const_spec(params["w2"].shape), const_spec(params["b2"].shape),
        const_spec(params["w3"].shape), const_spec(params["b3"].shape),
    ]
    out_specs = pl.BlockSpec((TB, n_out_flat), lambda i: (i, 0))

    # Right-sized VMEM budget: (double-buffered) resident weights + pipelined
    # I/O tiles + per-tile intermediates + headroom; clamp to [16, 32] MiB.
    weight_bytes = sum(int(params[f"w{i}"].size) * 2 for i in range(4)) \
        + sum(int(params[f"b{i}"].size) * 4 for i in range(4))
    io_bytes = 2 * (TB * nfeatures * 4 + TB * n_out_flat * 2)
    act_bytes = TB * (G1 + G2 + G3) * (4 + 2)
    vmem_limit = 2 * weight_bytes + io_bytes + 2 * act_bytes + (4 << 20)
    vmem_limit = max(16 << 20, min(int(vmem_limit), 32 << 20))

    flops = 2 * B * (nfeatures * G1 + G1 * G2 + G2 * G3 + G3 * n_out_flat)
    bytes_accessed = (weight_bytes
                      + B * nfeatures * 4      # x (f32 in)
                      + B * n_out_flat * 2)    # out (bf16)
    cost = pl.CostEstimate(flops=flops,
                           transcendentals=B * n_out_flat,
                           bytes_accessed=bytes_accessed)

    # NOTE: leak / act_dtype are trace-time constants (new values recompile).
    kernel = functools.partial(_generator_kernel, leak=float(leak),
                               act_dtype=act_dtype)

    flat = pl.pallas_call(
        kernel,
        out_shape=jax.ShapeDtypeStruct((B, n_out_flat), jnp.bfloat16),
        grid=grid,
        in_specs=in_specs,
        out_specs=out_specs,
        compiler_params=pltpu.CompilerParams(
            dimension_semantics=("parallel",),   # v7x: shard batch over 2 TCs
            vmem_limit_bytes=vmem_limit),
        cost_estimate=cost,
    )(x2d,
      params["w0"], params["b0"],
      params["w1"], params["b1"],
      params["w2"], params["b2"],
      params["w3"], params["b3"])

    return jnp.reshape(flat, (-1,) + tuple(output_shape))


# ----------------------------------------------------------------------------
# Deterministic parameter construction (mimics nn.Linear's U(-1/sqrt(fan_in))
# init).  Weights are stored transposed as (in, out); master copy is f32.
# ----------------------------------------------------------------------------
def init_params(key, nfeatures, n_out_flat):
    dims = [(nfeatures, G1), (G1, G2), (G2, G3), (G3, n_out_flat)]
    params = {}
    for i, (fan_in, fan_out) in enumerate(dims):
        key, kw, kb = jax.random.split(key, 3)
        bound = 1.0 / jnp.sqrt(float(fan_in))
        params[f"w{i}"] = jax.random.uniform(
            kw, (fan_in, fan_out), jnp.float32, -bound, bound)
        params[f"b{i}"] = jax.random.uniform(
            kb, (1, fan_out), jnp.float32, -bound, bound)
    return params


# ----------------------------------------------------------------------------
# Pure-JAX reference with matching numerics (bf16 operands, f32 accumulate).
# ----------------------------------------------------------------------------
def reference_forward(x, params, output_shape, leak):
    nfeatures = params["w0"].shape[0]
    h = jnp.reshape(x, (-1, nfeatures)).astype(jnp.bfloat16)
    for i in range(3):
        z = jnp.dot(h, params[f"w{i}"].astype(jnp.bfloat16),
                    preferred_element_type=jnp.float32) \
            + params[f"b{i}"].astype(jnp.float32)
        h = jnp.where(z > 0, z, leak * z).astype(jnp.bfloat16)
    z = jnp.dot(h, params["w3"].astype(jnp.bfloat16),
                preferred_element_type=jnp.float32) \
        + params["b3"].astype(jnp.float32)
    out = jnp.tanh(z)
    return jnp.reshape(out, (-1,) + tuple(output_shape))


if __name__ == "__main__":
    # Module configuration (mirrors SimpleGenerator(nfeatures, n_out, leak)):
    nfeatures_tuple = (1, 4, 8, 8)     # -> nfeatures = prod([4, 8, 8]) = 256
    n_out = (1, 4, 8, 8)               # -> noutput_neurons = prod([4, 8, 8]) = 256
    leak = 0.2

    nfeatures = 4 * 8 * 8
    n_out_flat = 4 * 8 * 8

    key = jax.random.PRNGKey(0)
    kparam, kx = jax.random.split(key)
    params_f32 = init_params(kparam, nfeatures, n_out_flat)
    params = prepare_params(params_f32)   # one-time bf16/f32 cast (not per call)

    # Input latent batch: (2, 4, 8, 8), flattened to (2, 256) inside forward.
    x = jax.random.normal(kx, (2, 4, 8, 8), jnp.float32)

    fwd = jax.jit(functools.partial(simple_generator_forward,
                                    output_shape=n_out, leak=leak))
    out = fwd(x, params)
    out = jax.block_until_ready(out)

    ref = reference_forward(x, params, n_out, leak)
    assert out.shape == (2,) + tuple(n_out), out.shape
    assert jnp.allclose(out.astype(jnp.float32), ref.astype(jnp.float32),
                        atol=2e-2, rtol=2e-2), "mismatch vs reference"

    print("KERNEL_OK")
</pallas_src>

<mosaic_0001>
module attributes {stable_mosaic.version = 11 : i64} {
  func.func @_generator_kernel(%arg0: i32, %arg1: memref<8x256xf32, #tpu.memory_space<vmem>>, %arg2: memref<256x256xbf16, #tpu.memory_space<vmem>>, %arg3: memref<1x256xf32, #tpu.memory_space<vmem>>, %arg4: memref<256x512xbf16, #tpu.memory_space<vmem>>, %arg5: memref<1x512xf32, #tpu.memory_space<vmem>>, %arg6: memref<512x1024xbf16, #tpu.memory_space<vmem>>, %arg7: memref<1x1024xf32, #tpu.memory_space<vmem>>, %arg8: memref<1024x256xbf16, #tpu.memory_space<vmem>>, %arg9: memref<1x256xf32, #tpu.memory_space<vmem>>, %arg10: memref<8x256xbf16, #tpu.memory_space<vmem>>) attributes {dimension_semantics = [#tpu.dimension_semantics<parallel>], iteration_bounds = array<i64: 1>, scalar_prefetch = 0 : i64, scratch_operands = 0 : i64, tpu.core_type = #tpu.core_type<tc>, window_params = [{transform_indices = @transform_0, window_bounds = array<i64: 8, 256>}, {pipeline_mode = #tpu.pipeline_mode<synchronous>, transform_indices = @transform_1, window_bounds = array<i64: 256, 256>}, {pipeline_mode = #tpu.pipeline_mode<synchronous>, transform_indices = @transform_2, window_bounds = array<i64: 1, 256>}, {pipeline_mode = #tpu.pipeline_mode<synchronous>, transform_indices = @transform_3, window_bounds = array<i64: 256, 512>}, {pipeline_mode = #tpu.pipeline_mode<synchronous>, transform_indices = @transform_4, window_bounds = array<i64: 1, 512>}, {pipeline_mode = #tpu.pipeline_mode<synchronous>, transform_indices = @transform_5, window_bounds = array<i64: 512, 1024>}, {pipeline_mode = #tpu.pipeline_mode<synchronous>, transform_indices = @transform_6, window_bounds = array<i64: 1, 1024>}, {pipeline_mode = #tpu.pipeline_mode<synchronous>, transform_indices = @transform_7, window_bounds = array<i64: 1024, 256>}, {pipeline_mode = #tpu.pipeline_mode<synchronous>, transform_indices = @transform_8, window_bounds = array<i64: 1, 256>}, {transform_indices = @transform_9, window_bounds = array<i64: 8, 256>}]} {
    %c0 = arith.constant 0 : index
    %c0_0 = arith.constant 0 : index
    %0 = vector.load %arg1[%c0, %c0_0] : memref<8x256xf32, #tpu.memory_space<vmem>>, vector<8x256xf32>
    %1 = arith.truncf %0 : vector<8x256xf32> to vector<8x256xbf16>
    %c0_1 = arith.constant 0 : index
    %c0_2 = arith.constant 0 : index
    %2 = vector.load %arg2[%c0_1, %c0_2] : memref<256x256xbf16, #tpu.memory_space<vmem>>, vector<256x256xbf16>
    %cst = arith.constant dense<0.000000e+00> : vector<8x256xf32>
    %3 = tpu.matmul %1, %2, %cst {dimension_numbers = #tpu.dot_dimension_numbers<[1], [0], [0], [1], [0, 0, 1, 1], [], []>} : vector<8x256xbf16>, vector<256x256xbf16>, vector<8x256xf32> -> vector<8x256xf32>
    %c0_3 = arith.constant 0 : index
    %c0_4 = arith.constant 0 : index
    %4 = vector.load %arg3[%c0_3, %c0_4] : memref<1x256xf32, #tpu.memory_space<vmem>>, vector<1x256xf32>
    %5 = vector.broadcast %4 : vector<1x256xf32> to vector<8x256xf32>
    %6 = arith.addf %3, %5 : vector<8x256xf32>
    %7 = arith.truncf %6 : vector<8x256xf32> to vector<8x256xbf16>
    %cst_5 = arith.constant 2.001950e-01 : bf16
    %8 = vector.broadcast %cst_5 : bf16 to vector<8x256xbf16>
    %9 = arith.mulf %8, %7 : vector<8x256xbf16>
    %10 = arith.maximumf %7, %9 : vector<8x256xbf16>
    %c0_6 = arith.constant 0 : index
    %c0_7 = arith.constant 0 : index
    %11 = vector.load %arg4[%c0_6, %c0_7] : memref<256x512xbf16, #tpu.memory_space<vmem>>, vector<256x512xbf16>
    %cst_8 = arith.constant dense<0.000000e+00> : vector<8x512xf32>
    %12 = tpu.matmul %10, %11, %cst_8 {dimension_numbers = #tpu.dot_dimension_numbers<[1], [0], [0], [1], [0, 0, 1, 1], [], []>} : vector<8x256xbf16>, vector<256x512xbf16>, vector<8x512xf32> -> vector<8x512xf32>
    %c0_9 = arith.constant 0 : index
    %c0_10 = arith.constant 0 : index
    %13 = vector.load %arg5[%c0_9, %c0_10] : memref<1x512xf32, #tpu.memory_space<vmem>>, vector<1x512xf32>
    %14 = vector.broadcast %13 : vector<1x512xf32> to vector<8x512xf32>
    %15 = arith.addf %12, %14 : vector<8x512xf32>
    %16 = arith.truncf %15 : vector<8x512xf32> to vector<8x512xbf16>
    %cst_11 = arith.constant 2.001950e-01 : bf16
    %17 = vector.broadcast %cst_11 : bf16 to vector<8x512xbf16>
    %18 = arith.mulf %17, %16 : vector<8x512xbf16>
    %19 = arith.maximumf %16, %18 : vector<8x512xbf16>
    %c0_12 = arith.constant 0 : index
    %c0_13 = arith.constant 0 : index
    %20 = vector.load %arg6[%c0_12, %c0_13] : memref<512x1024xbf16, #tpu.memory_space<vmem>>, vector<512x1024xbf16>
    %cst_14 = arith.constant dense<0.000000e+00> : vector<8x1024xf32>
    %21 = tpu.matmul %19, %20, %cst_14 {dimension_numbers = #tpu.dot_dimension_numbers<[1], [0], [0], [1], [0, 0, 1, 1], [], []>} : vector<8x512xbf16>, vector<512x1024xbf16>, vector<8x1024xf32> -> vector<8x1024xf32>
    %c0_15 = arith.constant 0 : index
    %c0_16 = arith.constant 0 : index
    %22 = vector.load %arg7[%c0_15, %c0_16] : memref<1x1024xf32, #tpu.memory_space<vmem>>, vector<1x1024xf32>
    %23 = vector.broadcast %22 : vector<1x1024xf32> to vector<8x1024xf32>
    %24 = arith.addf %21, %23 : vector<8x1024xf32>
    %25 = arith.truncf %24 : vector<8x1024xf32> to vector<8x1024xbf16>
    %cst_17 = arith.constant 2.001950e-01 : bf16
    %26 = vector.broadcast %cst_17 : bf16 to vector<8x1024xbf16>
    %27 = arith.mulf %26, %25 : vector<8x1024xbf16>
    %28 = arith.maximumf %25, %27 : vector<8x1024xbf16>
    %c0_18 = arith.constant 0 : index
    %c0_19 = arith.constant 0 : index
    %29 = vector.load %arg8[%c0_18, %c0_19] : memref<1024x256xbf16, #tpu.memory_space<vmem>>, vector<1024x256xbf16>
    %cst_20 = arith.constant dense<0.000000e+00> : vector<8x256xf32>
    %30 = tpu.matmul %28, %29, %cst_20 {dimension_numbers = #tpu.dot_dimension_numbers<[1], [0], [0], [1], [0, 0, 1, 1], [], []>} : vector<8x1024xbf16>, vector<1024x256xbf16>, vector<8x256xf32> -> vector<8x256xf32>
    %c0_21 = arith.constant 0 : index
    %c0_22 = arith.constant 0 : index
    %31 = vector.load %arg9[%c0_21, %c0_22] : memref<1x256xf32, #tpu.memory_space<vmem>>, vector<1x256xf32>
    %32 = vector.broadcast %31 : vector<1x256xf32> to vector<8x256xf32>
    %33 = arith.addf %30, %32 : vector<8x256xf32>
    %34 = math.tanh %33 : vector<8x256xf32>
    %35 = arith.truncf %34 : vector<8x256xf32> to vector<8x256xbf16>
    %c0_23 = arith.constant 0 : index
    %c0_24 = arith.constant 0 : index
    %36 = vector.load %arg10[%c0_23, %c0_24] : memref<8x256xbf16, #tpu.memory_space<vmem>>, vector<8x256xbf16>
    tpu.vector_store %arg10[%c0_23, %c0_24], %35 {strides = array<i32>} : memref<8x256xbf16, #tpu.memory_space<vmem>>, vector<8x256xbf16>,
    return
  }
  func.func @transform_0(%arg0: i32) -> (i32, i32) {
    %c0_i32 = arith.constant 0 : i32
    %c0_i32_0 = arith.constant 0 : i32
    return %arg0, %c0_i32 : i32, i32
  }
  func.func @transform_1(%arg0: i32) -> (i32, i32) {
    %c0_i32 = arith.constant 0 : i32
    %c0_i32_0 = arith.constant 0 : i32
    %c0_i32_1 = arith.constant 0 : i32
    return %c0_i32, %c0_i32_0 : i32, i32
  }
  func.func @transform_2(%arg0: i32) -> (i32, i32) {
    %c0_i32 = arith.constant 0 : i32
    %c0_i32_0 = arith.constant 0 : i32
    %c0_i32_1 = arith.constant 0 : i32
    return %c0_i32, %c0_i32_0 : i32, i32
  }
  func.func @transform_3(%arg0: i32) -> (i32, i32) {
    %c0_i32 = arith.constant 0 : i32
    %c0_i32_0 = arith.constant 0 : i32
    %c0_i32_1 = arith.constant 0 : i32
    return %c0_i32, %c0_i32_0 : i32, i32
  }
  func.func @transform_4(%arg0: i32) -> (i32, i32) {
    %c0_i32 = arith.constant 0 : i32
    %c0_i32_0 = arith.constant 0 : i32
    %c0_i32_1 = arith.constant 0 : i32
    return %c0_i32, %c0_i32_0 : i32, i32
  }
  func.func @transform_5(%arg0: i32) -> (i32, i32) {
    %c0_i32 = arith.constant 0 : i32
    %c0_i32_0 = arith.constant 0 : i32
    %c0_i32_1 = arith.constant 0 : i32
    return %c0_i32, %c0_i32_0 : i32, i32
  }
  func.func @transform_6(%arg0: i32) -> (i32, i32) {
    %c0_i32 = arith.constant 0 : i32
    %c0_i32_0 = arith.constant 0 : i32
    %c0_i32_1 = arith.constant 0 : i32
    return %c0_i32, %c0_i32_0 : i32, i32
  }
  func.func @transform_7(%arg0: i32) -> (i32, i32) {
    %c0_i32 = arith.constant 0 : i32
    %c0_i32_0 = arith.constant 0 : i32
    %c0_i32_1 = arith.constant 0 : i32
    return %c0_i32, %c0_i32_0 : i32, i32
  }
  func.func @transform_8(%arg0: i32) -> (i32, i32) {
    %c0_i32 = arith.constant 0 : i32
    %c0_i32_0 = arith.constant 0 : i32
    %c0_i32_1 = arith.constant 0 : i32
    return %c0_i32, %c0_i32_0 : i32, i32
  }
  func.func @transform_9(%arg0: i32) -> (i32, i32) {
    %c0_i32 = arith.constant 0 : i32
    %c0_i32_0 = arith.constant 0 : i32
    return %arg0, %c0_i32 : i32, i32
  }
}

</mosaic_0001>

<llo_original>
// kernel: simple_generator_forward.1
$region0: #{simple_generator_forward.1}
  #allocation0 [shape = 'u32[]', space=smem, size = 0x4, offset = 0x4, fixed_abs, tag = 'smem constant byte address 0x4 - core index']
  #allocation1 [shape = 'u32[72,128]{1,0:T(1,128)}', space=vmem, size = 0x9000, scoped, tag = 'internal scratch']
  %s0 = inlined_call_operand.vmem [shape: f32[2,256], index: 0, kind: input, shape index: {}]
  %s1 = inlined_call_operand.hbm [shape: bf16[256,256], index: 1, kind: input, shape index: {}]
  %s2 = inlined_call_operand.vmem [shape: f32[1,256], index: 2, kind: input, shape index: {}]
  %s3 = inlined_call_operand.hbm [shape: bf16[256,512], index: 3, kind: input, shape index: {}]
  %s4 = inlined_call_operand.vmem [shape: f32[1,512], index: 4, kind: input, shape index: {}]
  %s5 = inlined_call_operand.hbm [shape: bf16[512,1024], index: 5, kind: input, shape index: {}]
  %s6 = inlined_call_operand.vmem [shape: f32[1,1024], index: 6, kind: input, shape index: {}]
  %s7 = inlined_call_operand.hbm [shape: bf16[1024,256], index: 7, kind: input, shape index: {}]
  %s8 = inlined_call_operand.vmem [shape: f32[1,256], index: 8, kind: input, shape index: {}]
  %s9 = inlined_call_operand.vmem [shape: bf16[2,256], index: 9, kind: output, shape index: {}]
  %s10 = sld [smem:[#allocation0]]
  $region92: #{simple_generator_forward.1} parent=0
    _
  %s12 = ssub.s32 1, %s10
  %s13 = scalar_select 0, %s12, %s10
  $region1: #{simple_generator_forward.1} parent=0
    #allocation2 [shape = 'u8[131072]{0}', space=vmem, size = 0x20000, scoped, tag = 'input window, operand 1, single buffered']
    #allocation3 [shape = 's32[1]{0}', space=sflag, size = 0x4, scoped, tag = 'scoped memory for simple_generator_forward.1']
    #allocation4 [shape = 'u8[262144]{0}', space=vmem, size = 0x40000, scoped, tag = 'input window, operand 3, single buffered']
    #allocation5 [shape = 's32[1]{0}', space=sflag, size = 0x4, scoped, tag = 'scoped memory for simple_generator_forward.1']
    #allocation6 [shape = 'u8[1048576]{0}', space=vmem, size = 0x100000, scoped, tag = 'input window, operand 5, single buffered']
    #allocation7 [shape = 'u8[524288]{0}', space=vmem, size = 0x80000, scoped, tag = 'input window, operand 7, single buffered']
    #allocation8 [shape = 's32[1]{0}', space=sflag, size = 0x4, scoped, tag = 'scoped memory for simple_generator_forward.1']
    #allocation9 [shape = 'u8[4096]{0}', space=vmem, size = 0x1000, scoped, tag = 'output window, operand 0, single buffered']
    %14 = vsyncpa [#allocation3], 0
    %15 = vsyncpa [#allocation5], 0
    %16 = vsyncpa [#allocation8], 0
    // Predicated region
    $region2: #{simple_generator_forward.1} parent=1 // pred_check
      _
    $region3: #{simple_generator_forward.1} parent=1 // pred_check_branch
      %18 = sbr.rel (0) target = $region5
    $region4: #{simple_generator_forward.1} parent=1 // pred_region
      _
    $region5: #{simple_generator_forward.1} parent=1 // pred_fallthru
      _
    // Predicated region
    $region6: #{simple_generator_forward.1} parent=1 // pred_check
      _
    $region7: #{simple_generator_forward.1} parent=1 // pred_check_branch
      %20 = sbr.rel (0) target = $region9
    $region8: #{simple_generator_forward.1} parent=1 // pred_region
      %22 = vsyncadd [#allocation3], 0
      %s23 = sshll.u32 %s1, 4
      %s24 = int_to_ptr.hbm [resolvable:$true] %s23
      %s25 = sshll.u32 [#allocation2], 4
      %s26 = int_to_ptr.vmem [resolvable:$true] %s25
      %31 = dma.hbm_to_vmem [thread:$0]  %s24, 4096, %s26, [#allocation3], 128, 128, 8
    $region9: #{simple_generator_forward.1} parent=1 // pred_fallthru
      _
    // Predicated region
    $region10: #{simple_generator_forward.1} parent=1 // pred_check
      _
    $region11: #{simple_generator_forward.1} parent=1 // pred_check_branch
      %33 = sbr.rel (0) target = $region13
    $region12: #{simple_generator_forward.1} parent=1 // pred_region
      _
    $region13: #{simple_generator_forward.1} parent=1 // pred_fallthru
      _
    // Predicated region
    $region14: #{simple_generator_forward.1} parent=1 // pred_check
      _
    $region15: #{simple_generator_forward.1} parent=1 // pred_check_branch
      %35 = sbr.rel (0) target = $region17
    $region16: #{simple_generator_forward.1} parent=1 // pred_region
      %37 = vsyncadd [#allocation5], 0
      %s38 = sshll.u32 %s3, 4
      %s39 = int_to_ptr.hbm [resolvable:$true] %s38
      %s40 = sshll.u32 [#allocation4], 4
      %s41 = int_to_ptr.vmem [resolvable:$true] %s40
      %46 = dma.hbm_to_vmem [thread:$0]  %s39, 8192, %s41, [#allocation5], 256, 256, 16
    $region17: #{simple_generator_forward.1} parent=1 // pred_fallthru
      _
    // Predicated region
    $region18: #{simple_generator_forward.1} parent=1 // pred_check
      _
    $region19: #{simple_generator_forward.1} parent=1 // pred_check_branch
      %48 = sbr.rel (0) target = $region21
    $region20: #{simple_generator_forward.1} parent=1 // pred_region
      _
    $region21: #{simple_generator_forward.1} parent=1 // pred_fallthru
      _
    // Predicated region
    $region22: #{simple_generator_forward.1} parent=1 // pred_check
      _
    $region23: #{simple_generator_forward.1} parent=1 // pred_check_branch
      %50 = sbr.rel (0) target = $region25
    $region24: #{simple_generator_forward.1} parent=1 // pred_region
      %52 = vsyncadd [#allocation5], 0
      %s53 = sshll.u32 %s5, 4
      %s54 = int_to_ptr.hbm [resolvable:$true] %s53
      %s55 = sshll.u32 [#allocation6], 4
      %s56 = int_to_ptr.vmem [resolvable:$true] %s55
      %61 = dma.hbm_to_vmem [thread:$0]  %s54, 32768, %s56, [#allocation5], 512, 512, 32
    $region25: #{simple_generator_forward.1} parent=1 // pred_fallthru
      _
    // Predicated region
    $region26: #{simple_generator_forward.1} parent=1 // pred_check
      _
    $region27: #{simple_generator_forward.1} parent=1 // pred_check_branch
      %63 = sbr.rel (0) target = $region29
    $region28: #{simple_generator_forward.1} parent=1 // pred_region
      _
    $region29: #{simple_generator_forward.1} parent=1 // pred_fallthru
      _
    // Predicated region
    $region30: #{simple_generator_forward.1} parent=1 // pred_check
      _
    $region31: #{simple_generator_forward.1} parent=1 // pred_check_branch
      %65 = sbr.rel (0) target = $region33
    $region32: #{simple_generator_forward.1} parent=1 // pred_region
      %67 = vsyncadd [#allocation8], 0
      %s68 = sshll.u32 %s7, 4
      %s69 = int_to_ptr.hbm [resolvable:$true] %s68
      %s70 = sshll.u32 [#allocation7], 4
      %s71 = int_to_ptr.vmem [resolvable:$true] %s70
      %76 = dma.hbm_to_vmem [thread:$0]  %s69, 16384, %s71, [#allocation8], 128, 128, 8
    $region33: #{simple_generator_forward.1} parent=1 // pred_fallthru
      _
    // Predicated region
    $region34: #{simple_generator_forward.1} parent=1 // pred_check
      _
    $region35: #{simple_generator_forward.1} parent=1 // pred_check_branch
      %78 = sbr.rel (0) target = $region37
    $region36: #{simple_generator_forward.1} parent=1 // pred_region
      _
    $region37: #{simple_generator_forward.1} parent=1 // pred_fallthru
      _
    // Predicated region
    $region38: #{simple_generator_forward.1} parent=1 // pred_check
      _
    $region39: #{simple_generator_forward.1} parent=1 // pred_check_branch
      %80 = sbr.rel (0) target = $region41
    $region40: #{simple_generator_forward.1} parent=1 // pred_region
      %82 = dma.done [#allocation3], 4096
    $region41: #{simple_generator_forward.1} parent=1 // pred_fallthru
      _
    // Predicated region
    $region42: #{simple_generator_forward.1} parent=1 // pred_check
      _
    $region43: #{simple_generator_forward.1} parent=1 // pred_check_branch
      %84 = sbr.rel (0) target = $region45
    $region44: #{simple_generator_forward.1} parent=1 // pred_region
      %86 = dma.done [#allocation5], 8192
    $region45: #{simple_generator_forward.1} parent=1 // pred_fallthru
      _
    // Predicated region
    $region46: #{simple_generator_forward.1} parent=1 // pred_check
      _
    $region47: #{simple_generator_forward.1} parent=1 // pred_check_branch
      %88 = sbr.rel (0) target = $region49
    $region48: #{simple_generator_forward.1} parent=1 // pred_region
      %90 = dma.done [#allocation5], 32768
    $region49: #{simple_generator_forward.1} parent=1 // pred_fallthru
      _
    // Predicated region
    $region50: #{simple_generator_forward.1} parent=1 // pred_check
      _
    $region51: #{simple_generator_forward.1} parent=1 // pred_check_branch
      %92 = sbr.rel (0) target = $region53
    $region52: #{simple_generator_forward.1} parent=1 // pred_region
      %94 = dma.done [#allocation8], 16384
    $region53: #{simple_generator_forward.1} parent=1 // pred_fallthru
      _
    %v95 = vld [vmem:[%s0] sm:$0xf]
    %v96 = vld [vmem:[%s0 + $0x4] sm:$0xf]
    %v97 = vld [vmem:[%s0 + $0x8] sm:$0xf]
    %v98 = vld [vmem:[%s0 + $0xc] sm:$0xf]
    %103 = vst [vmem:[#allocation1] ss:$4 sm:$0xff] %v95
    %s104 = scalar_lea.vmem [#allocation1], 1
    %105 = vst [vmem:[%s104] ss:$4 sm:$0xff] %v96
    %s106 = scalar_lea.vmem [#allocation1], 2
    %107 = vst [vmem:[%s106] ss:$4 sm:$0xff] %v97
    %s108 = scalar_lea.vmem [#allocation1], 3
    %109 = vst [vmem:[%s108] ss:$4 sm:$0xff] %v98
    %v110 = vld.sshfl [vmem:[#allocation1] sm:$0xff pattern:$0x73625140]
    %v111 = vld.sshfl [vmem:[#allocation1 + $0x8] sm:$0xff pattern:$0x73625140]
    %v114 = vpack.c.bf16 %v110, %v110
    %v115 = vpack.c.bf16 %v111, %v111
    %v116 = vld [vmem:[#allocation2] sm:$0xff]
    %v117 = vld [vmem:[#allocation2 + $0x8] sm:$0xff]
    %v118 = vld [vmem:[#allocation2 + $0x10] sm:$0xff]
    %v119 = vld [vmem:[#allocation2 + $0x18] sm:$0xff]
    %v120 = vld [vmem:[#allocation2 + $0x20] sm:$0xff]
    %v121 = vld [vmem:[#allocation2 + $0x28] sm:$0xff]
    %v122 = vld [vmem:[#allocation2 + $0x30] sm:$0xff]
    %v123 = vld [vmem:[#allocation2 + $0x38] sm:$0xff]
    %v124 = vld [vmem:[#allocation2 + $0x40] sm:$0xff]
    %v125 = vld [vmem:[#allocation2 + $0x48] sm:$0xff]
    %v126 = vld [vmem:[#allocation2 + $0x50] sm:$0xff]
    %v127 = vld [vmem:[#allocation2 + $0x58] sm:$0xff]
    %v128 = vld [vmem:[#allocation2 + $0x60] sm:$0xff]
    %v129 = vld [vmem:[#allocation2 + $0x68] sm:$0xff]
    %v130 = vld [vmem:[#allocation2 + $0x70] sm:$0xff]
    %v131 = vld [vmem:[#allocation2 + $0x78] sm:$0xff]
    %v132 = vld [vmem:[#allocation2 + $0x80] sm:$0xff]
    %v133 = vld [vmem:[#allocation2 + $0x88] sm:$0xff]
    %v134 = vld [vmem:[#allocation2 + $0x90] sm:$0xff]
    %v135 = vld [vmem:[#allocation2 + $0x98] sm:$0xff]
    %v136 = vld [vmem:[#allocation2 + $0xa0] sm:$0xff]
    %v137 = vld [vmem:[#allocation2 + $0xa8] sm:$0xff]
    %v138 = vld [vmem:[#allocation2 + $0xb0] sm:$0xff]
    %v139 = vld [vmem:[#allocation2 + $0xb8] sm:$0xff]
    %v140 = vld [vmem:[#allocation2 + $0xc0] sm:$0xff]
    %v141 = vld [vmem:[#allocation2 + $0xc8] sm:$0xff]
    %v142 = vld [vmem:[#allocation2 + $0xd0] sm:$0xff]
    %v143 = vld [vmem:[#allocation2 + $0xd8] sm:$0xff]
    %v144 = vld [vmem:[#allocation2 + $0xe0] sm:$0xff]
    %v145 = vld [vmem:[#allocation2 + $0xe8] sm:$0xff]
    %v146 = vld [vmem:[#allocation2 + $0xf0] sm:$0xff]
    %v147 = vld [vmem:[#allocation2 + $0xf8] sm:$0xff]
    %v148 = vld [vmem:[%s2] sm:$0x3]
    %v150 = vperm.slane %v148, 0
    %v151 = vperm.slane %v148, 1
    %v186 = vunpack.c.l.b16 %v116
    %v187 = vunpack.c.h.b16 %v116
    %v188 = vunpack.c.l.b16 %v117
    %v189 = vunpack.c.h.b16 %v117
    %v190 = vunpack.c.l.b16 %v118
    %v191 = vunpack.c.h.b16 %v118
    %v192 = vunpack.c.l.b16 %v119
    %v193 = vunpack.c.h.b16 %v119
    %v194 = vunpack.c.l.b16 %v120
    %v195 = vunpack.c.h.b16 %v120
    %v196 = vunpack.c.l.b16 %v121
    %v197 = vunpack.c.h.b16 %v121
    %v198 = vunpack.c.l.b16 %v122
    %v199 = vunpack.c.h.b16 %v122
    %v200 = vunpack.c.l.b16 %v123
    %v201 = vunpack.c.h.b16 %v123
    %v202 = vunpack.c.l.b16 %v124
    %v203 = vunpack.c.h.b16 %v124
    %v204 = vunpack.c.l.b16 %v125
    %v205 = vunpack.c.h.b16 %v125
    %v206 = vunpack.c.l.b16 %v126
    %v207 = vunpack.c.h.b16 %v126
    %v208 = vunpack.c.l.b16 %v127
    %v209 = vunpack.c.h.b16 %v127
    %v210 = vunpack.c.l.b16 %v128
    %v211 = vunpack.c.h.b16 %v128
    %v212 = vunpack.c.l.b16 %v129
    %v213 = vunpack.c.h.b16 %v129
    %v214 = vunpack.c.l.b16 %v130
    %v215 = vunpack.c.h.b16 %v130
    %v216 = vunpack.c.l.b16 %v131
    %v217 = vunpack.c.h.b16 %v131
    %v218 = vunpack.c.l.b16 %v132
    %v219 = vunpack.c.h.b16 %v132
    %v220 = vunpack.c.l.b16 %v133
    %v221 = vunpack.c.h.b16 %v133
    %v222 = vunpack.c.l.b16 %v134
    %v223 = vunpack.c.h.b16 %v134
    %v224 = vunpack.c.l.b16 %v135
    %v225 = vunpack.c.h.b16 %v135
    %v226 = vunpack.c.l.b16 %v136
    %v227 = vunpack.c.h.b16 %v136
    %v228 = vunpack.c.l.b16 %v137
    %v229 = vunpack.c.h.b16 %v137
    %v230 = vunpack.c.l.b16 %v138
    %v231 = vunpack.c.h.b16 %v138
    %v232 = vunpack.c.l.b16 %v139
    %v233 = vunpack.c.h.b16 %v139
    %v234 = vunpack.c.l.b16 %v140
    %v235 = vunpack.c.h.b16 %v140
    %v236 = vunpack.c.l.b16 %v141
    %v237 = vunpack.c.h.b16 %v141
    %v238 = vunpack.c.l.b16 %v142
    %v239 = vunpack.c.h.b16 %v142
    %v240 = vunpack.c.l.b16 %v143
    %v241 = vunpack.c.h.b16 %v143
    %v242 = vunpack.c.l.b16 %v144
    %v243 = vunpack.c.h.b16 %v144
    %v244 = vunpack.c.l.b16 %v145
    %v245 = vunpack.c.h.b16 %v145
    %v246 = vunpack.c.l.b16 %v146
    %v247 = vunpack.c.h.b16 %v146
    %v248 = vunpack.c.l.b16 %v147
    %v249 = vunpack.c.h.b16 %v147
    %v250 = vpack.c.b16 %v188, %v186
    %v251 = vpack.c.b16 %v189, %v187
    %v252 = vpack.c.b16 %v192, %v190
    %v253 = vpack.c.b16 %v193, %v191
    %v254 = vpack.c.b16 %v196, %v194
    %v255 = vpack.c.b16 %v197, %v195
    %v256 = vpack.c.b16 %v200, %v198
    %v257 = vpack.c.b16 %v201, %v199
    %v258 = vpack.c.b16 %v204, %v202
    %v259 = vpack.c.b16 %v205, %v203
    %v260 = vpack.c.b16 %v208, %v206
    %v261 = vpack.c.b16 %v209, %v207
    %v262 = vpack.c.b16 %v212, %v210
    %v263 = vpack.c.b16 %v213, %v211
    %v264 = vpack.c.b16 %v216, %v214
    %v265 = vpack.c.b16 %v217, %v215
    %v266 = vpack.c.b16 %v220, %v218
    %v267 = vpack.c.b16 %v221, %v219
    %v268 = vpack.c.b16 %v224, %v222
    %v269 = vpack.c.b16 %v225, %v223
    %v270 = vpack.c.b16 %v228, %v226
    %v271 = vpack.c.b16 %v229, %v227
    %v272 = vpack.c.b16 %v232, %v230
    %v273 = vpack.c.b16 %v233, %v231
    %v274 = vpack.c.b16 %v236, %v234
    %v275 = vpack.c.b16 %v237, %v235
    %v276 = vpack.c.b16 %v240, %v238
    %v277 = vpack.c.b16 %v241, %v239
    %v278 = vpack.c.b16 %v244, %v242
    %v279 = vpack.c.b16 %v245, %v243
    %v280 = vpack.c.b16 %v248, %v246
    %v281 = vpack.c.b16 %v249, %v247
    %314 = vmatpush.bf16.msra.mxu0 %v264
    %315 = vmatpush.bf16.msra.mxu0 %v262
    %316 = vmatpush.bf16.msra.mxu0 %v260
    %317 = vmatpush.bf16.msra.mxu0 %v258
    %318 = vmatpush.bf16.msra.mxu0 %v256
    %319 = vmatpush.bf16.msra.mxu0 %v254
    %320 = vmatpush.bf16.msra.mxu0 %v252
    %321 = vmatpush.bf16.msra.mxu0 %v250
    %322 = vmatmul.bf16.gmra.mxu0 %v114
    %v323 = vpop.f32.mrf.mxu0
    %v324 = vadd.f32 %v150, %v323
    %v325 = vpop.f32.mrf.mxu0
    %326 = vdwg.mxu0
    %327 = vmatpush.bf16.msra.mxu0 %v280
    %328 = vmatpush.bf16.msra.mxu0 %v278
    %329 = vmatpush.bf16.msra.mxu0 %v276
    %330 = vmatpush.bf16.msra.mxu0 %v274
    %331 = vmatpush.bf16.msra.mxu0 %v272
    %332 = vmatpush.bf16.msra.mxu0 %v270
    %333 = vmatpush.bf16.msra.mxu0 %v268
    %334 = vmatpush.bf16.msra.mxu0 %v266
    %335 = vmatmul.bf16.gmra.mxu0 %v115
    %v336 = vpop.f32.mrf.mxu0
    %v337 = vadd.f32 %v324, %v336
    %v338 = vpop.f32.mrf.mxu0
    %339 = vdwg.mxu0
    %340 = vmatpush.bf16.msra.mxu0 %v265
    %341 = vmatpush.bf16.msra.mxu0 %v263
    %342 = vmatpush.bf16.msra.mxu0 %v261
    %343 = vmatpush.bf16.msra.mxu0 %v259
    %344 = vmatpush.bf16.msra.mxu0 %v257
    %345 = vmatpush.bf16.msra.mxu0 %v255
    %346 = vmatpush.bf16.msra.mxu0 %v253
    %347 = vmatpush.bf16.msra.mxu0 %v251
    %348 = vmatmul.bf16.gmra.mxu0 %v114
    %v349 = vpop.f32.mrf.mxu0
    %v350 = vadd.f32 %v151, %v349
    %v351 = vpop.f32.mrf.mxu0
    %352 = vdwg.mxu0
    %353 = vmatpush.bf16.msra.mxu0 %v281
    %354 = vmatpush.bf16.msra.mxu0 %v279
    %355 = vmatpush.bf16.msra.mxu0 %v277
    %356 = vmatpush.bf16.msra.mxu0 %v275
    %357 = vmatpush.bf16.msra.mxu0 %v273
    %358 = vmatpush.bf16.msra.mxu0 %v271
    %359 = vmatpush.bf16.msra.mxu0 %v269
    %360 = vmatpush.bf16.msra.mxu0 %v267
    %361 = vmatmul.bf16.gmra.mxu0 %v115
    %v362 = vpop.f32.mrf.mxu0
    %v363 = vadd.f32 %v350, %v362
    %v364 = vpop.f32.mrf.mxu0
    %365 = vdwg.mxu0
    %v366 = vpack.c.bf16 %v363, %v337
    %v367 = vunpack.c.l.bf16 %v366
    %v368 = vunpack.c.h.bf16 %v366
    %v369 = vmul.f32 %v367, 0.20019531
    %v370 = vmul.f32 %v368, 0.20019531
    %v371 = vpack.c.bf16 %v370, %v369
    %v372 = vunpack.c.l.bf16 %v371
    %v373 = vunpack.c.h.bf16 %v371
    %v374 = vmax.f32 %v367, %v372
    %v375 = vmax.f32 %v368, %v373
    %v376 = vpack.c.bf16 %v374, %v374
    %v377 = vpack.c.bf16 %v375, %v375
    %v378 = vld [vmem:[#allocation4] sm:$0xff]
    %v379 = vld [vmem:[#allocation4 + $0x8] sm:$0xff]
    %v380 = vld [vmem:[#allocation4 + $0x10] sm:$0xff]
    %v381 = vld [vmem:[#allocation4 + $0x18] sm:$0xff]
    %v382 = vld [vmem:[#allocation4 + $0x20] sm:$0xff]
    %v383 = vld [vmem:[#allocation4 + $0x28] sm:$0xff]
    %v384 = vld [vmem:[#allocation4 + $0x30] sm:$0xff]
    %v385 = vld [vmem:[#allocation4 + $0x38] sm:$0xff]
    %v386 = vld [vmem:[#allocation4 + $0x40] sm:$0xff]
    %v387 = vld [vmem:[#allocation4 + $0x48] sm:$0xff]
    %v388 = vld [vmem:[#allocation4 + $0x50] sm:$0xff]
    %v389 = vld [vmem:[#allocation4 + $0x58] sm:$0xff]
    %v390 = vld [vmem:[#allocation4 + $0x60] sm:$0xff]
    %v391 = vld [vmem:[#allocation4 + $0x68] sm:$0xff]
    %v392 = vld [vmem:[#allocation4 + $0x70] sm:$0xff]
    %v393 = vld [vmem:[#allocation4 + $0x78] sm:$0xff]
    %v394 = vld [vmem:[#allocation4 + $0x80] sm:$0xff]
    %v395 = vld [vmem:[#allocation4 + $0x88] sm:$0xff]
    %v396 = vld [vmem:[#allocation4 + $0x90] sm:$0xff]
    %v397 = vld [vmem:[#allocation4 + $0x98] sm:$0xff]
    %v398 = vld [vmem:[#allocation4 + $0xa0] sm:$0xff]
    %v399 = vld [vmem:[#allocation4 + $0xa8] sm:$0xff]
    %v400 = vld [vmem:[#allocation4 + $0xb0] sm:$0xff]
    %v401 = vld [vmem:[#allocation4 + $0xb8] sm:$0xff]
    %v402 = vld [vmem:[#allocation4 + $0xc0] sm:$0xff]
    %v403 = vld [vmem:[#allocation4 + $0xc8] sm:$0xff]
    %v404 = vld [vmem:[#allocation4 + $0xd0] sm:$0xff]
    %v405 = vld [vmem:[#allocation4 + $0xd8] sm:$0xff]
    %v406 = vld [vmem:[#allocation4 + $0xe0] sm:$0xff]
    %v407 = vld [vmem:[#allocation4 + $0xe8] sm:$0xff]
    %v408 = vld [vmem:[#allocation4 + $0xf0] sm:$0xff]
    %v409 = vld [vmem:[#allocation4 + $0xf8] sm:$0xff]
    %v410 = vld [vmem:[#allocation4 + $0x100] sm:$0xff]
    %v411 = vld [vmem:[#allocation4 + $0x108] sm:$0xff]
    %v412 = vld [vmem:[#allocation4 + $0x110] sm:$0xff]
    %v413 = vld [vmem:[#allocation4 + $0x118] sm:$0xff]
    %v414 = vld [vmem:[#allocation4 + $0x120] sm:$0xff]
    %v415 = vld [vmem:[#allocation4 + $0x128] sm:$0xff]
    %v416 = vld [vmem:[#allocation4 + $0x130] sm:$0xff]
    %v417 = vld [vmem:[#allocation4 + $0x138] sm:$0xff]
    %v418 = vld [vmem:[#allocation4 + $0x140] sm:$0xff]
    %v419 = vld [vmem:[#allocation4 + $0x148] sm:$0xff]
    %v420 = vld [vmem:[#allocation4 + $0x150] sm:$0xff]
    %v421 = vld [vmem:[#allocation4 + $0x158] sm:$0xff]
    %v422 = vld [vmem:[#allocation4 + $0x160] sm:$0xff]
    %v423 = vld [vmem:[#allocation4 + $0x168] sm:$0xff]
    %v424 = vld [vmem:[#allocation4 + $0x170] sm:$0xff]
    %v425 = vld [vmem:[#allocation4 + $0x178] sm:$0xff]
    %v426 = vld [vmem:[#allocation4 + $0x180] sm:$0xff]
    %v427 = vld [vmem:[#allocation4 + $0x188] sm:$0xff]
    %v428 = vld [vmem:[#allocation4 + $0x190] sm:$0xff]
    %v429 = vld [vmem:[#allocation4 + $0x198] sm:$0xff]
    %v430 = vld [vmem:[#allocation4 + $0x1a0] sm:$0xff]
    %v431 = vld [vmem:[#allocation4 + $0x1a8] sm:$0xff]
    %v432 = vld [vmem:[#allocation4 + $0x1b0] sm:$0xff]
    %v433 = vld [vmem:[#allocation4 + $0x1b8] sm:$0xff]
    %v434 = vld [vmem:[#allocation4 + $0x1c0] sm:$0xff]
    %v435 = vld [vmem:[#allocation4 + $0x1c8] sm:$0xff]
    %v436 = vld [vmem:[#allocation4 + $0x1d0] sm:$0xff]
    %v437 = vld [vmem:[#allocation4 + $0x1d8] sm:$0xff]
    %v438 = vld [vmem:[#allocation4 + $0x1e0] sm:$0xff]
    %v439 = vld [vmem:[#allocation4 + $0x1e8] sm:$0xff]
    %v440 = vld [vmem:[#allocation4 + $0x1f0] sm:$0xff]
    %v441 = vld [vmem:[#allocation4 + $0x1f8] sm:$0xff]
    %v442 = vld [vmem:[%s4] sm:$0xf]
    %v444 = vperm.slane %v442, 0
    %v445 = vperm.slane %v442, 1
    %v446 = vperm.slane %v442, 2
    %v447 = vperm.slane %v442, 3
    %v516 = vunpack.c.l.b16 %v378
    %v517 = vunpack.c.h.b16 %v378
    %v518 = vunpack.c.l.b16 %v379
    %v519 = vunpack.c.h.b16 %v379
    %v520 = vunpack.c.l.b16 %v380
    %v521 = vunpack.c.h.b16 %v380
    %v522 = vunpack.c.l.b16 %v381
    %v523 = vunpack.c.h.b16 %v381
    %v524 = vunpack.c.l.b16 %v382
    %v525 = vunpack.c.h.b16 %v382
    %v526 = vunpack.c.l.b16 %v383
    %v527 = vunpack.c.h.b16 %v383
    %v528 = vunpack.c.l.b16 %v384
    %v529 = vunpack.c.h.b16 %v384
    %v530 = vunpack.c.l.b16 %v385
    %v531 = vunpack.c.h.b16 %v385
    %v532 = vunpack.c.l.b16 %v386
    %v533 = vunpack.c.h.b16 %v386
    %v534 = vunpack.c.l.b16 %v387
    %v535 = vunpack.c.h.b16 %v387
    %v536 = vunpack.c.l.b16 %v388
    %v537 = vunpack.c.h.b16 %v388
    %v538 = vunpack.c.l.b16 %v389
    %v539 = vunpack.c.h.b16 %v389
    %v540 = vunpack.c.l.b16 %v390
    %v541 = vunpack.c.h.b16 %v390
    %v542 = vunpack.c.l.b16 %v391
    %v543 = vunpack.c.h.b16 %v391
    %v544 = vunpack.c.l.b16 %v392
    %v545 = vunpack.c.h.b16 %v392
    %v546 = vunpack.c.l.b16 %v393
    %v547 = vunpack.c.h.b16 %v393
    %v548 = vunpack.c.l.b16 %v394
    %v549 = vunpack.c.h.b16 %v394
    %v550 = vunpack.c.l.b16 %v395
    %v551 = vunpack.c.h.b16 %v395
    %v552 = vunpack.c.l.b16 %v396
    %v553 = vunpack.c.h.b16 %v396
    %v554 = vunpack.c.l.b16 %v397
    %v555 = vunpack.c.h.b16 %v397
    %v556 = vunpack.c.l.b16 %v398
    %v557 = vunpack.c.h.b16 %v398
    %v558 = vunpack.c.l.b16 %v399
    %v559 = vunpack.c.h.b16 %v399
    %v560 = vunpack.c.l.b16 %v400
    %v561 = vunpack.c.h.b16 %v400
    %v562 = vunpack.c.l.b16 %v401
    %v563 = vunpack.c.h.b16 %v401
    %v564 = vunpack.c.l.b16 %v402
    %v565 = vunpack.c.h.b16 %v402
    %v566 = vunpack.c.l.b16 %v403
    %v567 = vunpack.c.h.b16 %v403
    %v568 = vunpack.c.l.b16 %v404
    %v569 = vunpack.c.h.b16 %v404
    %v570 = vunpack.c.l.b16 %v405
    %v571 = vunpack.c.h.b16 %v405
    %v572 = vunpack.c.l.b16 %v406
    %v573 = vunpack.c.h.b16 %v406
    %v574 = vunpack.c.l.b16 %v407
    %v575 = vunpack.c.h.b16 %v407
    %v576 = vunpack.c.l.b16 %v408
    %v577 = vunpack.c.h.b16 %v408
    %v578 = vunpack.c.l.b16 %v409
    %v579 = vunpack.c.h.b16 %v409
    %v580 = vunpack.c.l.b16 %v410
    %v581 = vunpack.c.h.b16 %v410
    %v582 = vunpack.c.l.b16 %v411
    %v583 = vunpack.c.h.b16 %v411
    %v584 = vunpack.c.l.b16 %v412
    %v585 = vunpack.c.h.b16 %v412
    %v586 = vunpack.c.l.b16 %v413
    %v587 = vunpack.c.h.b16 %v413
    %v588 = vunpack.c.l.b16 %v414
    %v589 = vunpack.c.h.b16 %v414
    %v590 = vunpack.c.l.b16 %v415
    %v591 = vunpack.c.h.b16 %v415
    %v592 = vunpack.c.l.b16 %v416
    %v593 = vunpack.c.h.b16 %v416
    %v594 = vunpack.c.l.b16 %v417
    %v595 = vunpack.c.h.b16 %v417
    %v596 = vunpack.c.l.b16 %v418
    %v597 = vunpack.c.h.b16 %v418
    %v598 = vunpack.c.l.b16 %v419
    %v599 = vunpack.c.h.b16 %v419
    %v600 = vunpack.c.l.b16 %v420
    %v601 = vunpack.c.h.b16 %v420
    %v602 = vunpack.c.l.b16 %v421
    %v603 = vunpack.c.h.b16 %v421
    %v604 = vunpack.c.l.b16 %v422
    %v605 = vunpack.c.h.b16 %v422
    %v606 = vunpack.c.l.b16 %v423
    %v607 = vunpack.c.h.b16 %v423
    %v608 = vunpack.c.l.b16 %v424
    %v609 = vunpack.c.h.b16 %v424
    %v610 = vunpack.c.l.b16 %v425
    %v611 = vunpack.c.h.b16 %v425
    %v612 = vunpack.c.l.b16 %v426
    %v613 = vunpack.c.h.b16 %v426
    %v614 = vunpack.c.l.b16 %v427
    %v615 = vunpack.c.h.b16 %v427
    %v616 = vunpack.c.l.b16 %v428
    %v617 = vunpack.c.h.b16 %v428
    %v618 = vunpack.c.l.b16 %v429
    %v619 = vunpack.c.h.b16 %v429
    %v620 = vunpack.c.l.b16 %v430
    %v621 = vunpack.c.h.b16 %v430
    %v622 = vunpack.c.l.b16 %v431
    %v623 = vunpack.c.h.b16 %v431
    %v624 = vunpack.c.l.b16 %v432
    %v625 = vunpack.c.h.b16 %v432
    %v626 = vunpack.c.l.b16 %v433
    %v627 = vunpack.c.h.b16 %v433
    %v628 = vunpack.c.l.b16 %v434
    %v629 = vunpack.c.h.b16 %v434
    %v630 = vunpack.c.l.b16 %v435
    %v631 = vunpack.c.h.b16 %v435
    %v632 = vunpack.c.l.b16 %v436
    %v633 = vunpack.c.h.b16 %v436
    %v634 = vunpack.c.l.b16 %v437
    %v635 = vunpack.c.h.b16 %v437
    %v636 = vunpack.c.l.b16 %v438
    %v637 = vunpack.c.h.b16 %v438
    %v638 = vunpack.c.l.b16 %v439
    %v639 = vunpack.c.h.b16 %v439
    %v640 = vunpack.c.l.b16 %v440
    %v641 = vunpack.c.h.b16 %v440
    %v642 = vunpack.c.l.b16 %v441
    %v643 = vunpack.c.h.b16 %v441
    %v644 = vpack.c.b16 %v520, %v516
    %v645 = vpack.c.b16 %v521, %v517
    %v646 = vpack.c.b16 %v522, %v518
    %v647 = vpack.c.b16 %v523, %v519
    %v648 = vpack.c.b16 %v528, %v524
    %v649 = vpack.c.b16 %v529, %v525
    %v650 = vpack.c.b16 %v530, %v526
    %v651 = vpack.c.b16 %v531, %v527
    %v652 = vpack.c.b16 %v536, %v532
    %v653 = vpack.c.b16 %v537, %v533
    %v654 = vpack.c.b16 %v538, %v534
    %v655 = vpack.c.b16 %v539, %v535
    %v656 = vpack.c.b16 %v544, %v540
    %v657 = vpack.c.b16 %v545, %v541
    %v658 = vpack.c.b16 %v546, %v542
    %v659 = vpack.c.b16 %v547, %v543
    %v660 = vpack.c.b16 %v552, %v548
    %v661 = vpack.c.b16 %v553, %v549
    %v662 = vpack.c.b16 %v554, %v550
    %v663 = vpack.c.b16 %v555, %v551
    %v664 = vpack.c.b16 %v560, %v556
    %v665 = vpack.c.b16 %v561, %v557
    %v666 = vpack.c.b16 %v562, %v558
    %v667 = vpack.c.b16 %v563, %v559
    %v668 = vpack.c.b16 %v568, %v564
    %v669 = vpack.c.b16 %v569, %v565
    %v670 = vpack.c.b16 %v570, %v566
    %v671 = vpack.c.b16 %v571, %v567
    %v672 = vpack.c.b16 %v576, %v572
    %v673 = vpack.c.b16 %v577, %v573
    %v674 = vpack.c.b16 %v578, %v574
    %v675 = vpack.c.b16 %v579, %v575
    %v676 = vpack.c.b16 %v584, %v580
    %v677 = vpack.c.b16 %v585, %v581
    %v678 = vpack.c.b16 %v586, %v582
    %v679 = vpack.c.b16 %v587, %v583
    %v680 = vpack.c.b16 %v592, %v588
    %v681 = vpack.c.b16 %v593, %v589
    %v682 = vpack.c.b16 %v594, %v590
    %v683 = vpack.c.b16 %v595, %v591
    %v684 = vpack.c.b16 %v600, %v596
    %v685 = vpack.c.b16 %v601, %v597
    %v686 = vpack.c.b16 %v602, %v598
    %v687 = vpack.c.b16 %v603, %v599
    %v688 = vpack.c.b16 %v608, %v604
    %v689 = vpack.c.b16 %v609, %v605
    %v690 = vpack.c.b16 %v610, %v606
    %v691 = vpack.c.b16 %v611, %v607
    %v692 = vpack.c.b16 %v616, %v612
    %v693 = vpack.c.b16 %v617, %v613
    %v694 = vpack.c.b16 %v618, %v614
    %v695 = vpack.c.b16 %v619, %v615
    %v696 = vpack.c.b16 %v624, %v620
    %v697 = vpack.c.b16 %v625, %v621
    %v698 = vpack.c.b16 %v626, %v622
    %v699 = vpack.c.b16 %v627, %v623
    %v700 = vpack.c.b16 %v632, %v628
    %v701 = vpack.c.b16 %v633, %v629
    %v702 = vpack.c.b16 %v634, %v630
    %v703 = vpack.c.b16 %v635, %v631
    %v704 = vpack.c.b16 %v640, %v636
    %v705 = vpack.c.b16 %v641, %v637
    %v706 = vpack.c.b16 %v642, %v638
    %v707 = vpack.c.b16 %v643, %v639
    %772 = vmatpush.bf16.msra.mxu0 %v672
    %773 = vmatpush.bf16.msra.mxu0 %v668
    %774 = vmatpush.bf16.msra.mxu0 %v664
    %775 = vmatpush.bf16.msra.mxu0 %v660
    %776 = vmatpush.bf16.msra.mxu0 %v656
    %777 = vmatpush.bf16.msra.mxu0 %v652
    %778 = vmatpush.bf16.msra.mxu0 %v648
    %779 = vmatpush.bf16.msra.mxu0 %v644
    %780 = vmatmul.bf16.gmra.mxu0 %v376
    %v781 = vpop.f32.mrf.mxu0
    %v782 = vadd.f32 %v444, %v781
    %v783 = vpop.f32.mrf.mxu0
    %784 = vdwg.mxu0
    %785 = vmatpush.bf16.msra.mxu0 %v704
    %786 = vmatpush.bf16.msra.mxu0 %v700
    %787 = vmatpush.bf16.msra.mxu0 %v696
    %788 = vmatpush.bf16.msra.mxu0 %v692
    %789 = vmatpush.bf16.msra.mxu0 %v688
    %790 = vmatpush.bf16.msra.mxu0 %v684
    %791 = vmatpush.bf16.msra.mxu0 %v680
    %792 = vmatpush.bf16.msra.mxu0 %v676
    %793 = vmatmul.bf16.gmra.mxu0 %v377
    %v794 = vpop.f32.mrf.mxu0
    %v795 = vadd.f32 %v782, %v794
    %v796 = vpop.f32.mrf.mxu0
    %797 = vdwg.mxu0
    %798 = vmatpush.bf16.msra.mxu0 %v673
    %799 = vmatpush.bf16.msra.mxu0 %v669
    %800 = vmatpush.bf16.msra.mxu0 %v665
    %801 = vmatpush.bf16.msra.mxu0 %v661
    %802 = vmatpush.bf16.msra.mxu0 %v657
    %803 = vmatpush.bf16.msra.mxu0 %v653
    %804 = vmatpush.bf16.msra.mxu0 %v649
    %805 = vmatpush.bf16.msra.mxu0 %v645
    %806 = vmatmul.bf16.gmra.mxu0 %v376
    %v807 = vpop.f32.mrf.mxu0
    %v808 = vadd.f32 %v445, %v807
    %v809 = vpop.f32.mrf.mxu0
    %810 = vdwg.mxu0
    %811 = vmatpush.bf16.msra.mxu0 %v705
    %812 = vmatpush.bf16.msra.mxu0 %v701
    %813 = vmatpush.bf16.msra.mxu0 %v697
    %814 = vmatpush.bf16.msra.mxu0 %v693
    %815 = vmatpush.bf16.msra.mxu0 %v689
    %816 = vmatpush.bf16.msra.mxu0 %v685
    %817 = vmatpush.bf16.msra.mxu0 %v681
    %818 = vmatpush.bf16.msra.mxu0 %v677
    %819 = vmatmul.bf16.gmra.mxu0 %v377
    %v820 = vpop.f32.mrf.mxu0
    %v821 = vadd.f32 %v808, %v820
    %v822 = vpop.f32.mrf.mxu0
    %823 = vdwg.mxu0
    %824 = vmatpush.bf16.msra.mxu0 %v674
    %825 = vmatpush.bf16.msra.mxu0 %v670
    %826 = vmatpush.bf16.msra.mxu0 %v666
    %827 = vmatpush.bf16.msra.mxu0 %v662
    %828 = vmatpush.bf16.msra.mxu0 %v658
    %829 = vmatpush.bf16.msra.mxu0 %v654
    %830 = vmatpush.bf16.msra.mxu0 %v650
    %831 = vmatpush.bf16.msra.mxu0 %v646
    %832 = vmatmul.bf16.gmra.mxu0 %v376
    %v833 = vpop.f32.mrf.mxu0
    %v834 = vadd.f32 %v446, %v833
    %v835 = vpop.f32.mrf.mxu0
    %836 = vdwg.mxu0
    %837 = vmatpush.bf16.msra.mxu0 %v706
    %838 = vmatpush.bf16.msra.mxu0 %v702
    %839 = vmatpush.bf16.msra.mxu0 %v698
    %840 = vmatpush.bf16.msra.mxu0 %v694
    %841 = vmatpush.bf16.msra.mxu0 %v690
    %842 = vmatpush.bf16.msra.mxu0 %v686
    %843 = vmatpush.bf16.msra.mxu0 %v682
    %844 = vmatpush.bf16.msra.mxu0 %v678
    %845 = vmatmul.bf16.gmra.mxu0 %v377
    %v846 = vpop.f32.mrf.mxu0
    %v847 = vadd.f32 %v834, %v846
    %v848 = vpop.f32.mrf.mxu0
    %849 = vdwg.mxu0
    %850 = vmatpush.bf16.msra.mxu0 %v675
    %851 = vmatpush.bf16.msra.mxu0 %v671
    %852 = vmatpush.bf16.msra.mxu0 %v667
    %853 = vmatpush.bf16.msra.mxu0 %v663
    %854 = vmatpush.bf16.msra.mxu0 %v659
    %855 = vmatpush.bf16.msra.mxu0 %v655
    %856 = vmatpush.bf16.msra.mxu0 %v651
    %857 = vmatpush.bf16.msra.mxu0 %v647
    %858 = vmatmul.bf16.gmra.mxu0 %v376
    %v859 = vpop.f32.mrf.mxu0
    %v860 = vadd.f32 %v447, %v859
    %v861 = vpop.f32.mrf.mxu0
    %862 = vdwg.mxu0
    %863 = vmatpush.bf16.msra.mxu0 %v707
    %864 = vmatpush.bf16.msra.mxu0 %v703
    %865 = vmatpush.bf16.msra.mxu0 %v699
    %866 = vmatpush.bf16.msra.mxu0 %v695
    %867 = vmatpush.bf16.msra.mxu0 %v691
    %868 = vmatpush.bf16.msra.mxu0 %v687
    %869 = vmatpush.bf16.msra.mxu0 %v683
    %870 = vmatpush.bf16.msra.mxu0 %v679
    %871 = vmatmul.bf16.gmra.mxu0 %v377
    %v872 = vpop.f32.mrf.mxu0
    %v873 = vadd.f32 %v860, %v872
    %v874 = vpop.f32.mrf.mxu0
    %875 = vdwg.mxu0
    %v876 = vpack.c.bf16 %v821, %v795
    %v877 = vpack.c.bf16 %v873, %v847
    %v878 = vunpack.c.l.bf16 %v876
    %v879 = vunpack.c.h.bf16 %v876
    %v880 = vunpack.c.l.bf16 %v877
    %v881 = vunpack.c.h.bf16 %v877
    %v882 = vmul.f32 %v878, 0.20019531
    %v883 = vmul.f32 %v879, 0.20019531
    %v884 = vmul.f32 %v880, 0.20019531
    %v885 = vmul.f32 %v881, 0.20019531
    %v886 = vpack.c.bf16 %v883, %v882
    %v887 = vpack.c.bf16 %v885, %v884
    %v888 = vunpack.c.l.bf16 %v886
    %v889 = vunpack.c.h.bf16 %v886
    %v890 = vunpack.c.l.bf16 %v887
    %v891 = vunpack.c.h.bf16 %v887
    %v892 = vmax.f32 %v878, %v888
    %v893 = vmax.f32 %v879, %v889
    %v894 = vmax.f32 %v880, %v890
    %v895 = vmax.f32 %v881, %v891
    %v896 = vpack.c.bf16 %v892, %v892
    %v897 = vpack.c.bf16 %v893, %v893
    %v898 = vpack.c.bf16 %v894, %v894
    %v899 = vpack.c.bf16 %v895, %v895
    %v900 = vld [vmem:[#allocation6] sm:$0xff]
    %v901 = vld [vmem:[#allocation6 + $0x8] sm:$0xff]
    %v902 = vld [vmem:[#allocation6 + $0x10] sm:$0xff]
    %v903 = vld [vmem:[#allocation6 + $0x18] sm:$0xff]
    %v904 = vld [vmem:[#allocation6 + $0x20] sm:$0xff]
    %v905 = vld [vmem:[#allocation6 + $0x28] sm:$0xff]
    %v906 = vld [vmem:[#allocation6 + $0x30] sm:$0xff]
    %v907 = vld [vmem:[#allocation6 + $0x38] sm:$0xff]
    %v908 = vld [vmem:[#allocation6 + $0x40] sm:$0xff]
    %v909 = vld [vmem:[#allocation6 + $0x48] sm:$0xff]
    %v910 = vld [vmem:[#allocation6 + $0x50] sm:$0xff]
    %v911 = vld [vmem:[#allocation6 + $0x58] sm:$0xff]
    %v912 = vld [vmem:[#allocation6 + $0x60] sm:$0xff]
    %v913 = vld [vmem:[#allocation6 + $0x68] sm:$0xff]
    %v914 = vld [vmem:[#allocation6 + $0x70] sm:$0xff]
    %v915 = vld [vmem:[#allocation6 + $0x78] sm:$0xff]
    %v916 = vld [vmem:[#allocation6 + $0x80] sm:$0xff]
    %v917 = vld [vmem:[#allocation6 + $0x88] sm:$0xff]
    %v918 = vld [vmem:[#allocation6 + $0x90] sm:$0xff]
    %v919 = vld [vmem:[#allocation6 + $0x98] sm:$0xff]
    %v920 = vld [vmem:[#allocation6 + $0xa0] sm:$0xff]
    %v921 = vld [vmem:[#allocation6 + $0xa8] sm:$0xff]
    %v922 = vld [vmem:[#allocation6 + $0xb0] sm:$0xff]
    %v923 = vld [vmem:[#allocation6 + $0xb8] sm:$0xff]
    %v924 = vld [vmem:[#allocation6 + $0xc0] sm:$0xff]
    %v925 = vld [vmem:[#allocation6 + $0xc8] sm:$0xff]
    %v926 = vld [vmem:[#allocation6 + $0xd0] sm:$0xff]
    %v927 = vld [vmem:[#allocation6 + $0xd8] sm:$0xff]
    %v928 = vld [vmem:[#allocation6 + $0xe0] sm:$0xff]
    %v929 = vld [vmem:[#allocation6 + $0xe8] sm:$0xff]
    %v930 = vld [vmem:[#allocation6 + $0xf0] sm:$0xff]
    %v931 = vld [vmem:[#allocation6 + $0xf8] sm:$0xff]
    %v932 = vld [vmem:[#allocation6 + $0x100] sm:$0xff]
    %v933 = vld [vmem:[#allocation6 + $0x108] sm:$0xff]
    %v934 = vld [vmem:[#allocation6 + $0x110] sm:$0xff]
    %v935 = vld [vmem:[#allocation6 + $0x118] sm:$0xff]
    %v936 = vld [vmem:[#allocation6 + $0x120] sm:$0xff]
    %v937 = vld [vmem:[#allocation6 + $0x128] sm:$0xff]
    %v938 = vld [vmem:[#allocation6 + $0x130] sm:$0xff]
    %v939 = vld [vmem:[#allocation6 + $0x138] sm:$0xff]
    %v940 = vld [vmem:[#allocation6 + $0x140] sm:$0xff]
    %v941 = vld [vmem:[#allocation6 + $0x148] sm:$0xff]
    %v942 = vld [vmem:[#allocation6 + $0x150] sm:$0xff]
    %v943 = vld [vmem:[#allocation6 + $0x158] sm:$0xff]
    %v944 = vld [vmem:[#allocation6 + $0x160] sm:$0xff]
    %v945 = vld [vmem:[#allocation6 + $0x168] sm:$0xff]
    %v946 = vld [vmem:[#allocation6 + $0x170] sm:$0xff]
    %v947 = vld [vmem:[#allocation6 + $0x178] sm:$0xff]
    %v948 = vld [vmem:[#allocation6 + $0x180] sm:$0xff]
    %v949 = vld [vmem:[#allocation6 + $0x188] sm:$0xff]
    %v950 = vld [vmem:[#allocation6 + $0x190] sm:$0xff]
    %v951 = vld [vmem:[#allocation6 + $0x198] sm:$0xff]
    %v952 = vld [vmem:[#allocation6 + $0x1a0] sm:$0xff]
    %v953 = vld [vmem:[#allocation6 + $0x1a8] sm:$0xff]
    %v954 = vld [vmem:[#allocation6 + $0x1b0] sm:$0xff]
    %v955 = vld [vmem:[#allocation6 + $0x1b8] sm:$0xff]
    %v956 = vld [vmem:[#allocation6 + $0x1c0] sm:$0xff]
    %v957 = vld [vmem:[#allocation6 + $0x1c8] sm:$0xff]
    %v958 = vld [vmem:[#allocation6 + $0x1d0] sm:$0xff]
    %v959 = vld [vmem:[#allocation6 + $0x1d8] sm:$0xff]
    %v960 = vld [vmem:[#allocation6 + $0x1e0] sm:$0xff]
    %v961 = vld [vmem:[#allocation6 + $0x1e8] sm:$0xff]
    %v962 = vld [vmem:[#allocation6 + $0x1f0] sm:$0xff]
    %v963 = vld [vmem:[#allocation6 + $0x1f8] sm:$0xff]
    %v964 = vld [vmem:[#allocation6 + $0x200] sm:$0xff]
    %v965 = vld [vmem:[#allocation6 + $0x208] sm:$0xff]
    %v966 = vld [vmem:[#allocation6 + $0x210] sm:$0xff]
    %v967 = vld [vmem:[#allocation6 + $0x218] sm:$0xff]
    %v968 = vld [vmem:[#allocation6 + $0x220] sm:$0xff]
    %v969 = vld [vmem:[#allocation6 + $0x228] sm:$0xff]
    %v970 = vld [vmem:[#allocation6 + $0x230] sm:$0xff]
    %v971 = vld [vmem:[#allocation6 + $0x238] sm:$0xff]
    %v972 = vld [vmem:[#allocation6 + $0x240] sm:$0xff]
    %v973 = vld [vmem:[#allocation6 + $0x248] sm:$0xff]
    %v974 = vld [vmem:[#allocation6 + $0x250] sm:$0xff]
    %v975 = vld [vmem:[#allocation6 + $0x258] sm:$0xff]
    %v976 = vld [vmem:[#allocation6 + $0x260] sm:$0xff]
    %v977 = vld [vmem:[#allocation6 + $0x268] sm:$0xff]
    %v978 = vld [vmem:[#allocation6 + $0x270] sm:$0xff]
    %v979 = vld [vmem:[#allocation6 + $0x278] sm:$0xff]
    %v980 = vld [vmem:[#allocation6 + $0x280] sm:$0xff]
    %v981 = vld [vmem:[#allocation6 + $0x288] sm:$0xff]
    %v982 = vld [vmem:[#allocation6 + $0x290] sm:$0xff]
    %v983 = vld [vmem:[#allocation6 + $0x298] sm:$0xff]
    %v984 = vld [vmem:[#allocation6 + $0x2a0] sm:$0xff]
    %v985 = vld [vmem:[#allocation6 + $0x2a8] sm:$0xff]
    %v986 = vld [vmem:[#allocation6 + $0x2b0] sm:$0xff]
    %v987 = vld [vmem:[#allocation6 + $0x2b8] sm:$0xff]
    %v988 = vld [vmem:[#allocation6 + $0x2c0] sm:$0xff]
    %v989 = vld [vmem:[#allocation6 + $0x2c8] sm:$0xff]
    %v990 = vld [vmem:[#allocation6 + $0x2d0] sm:$0xff]
    %v991 = vld [vmem:[#allocation6 + $0x2d8] sm:$0xff]
    %v992 = vld [vmem:[#allocation6 + $0x2e0] sm:$0xff]
    %v993 = vld [vmem:[#allocation6 + $0x2e8] sm:$0xff]
    %v994 = vld [vmem:[#allocation6 + $0x2f0] sm:$0xff]
    %v995 = vld [vmem:[#allocation6 + $0x2f8] sm:$0xff]
    %v996 = vld [vmem:[#allocation6 + $0x300] sm:$0xff]
    %v997 = vld [vmem:[#allocation6 + $0x308] sm:$0xff]
    %v998 = vld [vmem:[#allocation6 + $0x310] sm:$0xff]
    %v999 = vld [vmem:[#allocation6 + $0x318] sm:$0xff]
    %v1000 = vld [vmem:[#allocation6 + $0x320] sm:$0xff]
    %v1001 = vld [vmem:[#allocation6 + $0x328] sm:$0xff]
    %v1002 = vld [vmem:[#allocation6 + $0x330] sm:$0xff]
    %v1003 = vld [vmem:[#allocation6 + $0x338] sm:$0xff]
    %v1004 = vld [vmem:[#allocation6 + $0x340] sm:$0xff]
    %v1005 = vld [vmem:[#allocation6 + $0x348] sm:$0xff]
    %v1006 = vld [vmem:[#allocation6 + $0x350] sm:$0xff]
    %v1007 = vld [vmem:[#allocation6 + $0x358] sm:$0xff]
    %v1008 = vld [vmem:[#allocation6 + $0x360] sm:$0xff]
    %v1009 = vld [vmem:[#allocation6 + $0x368] sm:$0xff]
    %v1010 = vld [vmem:[#allocation6 + $0x370] sm:$0xff]
    %v1011 = vld [vmem:[#allocation6 + $0x378] sm:$0xff]
    %v1012 = vld [vmem:[#allocation6 + $0x380] sm:$0xff]
    %v1013 = vld [vmem:[#allocation6 + $0x388] sm:$0xff]
    %v1014 = vld [vmem:[#allocation6 + $0x390] sm:$0xff]
    %v1015 = vld [vmem:[#allocation6 + $0x398] sm:$0xff]
    %v1016 = vld [vmem:[#allocation6 + $0x3a0] sm:$0xff]
    %v1017 = vld [vmem:[#allocation6 + $0x3a8] sm:$0xff]
    %v1018 = vld [vmem:[#allocation6 + $0x3b0] sm:$0xff]
    %v1019 = vld [vmem:[#allocation6 + $0x3b8] sm:$0xff]
    %v1020 = vld [vmem:[#allocation6 + $0x3c0] sm:$0xff]
    %v1021 = vld [vmem:[#allocation6 + $0x3c8] sm:$0xff]
    %v1022 = vld [vmem:[#allocation6 + $0x3d0] sm:$0xff]
    %v1023 = vld [vmem:[#allocation6 + $0x3d8] sm:$0xff]
    %v1024 = vld [vmem:[#allocation6 + $0x3e0] sm:$0xff]
    %v1025 = vld [vmem:[#allocation6 + $0x3e8] sm:$0xff]
    %v1026 = vld [vmem:[#allocation6 + $0x3f0] sm:$0xff]
    %v1027 = vld [vmem:[#allocation6 + $0x3f8] sm:$0xff]
    %v1028 = vld [vmem:[#allocation6 + $0x400] sm:$0xff]
    %v1029 = vld [vmem:[#allocation6 + $0x408] sm:$0xff]
    %v1030 = vld [vmem:[#allocation6 + $0x410] sm:$0xff]
    %v1031 = vld [vmem:[#allocation6 + $0x418] sm:$0xff]
    %v1032 = vld [vmem:[#allocation6 + $0x420] sm:$0xff]
    %v1033 = vld [vmem:[#allocation6 + $0x428] sm:$0xff]
    %v1034 = vld [vmem:[#allocation6 + $0x430] sm:$0xff]
    %v1035 = vld [vmem:[#allocation6 + $0x438] sm:$0xff]
    %v1036 = vld [vmem:[#allocation6 + $0x440] sm:$0xff]
    %v1037 = vld [vmem:[#allocation6 + $0x448] sm:$0xff]
    %v1038 = vld [vmem:[#allocation6 + $0x450] sm:$0xff]
    %v1039 = vld [vmem:[#allocation6 + $0x458] sm:$0xff]
    %v1040 = vld [vmem:[#allocation6 + $0x460] sm:$0xff]
    %v1041 = vld [vmem:[#allocation6 + $0x468] sm:$0xff]
    %v1042 = vld [vmem:[#allocation6 + $0x470] sm:$0xff]
    %v1043 = vld [vmem:[#allocation6 + $0x478] sm:$0xff]
    %v1044 = vld [vmem:[#allocation6 + $0x480] sm:$0xff]
    %v1045 = vld [vmem:[#allocation6 + $0x488] sm:$0xff]
    %v1046 = vld [vmem:[#allocation6 + $0x490] sm:$0xff]
    %v1047 = vld [vmem:[#allocation6 + $0x498] sm:$0xff]
    %v1048 = vld [vmem:[#allocation6 + $0x4a0] sm:$0xff]
    %v1049 = vld [vmem:[#allocation6 + $0x4a8] sm:$0xff]
    %v1050 = vld [vmem:[#allocation6 + $0x4b0] sm:$0xff]
    %v1051 = vld [vmem:[#allocation6 + $0x4b8] sm:$0xff]
    %v1052 = vld [vmem:[#allocation6 + $0x4c0] sm:$0xff]
    %v1053 = vld [vmem:[#allocation6 + $0x4c8] sm:$0xff]
    %v1054 = vld [vmem:[#allocation6 + $0x4d0] sm:$0xff]
    %v1055 = vld [vmem:[#allocation6 + $0x4d8] sm:$0xff]
    %v1056 = vld [vmem:[#allocation6 + $0x4e0] sm:$0xff]
    %v1057 = vld [vmem:[#allocation6 + $0x4e8] sm:$0xff]
    %v1058 = vld [vmem:[#allocation6 + $0x4f0] sm:$0xff]
    %v1059 = vld [vmem:[#allocation6 + $0x4f8] sm:$0xff]
    %v1060 = vld [vmem:[#allocation6 + $0x500] sm:$0xff]
    %v1061 = vld [vmem:[#allocation6 + $0x508] sm:$0xff]
    %v1062 = vld [vmem:[#allocation6 + $0x510] sm:$0xff]
    %v1063 = vld [vmem:[#allocation6 + $0x518] sm:$0xff]
    %v1064 = vld [vmem:[#allocation6 + $0x520] sm:$0xff]
    %v1065 = vld [vmem:[#allocation6 + $0x528] sm:$0xff]
    %v1066 = vld [vmem:[#allocation6 + $0x530] sm:$0xff]
    %v1067 = vld [vmem:[#allocation6 + $0x538] sm:$0xff]
    %v1068 = vld [vmem:[#allocation6 + $0x540] sm:$0xff]
    %v1069 = vld [vmem:[#allocation6 + $0x548] sm:$0xff]
    %v1070 = vld [vmem:[#allocation6 + $0x550] sm:$0xff]
    %v1071 = vld [vmem:[#allocation6 + $0x558] sm:$0xff]
    %v1072 = vld [vmem:[#allocation6 + $0x560] sm:$0xff]
    %v1073 = vld [vmem:[#allocation6 + $0x568] sm:$0xff]
    %v1074 = vld [vmem:[#allocation6 + $0x570] sm:$0xff]
    %v1075 = vld [vmem:[#allocation6 + $0x578] sm:$0xff]
    %v1076 = vld [vmem:[#allocation6 + $0x580] sm:$0xff]
    %v1077 = vld [vmem:[#allocation6 + $0x588] sm:$0xff]
    %v1078 = vld [vmem:[#allocation6 + $0x590] sm:$0xff]
    %v1079 = vld [vmem:[#allocation6 + $0x598] sm:$0xff]
    %v1080 = vld [vmem:[#allocation6 + $0x5a0] sm:$0xff]
    %v1081 = vld [vmem:[#allocation6 + $0x5a8] sm:$0xff]
    %v1082 = vld [vmem:[#allocation6 + $0x5b0] sm:$0xff]
    %v1083 = vld [vmem:[#allocation6 + $0x5b8] sm:$0xff]
    %v1084 = vld [vmem:[#allocation6 + $0x5c0] sm:$0xff]
    %v1085 = vld [vmem:[#allocation6 + $0x5c8] sm:$0xff]
    %v1086 = vld [vmem:[#allocation6 + $0x5d0] sm:$0xff]
    %v1087 = vld [vmem:[#allocation6 + $0x5d8] sm:$0xff]
    %v1088 = vld [vmem:[#allocation6 + $0x5e0] sm:$0xff]
    %v1089 = vld [vmem:[#allocation6 + $0x5e8] sm:$0xff]
    %v1090 = vld [vmem:[#allocation6 + $0x5f0] sm:$0xff]
    %v1091 = vld [vmem:[#allocation6 + $0x5f8] sm:$0xff]
    %v1092 = vld [vmem:[#allocation6 + $0x600] sm:$0xff]
    %v1093 = vld [vmem:[#allocation6 + $0x608] sm:$0xff]
    %v1094 = vld [vmem:[#allocation6 + $0x610] sm:$0xff]
    %v1095 = vld [vmem:[#allocation6 + $0x618] sm:$0xff]
    %v1096 = vld [vmem:[#allocation6 + $0x620] sm:$0xff]
    %v1097 = vld [vmem:[#allocation6 + $0x628] sm:$0xff]
    %v1098 = vld [vmem:[#allocation6 + $0x630] sm:$0xff]
    %v1099 = vld [vmem:[#allocation6 + $0x638] sm:$0xff]
    %v1100 = vld [vmem:[#allocation6 + $0x640] sm:$0xff]
    %v1101 = vld [vmem:[#allocation6 + $0x648] sm:$0xff]
    %v1102 = vld [vmem:[#allocation6 + $0x650] sm:$0xff]
    %v1103 = vld [vmem:[#allocation6 + $0x658] sm:$0xff]
    %v1104 = vld [vmem:[#allocation6 + $0x660] sm:$0xff]
    %v1105 = vld [vmem:[#allocation6 + $0x668] sm:$0xff]
    %v1106 = vld [vmem:[#allocation6 + $0x670] sm:$0xff]
    %v1107 = vld [vmem:[#allocation6 + $0x678] sm:$0xff]
    %v1108 = vld [vmem:[#allocation6 + $0x680] sm:$0xff]
    %v1109 = vld [vmem:[#allocation6 + $0x688] sm:$0xff]
    %v1110 = vld [vmem:[#allocation6 + $0x690] sm:$0xff]
    %v1111 = vld [vmem:[#allocation6 + $0x698] sm:$0xff]
    %v1112 = vld [vmem:[#allocation6 + $0x6a0] sm:$0xff]
    %v1113 = vld [vmem:[#allocation6 + $0x6a8] sm:$0xff]
    %v1114 = vld [vmem:[#allocation6 + $0x6b0] sm:$0xff]
    %v1115 = vld [vmem:[#allocation6 + $0x6b8] sm:$0xff]
    %v1116 = vld [vmem:[#allocation6 + $0x6c0] sm:$0xff]
    %v1117 = vld [vmem:[#allocation6 + $0x6c8] sm:$0xff]
    %v1118 = vld [vmem:[#allocation6 + $0x6d0] sm:$0xff]
    %v1119 = vld [vmem:[#allocation6 + $0x6d8] sm:$0xff]
    %v1120 = vld [vmem:[#allocation6 + $0x6e0] sm:$0xff]
    %v1121 = vld [vmem:[#allocation6 + $0x6e8] sm:$0xff]
    %v1122 = vld [vmem:[#allocation6 + $0x6f0] sm:$0xff]
    %v1123 = vld [vmem:[#allocation6 + $0x6f8] sm:$0xff]
    %v1124 = vld [vmem:[#allocation6 + $0x700] sm:$0xff]
    %v1125 = vld [vmem:[#allocation6 + $0x708] sm:$0xff]
    %v1126 = vld [vmem:[#allocation6 + $0x710] sm:$0xff]
    %v1127 = vld [vmem:[#allocation6 + $0x718] sm:$0xff]
    %v1128 = vld [vmem:[#allocation6 + $0x720] sm:$0xff]
    %v1129 = vld [vmem:[#allocation6 + $0x728] sm:$0xff]
    %v1130 = vld [vmem:[#allocation6 + $0x730] sm:$0xff]
    %v1131 = vld [vmem:[#allocation6 + $0x738] sm:$0xff]
    %v1132 = vld [vmem:[#allocation6 + $0x740] sm:$0xff]
    %v1133 = vld [vmem:[#allocation6 + $0x748] sm:$0xff]
    %v1134 = vld [vmem:[#allocation6 + $0x750] sm:$0xff]
    %v1135 = vld [vmem:[#allocation6 + $0x758] sm:$0xff]
    %v1136 = vld [vmem:[#allocation6 + $0x760] sm:$0xff]
    %v1137 = vld [vmem:[#allocation6 + $0x768] sm:$0xff]
    %v1138 = vld [vmem:[#allocation6 + $0x770] sm:$0xff]
    %v1139 = vld [vmem:[#allocation6 + $0x778] sm:$0xff]
    %v1140 = vld [vmem:[#allocation6 + $0x780] sm:$0xff]
    %v1141 = vld [vmem:[#allocation6 + $0x788] sm:$0xff]
    %v1142 = vld [vmem:[#allocation6 + $0x790] sm:$0xff]
    %v1143 = vld [vmem:[#allocation6 + $0x798] sm:$0xff]
    %v1144 = vld [vmem:[#allocation6 + $0x7a0] sm:$0xff]
    %v1145 = vld [vmem:[#allocation6 + $0x7a8] sm:$0xff]
    %v1146 = vld [vmem:[#allocation6 + $0x7b0] sm:$0xff]
    %v1147 = vld [vmem:[#allocation6 + $0x7b8] sm:$0xff]
    %v1148 = vld [vmem:[#allocation6 + $0x7c0] sm:$0xff]
    %v1149 = vld [vmem:[#allocation6 + $0x7c8] sm:$0xff]
    %v1150 = vld [vmem:[#allocation6 + $0x7d0] sm:$0xff]
    %v1151 = vld [vmem:[#allocation6 + $0x7d8] sm:$0xff]
    %v1152 = vld [vmem:[#allocation6 + $0x7e0] sm:$0xff]
    %v1153 = vld [vmem:[#allocation6 + $0x7e8] sm:$0xff]
    %v1154 = vld [vmem:[#allocation6 + $0x7f0] sm:$0xff]
    %v1155 = vld [vmem:[#allocation6 + $0x7f8] sm:$0xff]
    %v1156 = vld [vmem:[%s6] sm:$0xff]
    %v1158 = vperm.slane %v1156, 0
    %v1159 = vperm.slane %v1156, 1
    %v1160 = vperm.slane %v1156, 2
    %v1161 = vperm.slane %v1156, 3
    %v1162 = vperm.slane %v1156, 4
    %v1163 = vperm.slane %v1156, 5
    %v1164 = vperm.slane %v1156, 6
    %v1165 = vperm.slane %v1156, 7
    %v1430 = vunpack.c.l.b16 %v900
    %v1431 = vunpack.c.h.b16 %v900
    %v1432 = vunpack.c.l.b16 %v901
    %v1433 = vunpack.c.h.b16 %v901
    %v1434 = vunpack.c.l.b16 %v902
    %v1435 = vunpack.c.h.b16 %v902
    %v1436 = vunpack.c.l.b16 %v903
    %v1437 = vunpack.c.h.b16 %v903
    %v1438 = vunpack.c.l.b16 %v904
    %v1439 = vunpack.c.h.b16 %v904
    %v1440 = vunpack.c.l.b16 %v905
    %v1441 = vunpack.c.h.b16 %v905
    %v1442 = vunpack.c.l.b16 %v906
    %v1443 = vunpack.c.h.b16 %v906
    %v1444 = vunpack.c.l.b16 %v907
    %v1445 = vunpack.c.h.b16 %v907
    %v1446 = vunpack.c.l.b16 %v908
    %v1447 = vunpack.c.h.b16 %v908
    %v1448 = vunpack.c.l.b16 %v909
    %v1449 = vunpack.c.h.b16 %v909
    %v1450 = vunpack.c.l.b16 %v910
    %v1451 = vunpack.c.h.b16 %v910
    %v1452 = vunpack.c.l.b16 %v911
    %v1453 = vunpack.c.h.b16 %v911
    %v1454 = vunpack.c.l.b16 %v912
    %v1455 = vunpack.c.h.b16 %v912
    %v1456 = vunpack.c.l.b16 %v913
    %v1457 = vunpack.c.h.b16 %v913
    %v1458 = vunpack.c.l.b16 %v914
    %v1459 = vunpack.c.h.b16 %v914
    %v1460 = vunpack.c.l.b16 %v915
    %v1461 = vunpack.c.h.b16 %v915
    %v1462 = vunpack.c.l.b16 %v916
    %v1463 = vunpack.c.h.b16 %v916
    %v1464 = vunpack.c.l.b16 %v917
    %v1465 = vunpack.c.h.b16 %v917
    %v1466 = vunpack.c.l.b16 %v918
    %v1467 = vunpack.c.h.b16 %v918
    %v1468 = vunpack.c.l.b16 %v919
    %v1469 = vunpack.c.h.b16 %v919
    %v1470 = vunpack.c.l.b16 %v920
    %v1471 = vunpack.c.h.b16 %v920
    %v1472 = vunpack.c.l.b16 %v921
    %v1473 = vunpack.c.h.b16 %v921
    %v1474 = vunpack.c.l.b16 %v922
    %v1475 = vunpack.c.h.b16 %v922
    %v1476 = vunpack.c.l.b16 %v923
    %v1477 = vunpack.c.h.b16 %v923
    %v1478 = vunpack.c.l.b16 %v924
    %v1479 = vunpack.c.h.b16 %v924
    %v1480 = vunpack.c.l.b16 %v925
    %v1481 = vunpack.c.h.b16 %v925
    %v1482 = vunpack.c.l.b16 %v926
    %v1483 = vunpack.c.h.b16 %v926
    %v1484 = vunpack.c.l.b16 %v927
    %v1485 = vunpack.c.h.b16 %v927
    %v1486 = vunpack.c.l.b16 %v928
    %v1487 = vunpack.c.h.b16 %v928
    %v1488 = vunpack.c.l.b16 %v929
    %v1489 = vunpack.c.h.b16 %v929
    %v1490 = vunpack.c.l.b16 %v930
    %v1491 = vunpack.c.h.b16 %v930
    %v1492 = vunpack.c.l.b16 %v931
    %v1493 = vunpack.c.h.b16 %v931
    %v1494 = vunpack.c.l.b16 %v932
    %v1495 = vunpack.c.h.b16 %v932
    %v1496 = vunpack.c.l.b16 %v933
    %v1497 = vunpack.c.h.b16 %v933
    %v1498 = vunpack.c.l.b16 %v934
    %v1499 = vunpack.c.h.b16 %v934
    %v1500 = vunpack.c.l.b16 %v935
    %v1501 = vunpack.c.h.b16 %v935
    %v1502 = vunpack.c.l.b16 %v936
    %v1503 = vunpack.c.h.b16 %v936
    %v1504 = vunpack.c.l.b16 %v937
    %v1505 = vunpack.c.h.b16 %v937
    %v1506 = vunpack.c.l.b16 %v938
    %v1507 = vunpack.c.h.b16 %v938
    %v1508 = vunpack.c.l.b16 %v939
    %v1509 = vunpack.c.h.b16 %v939
    %v1510 = vunpack.c.l.b16 %v940
    %v1511 = vunpack.c.h.b16 %v940
    %v1512 = vunpack.c.l.b16 %v941
    %v1513 = vunpack.c.h.b16 %v941
    %v1514 = vunpack.c.l.b16 %v942
    %v1515 = vunpack.c.h.b16 %v942
    %v1516 = vunpack.c.l.b16 %v943
    %v1517 = vunpack.c.h.b16 %v943
    %v1518 = vunpack.c.l.b16 %v944
    %v1519 = vunpack.c.h.b16 %v944
    %v1520 = vunpack.c.l.b16 %v945
    %v1521 = vunpack.c.h.b16 %v945
    %v1522 = vunpack.c.l.b16 %v946
    %v1523 = vunpack.c.h.b16 %v946
    %v1524 = vunpack.c.l.b16 %v947
    %v1525 = vunpack.c.h.b16 %v947
    %v1526 = vunpack.c.l.b16 %v948
    %v1527 = vunpack.c.h.b16 %v948
    %v1528 = vunpack.c.l.b16 %v949
    %v1529 = vunpack.c.h.b16 %v949
    %v1530 = vunpack.c.l.b16 %v950
    %v1531 = vunpack.c.h.b16 %v950
    %v1532 = vunpack.c.l.b16 %v951
    %v1533 = vunpack.c.h.b16 %v951
    %v1534 = vunpack.c.l.b16 %v952
    %v1535 = vunpack.c.h.b16 %v952
    %v1536 = vunpack.c.l.b16 %v953
    %v1537 = vunpack.c.h.b16 %v953
    %v1538 = vunpack.c.l.b16 %v954
    %v1539 = vunpack.c.h.b16 %v954
    %v1540 = vunpack.c.l.b16 %v955
    %v1541 = vunpack.c.h.b16 %v955
    %v1542 = vunpack.c.l.b16 %v956
    %v1543 = vunpack.c.h.b16 %v956
    %v1544 = vunpack.c.l.b16 %v957
    %v1545 = vunpack.c.h.b16 %v957
    %v1546 = vunpack.c.l.b16 %v958
    %v1547 = vunpack.c.h.b16 %v958
    %v1548 = vunpack.c.l.b16 %v959
    %v1549 = vunpack.c.h.b16 %v959
    %v1550 = vunpack.c.l.b16 %v960
    %v1551 = vunpack.c.h.b16 %v960
    %v1552 = vunpack.c.l.b16 %v961
    %v1553 = vunpack.c.h.b16 %v961
    %v1554 = vunpack.c.l.b16 %v962
    %v1555 = vunpack.c.h.b16 %v962
    %v1556 = vunpack.c.l.b16 %v963
    %v1557 = vunpack.c.h.b16 %v963
    %v1558 = vunpack.c.l.b16 %v964
    %v1559 = vunpack.c.h.b16 %v964
    %v1560 = vunpack.c.l.b16 %v965
    %v1561 = vunpack.c.h.b16 %v965
    %v1562 = vunpack.c.l.b16 %v966
    %v1563 = vunpack.c.h.b16 %v966
    %v1564 = vunpack.c.l.b16 %v967
    %v1565 = vunpack.c.h.b16 %v967
    %v1566 = vunpack.c.l.b16 %v968
    %v1567 = vunpack.c.h.b16 %v968
    %v1568 = vunpack.c.l.b16 %v969
    %v1569 = vunpack.c.h.b16 %v969
    %v1570 = vunpack.c.l.b16 %v970
    %v1571 = vunpack.c.h.b16 %v970
    %v1572 = vunpack.c.l.b16 %v971
    %v1573 = vunpack.c.h.b16 %v971
    %v1574 = vunpack.c.l.b16 %v972
    %v1575 = vunpack.c.h.b16 %v972
    %v1576 = vunpack.c.l.b16 %v973
    %v1577 = vunpack.c.h.b16 %v973
    %v1578 = vunpack.c.l.b16 %v974
    %v1579 = vunpack.c.h.b16 %v974
    %v1580 = vunpack.c.l.b16 %v975
    %v1581 = vunpack.c.h.b16 %v975
    %v1582 = vunpack.c.l.b16 %v976
    %v1583 = vunpack.c.h.b16 %v976
    %v1584 = vunpack.c.l.b16 %v977
    %v1585 = vunpack.c.h.b16 %v977
    %v1586 = vunpack.c.l.b16 %v978
    %v1587 = vunpack.c.h.b16 %v978
    %v1588 = vunpack.c.l.b16 %v979
    %v1589 = vunpack.c.h.b16 %v979
    %v1590 = vunpack.c.l.b16 %v980
    %v1591 = vunpack.c.h.b16 %v980
    %v1592 = vunpack.c.l.b16 %v981
    %v1593 = vunpack.c.h.b16 %v981
    %v1594 = vunpack.c.l.b16 %v982
    %v1595 = vunpack.c.h.b16 %v982
    %v1596 = vunpack.c.l.b16 %v983
    %v1597 = vunpack.c.h.b16 %v983
    %v1598 = vunpack.c.l.b16 %v984
    %v1599 = vunpack.c.h.b16 %v984
    %v1600 = vunpack.c.l.b16 %v985
    %v1601 = vunpack.c.h.b16 %v985
    %v1602 = vunpack.c.l.b16 %v986
    %v1603 = vunpack.c.h.b16 %v986
    %v1604 = vunpack.c.l.b16 %v987
    %v1605 = vunpack.c.h.b16 %v987
    %v1606 = vunpack.c.l.b16 %v988
    %v1607 = vunpack.c.h.b16 %v988
    %v1608 = vunpack.c.l.b16 %v989
    %v1609 = vunpack.c.h.b16 %v989
    %v1610 = vunpack.c.l.b16 %v990
    %v1611 = vunpack.c.h.b16 %v990
    %v1612 = vunpack.c.l.b16 %v991
    %v1613 = vunpack.c.h.b16 %v991
    %v1614 = vunpack.c.l.b16 %v992
    %v1615 = vunpack.c.h.b16 %v992
    %v1616 = vunpack.c.l.b16 %v993
    %v1617 = vunpack.c.h.b16 %v993
    %v1618 = vunpack.c.l.b16 %v994
    %v1619 = vunpack.c.h.b16 %v994
    %v1620 = vunpack.c.l.b16 %v995
    %v1621 = vunpack.c.h.b16 %v995
    %v1622 = vunpack.c.l.b16 %v996
    %v1623 = vunpack.c.h.b16 %v996
    %v1624 = vunpack.c.l.b16 %v997
    %v1625 = vunpack.c.h.b16 %v997
    %v1626 = vunpack.c.l.b16 %v998
    %v1627 = vunpack.c.h.b16 %v998
    %v1628 = vunpack.c.l.b16 %v999
    %v1629 = vunpack.c.h.b16 %v999
    %v1630 = vunpack.c.l.b16 %v1000
    %v1631 = vunpack.c.h.b16 %v1000
    %v1632 = vunpack.c.l.b16 %v1001
    %v1633 = vunpack.c.h.b16 %v1001
    %v1634 = vunpack.c.l.b16 %v1002
    %v1635 = vunpack.c.h.b16 %v1002
    %v1636 = vunpack.c.l.b16 %v1003
    %v1637 = vunpack.c.h.b16 %v1003
    %v1638 = vunpack.c.l.b16 %v1004
    %v1639 = vunpack.c.h.b16 %v1004
    %v1640 = vunpack.c.l.b16 %v1005
    %v1641 = vunpack.c.h.b16 %v1005
    %v1642 = vunpack.c.l.b16 %v1006
    %v1643 = vunpack.c.h.b16 %v1006
    %v1644 = vunpack.c.l.b16 %v1007
    %v1645 = vunpack.c.h.b16 %v1007
    %v1646 = vunpack.c.l.b16 %v1008
    %v1647 = vunpack.c.h.b16 %v1008
    %v1648 = vunpack.c.l.b16 %v1009
    %v1649 = vunpack.c.h.b16 %v1009
    %v1650 = vunpack.c.l.b16 %v1010
    %v1651 = vunpack.c.h.b16 %v1010
    %v1652 = vunpack.c.l.b16 %v1011
    %v1653 = vunpack.c.h.b16 %v1011
    %v1654 = vunpack.c.l.b16 %v1012
    %v1655 = vunpack.c.h.b16 %v1012
    %v1656 = vunpack.c.l.b16 %v1013
    %v1657 = vunpack.c.h.b16 %v1013
    %v1658 = vunpack.c.l.b16 %v1014
    %v1659 = vunpack.c.h.b16 %v1014
    %v1660 = vunpack.c.l.b16 %v1015
    %v1661 = vunpack.c.h.b16 %v1015
    %v1662 = vunpack.c.l.b16 %v1016
    %v1663 = vunpack.c.h.b16 %v1016
    %v1664 = vunpack.c.l.b16 %v1017
    %v1665 = vunpack.c.h.b16 %v1017
    %v1666 = vunpack.c.l.b16 %v1018
    %v1667 = vunpack.c.h.b16 %v1018
    %v1668 = vunpack.c.l.b16 %v1019
    %v1669 = vunpack.c.h.b16 %v1019
    %v1670 = vunpack.c.l.b16 %v1020
    %v1671 = vunpack.c.h.b16 %v1020
    %v1672 = vunpack.c.l.b16 %v1021
    %v1673 = vunpack.c.h.b16 %v1021
    %v1674 = vunpack.c.l.b16 %v1022
    %v1675 = vunpack.c.h.b16 %v1022
    %v1676 = vunpack.c.l.b16 %v1023
    %v1677 = vunpack.c.h.b16 %v1023
    %v1678 = vunpack.c.l.b16 %v1024
    %v1679 = vunpack.c.h.b16 %v1024
    %v1680 = vunpack.c.l.b16 %v1025
    %v1681 = vunpack.c.h.b16 %v1025
    %v1682 = vunpack.c.l.b16 %v1026
    %v1683 = vunpack.c.h.b16 %v1026
    %v1684 = vunpack.c.l.b16 %v1027
    %v1685 = vunpack.c.h.b16 %v1027
    %v1686 = vunpack.c.l.b16 %v1028
    %v1687 = vunpack.c.h.b16 %v1028
    %v1688 = vunpack.c.l.b16 %v1029
    %v1689 = vunpack.c.h.b16 %v1029
    %v1690 = vunpack.c.l.b16 %v1030
    %v1691 = vunpack.c.h.b16 %v1030
    %v1692 = vunpack.c.l.b16 %v1031
    %v1693 = vunpack.c.h.b16 %v1031
    %v1694 = vunpack.c.l.b16 %v1032
    %v1695 = vunpack.c.h.b16 %v1032
    %v1696 = vunpack.c.l.b16 %v1033
    %v1697 = vunpack.c.h.b16 %v1033
    %v1698 = vunpack.c.l.b16 %v1034
    %v1699 = vunpack.c.h.b16 %v1034
    %v1700 = vunpack.c.l.b16 %v1035
    %v1701 = vunpack.c.h.b16 %v1035
    %v1702 = vunpack.c.l.b16 %v1036
    %v1703 = vunpack.c.h.b16 %v1036
    %v1704 = vunpack.c.l.b16 %v1037
    %v1705 = vunpack.c.h.b16 %v1037
    %v1706 = vunpack.c.l.b16 %v1038
    %v1707 = vunpack.c.h.b16 %v1038
    %v1708 = vunpack.c.l.b16 %v1039
    %v1709 = vunpack.c.h.b16 %v1039
    %v1710 = vunpack.c.l.b16 %v1040
    %v1711 = vunpack.c.h.b16 %v1040
    %v1712 = vunpack.c.l.b16 %v1041
    %v1713 = vunpack.c.h.b16 %v1041
    %v1714 = vunpack.c.l.b16 %v1042
    %v1715 = vunpack.c.h.b16 %v1042
    %v1716 = vunpack.c.l.b16 %v1043
    %v1717 = vunpack.c.h.b16 %v1043
    %v1718 = vunpack.c.l.b16 %v1044
    %v1719 = vunpack.c.h.b16 %v1044
    %v1720 = vunpack.c.l.b16 %v1045
    %v1721 = vunpack.c.h.b16 %v1045
    %v1722 = vunpack.c.l.b16 %v1046
    %v1723 = vunpack.c.h.b16 %v1046
    %v1724 = vunpack.c.l.b16 %v1047
    %v1725 = vunpack.c.h.b16 %v1047
    %v1726 = vunpack.c.l.b16 %v1048
    %v1727 = vunpack.c.h.b16 %v1048
    %v1728 = vunpack.c.l.b16 %v1049
    %v1729 = vunpack.c.h.b16 %v1049
    %v1730 = vunpack.c.l.b16 %v1050
    %v1731 = vunpack.c.h.b16 %v1050
    %v1732 = vunpack.c.l.b16 %v1051
    %v1733 = vunpack.c.h.b16 %v1051
    %v1734 = vunpack.c.l.b16 %v1052
    %v1735 = vunpack.c.h.b16 %v1052
    %v1736 = vunpack.c.l.b16 %v1053
    %v1737 = vunpack.c.h.b16 %v1053
    %v1738 = vunpack.c.l.b16 %v1054
    %v1739 = vunpack.c.h.b16 %v1054
    %v1740 = vunpack.c.l.b16 %v1055
    %v1741 = vunpack.c.h.b16 %v1055
    %v1742 = vunpack.c.l.b16 %v1056
    %v1743 = vunpack.c.h.b16 %v1056
    %v1744 = vunpack.c.l.b16 %v1057
    %v1745 = vunpack.c.h.b16 %v1057
    %v1746 = vunpack.c.l.b16 %v1058
    %v1747 = vunpack.c.h.b16 %v1058
    %v1748 = vunpack.c.l.b16 %v1059
    %v1749 = vunpack.c.h.b16 %v1059
    %v1750 = vunpack.c.l.b16 %v1060
    %v1751 = vunpack.c.h.b16 %v1060
    %v1752 = vunpack.c.l.b16 %v1061
    %v1753 = vunpack.c.h.b16 %v1061
    %v1754 = vunpack.c.l.b16 %v1062
    %v1755 = vunpack.c.h.b16 %v1062
    %v1756 = vunpack.c.l.b16 %v1063
    %v1757 = vunpack.c.h.b16 %v1063
    %v1758 = vunpack.c.l.b16 %v1064
    %v1759 = vunpack.c.h.b16 %v1064
    %v1760 = vunpack.c.l.b16 %v1065
    %v1761 = vunpack.c.h.b16 %v1065
    %v1762 = vunpack.c.l.b16 %v1066
    %v1763 = vunpack.c.h.b16 %v1066
    %v1764 = vunpack.c.l.b16 %v1067
    %v1765 = vunpack.c.h.b16 %v1067
    %v1766 = vunpack.c.l.b16 %v1068
    %v1767 = vunpack.c.h.b16 %v1068
    %v1768 = vunpack.c.l.b16 %v1069
    %v1769 = vunpack.c.h.b16 %v1069
    %v1770 = vunpack.c.l.b16 %v1070
    %v1771 = vunpack.c.h.b16 %v1070
    %v1772 = vunpack.c.l.b16 %v1071
    %v1773 = vunpack.c.h.b16 %v1071
    %v1774 = vunpack.c.l.b16 %v1072
    %v1775 = vunpack.c.h.b16 %v1072
    %v1776 = vunpack.c.l.b16 %v1073
    %v1777 = vunpack.c.h.b16 %v1073
    %v1778 = vunpack.c.l.b16 %v1074
    %v1779 = vunpack.c.h.b16 %v1074
    %v1780 = vunpack.c.l.b16 %v1075
    %v1781 = vunpack.c.h.b16 %v1075
    %v1782 = vunpack.c.l.b16 %v1076
    %v1783 = vunpack.c.h.b16 %v1076
    %v1784 = vunpack.c.l.b16 %v1077
    %v1785 = vunpack.c.h.b16 %v1077
    %v1786 = vunpack.c.l.b16 %v1078
    %v1787 = vunpack.c.h.b16 %v1078
    %v1788 = vunpack.c.l.b16 %v1079
    %v1789 = vunpack.c.h.b16 %v1079
    %v1790 = vunpack.c.l.b16 %v1080
    %v1791 = vunpack.c.h.b16 %v1080
    %v1792 = vunpack.c.l.b16 %v1081
    %v1793 = vunpack.c.h.b16 %v1081
    %v1794 = vunpack.c.l.b16 %v1082
    %v1795 = vunpack.c.h.b16 %v1082
    %v1796 = vunpack.c.l.b16 %v1083
    %v1797 = vunpack.c.h.b16 %v1083
    %v1798 = vunpack.c.l.b16 %v1084
    %v1799 = vunpack.c.h.b16 %v1084
    %v1800 = vunpack.c.l.b16 %v1085
    %v1801 = vunpack.c.h.b16 %v1085
    %v1802 = vunpack.c.l.b16 %v1086
    %v1803 = vunpack.c.h.b16 %v1086
    %v1804 = vunpack.c.l.b16 %v1087
    %v1805 = vunpack.c.h.b16 %v1087
    %v1806 = vunpack.c.l.b16 %v1088
    %v1807 = vunpack.c.h.b16 %v1088
    %v1808 = vunpack.c.l.b16 %v1089
    %v1809 = vunpack.c.h.b16 %v1089
    %v1810 = vunpack.c.l.b16 %v1090
    %v1811 = vunpack.c.h.b16 %v1090
    %v1812 = vunpack.c.l.b16 %v1091
    %v1813 = vunpack.c.h.b16 %v1091
    %v1814 = vunpack.c.l.b16 %v1092
    %v1815 = vunpack.c.h.b16 %v1092
    %v1816 = vunpack.c.l.b16 %v1093
    %v1817 = vunpack.c.h.b16 %v1093
    %v1818 = vunpack.c.l.b16 %v1094
    %v1819 = vunpack.c.h.b16 %v1094
    %v1820 = vunpack.c.l.b16 %v1095
    %v1821 = vunpack.c.h.b16 %v1095
    %v1822 = vunpack.c.l.b16 %v1096
    %v1823 = vunpack.c.h.b16 %v1096
    %v1824 = vunpack.c.l.b16 %v1097
    %v1825 = vunpack.c.h.b16 %v1097
    %v1826 = vunpack.c.l.b16 %v1098
    %v1827 = vunpack.c.h.b16 %v1098
    %v1828 = vunpack.c.l.b16 %v1099
    %v1829 = vunpack.c.h.b16 %v1099
    %v1830 = vunpack.c.l.b16 %v1100
    %v1831 = vunpack.c.h.b16 %v1100
    %v1832 = vunpack.c.l.b16 %v1101
    %v1833 = vunpack.c.h.b16 %v1101
    %v1834 = vunpack.c.l.b16 %v1102
    %v1835 = vunpack.c.h.b16 %v1102
    %v1836 = vunpack.c.l.b16 %v1103
    %v1837 = vunpack.c.h.b16 %v1103
    %v1838 = vunpack.c.l.b16 %v1104
    %v1839 = vunpack.c.h.b16 %v1104
    %v1840 = vunpack.c.l.b16 %v1105
    %v1841 = vunpack.c.h.b16 %v1105
    %v1842 = vunpack.c.l.b16 %v1106
    %v1843 = vunpack.c.h.b16 %v1106
    %v1844 = vunpack.c.l.b16 %v1107
    %v1845 = vunpack.c.h.b16 %v1107
    %v1846 = vunpack.c.l.b16 %v1108
    %v1847 = vunpack.c.h.b16 %v1108
    %v1848 = vunpack.c.l.b16 %v1109
    %v1849 = vunpack.c.h.b16 %v1109
    %v1850 = vunpack.c.l.b16 %v1110
    %v1851 = vunpack.c.h.b16 %v1110
    %v1852 = vunpack.c.l.b16 %v1111
    %v1853 = vunpack.c.h.b16 %v1111
    %v1854 = vunpack.c.l.b16 %v1112
    %v1855 = vunpack.c.h.b16 %v1112
    %v1856 = vunpack.c.l.b16 %v1113
    %v1857 = vunpack.c.h.b16 %v1113
    %v1858 = vunpack.c.l.b16 %v1114
    %v1859 = vunpack.c.h.b16 %v1114
    %v1860 = vunpack.c.l.b16 %v1115
    %v1861 = vunpack.c.h.b16 %v1115
    %v1862 = vunpack.c.l.b16 %v1116
    %v1863 = vunpack.c.h.b16 %v1116
    %v1864 = vunpack.c.l.b16 %v1117
    %v1865 = vunpack.c.h.b16 %v1117
    %v1866 = vunpack.c.l.b16 %v1118
    %v1867 = vunpack.c.h.b16 %v1118
    %v1868 = vunpack.c.l.b16 %v1119
    %v1869 = vunpack.c.h.b16 %v1119
    %v1870 = vunpack.c.l.b16 %v1120
    %v1871 = vunpack.c.h.b16 %v1120
    %v1872 = vunpack.c.l.b16 %v1121
    %v1873 = vunpack.c.h.b16 %v1121
    %v1874 = vunpack.c.l.b16 %v1122
    %v1875 = vunpack.c.h.b16 %v1122
    %v1876 = vunpack.c.l.b16 %v1123
    %v1877 = vunpack.c.h.b16 %v1123
    %v1878 = vunpack.c.l.b16 %v1124
    %v1879 = vunpack.c.h.b16 %v1124
    %v1880 = vunpack.c.l.b16 %v1125
    %v1881 = vunpack.c.h.b16 %v1125
    %v1882 = vunpack.c.l.b16 %v1126
    %v1883 = vunpack.c.h.b16 %v1126
    %v1884 = vunpack.c.l.b16 %v1127
    %v1885 = vunpack.c.h.b16 %v1127
    %v1886 = vunpack.c.l.b16 %v1128
    %v1887 = vunpack.c.h.b16 %v1128
    %v1888 = vunpack.c.l.b16 %v1129
    %v1889 = vunpack.c.h.b16 %v1129
    %v1890 = vunpack.c.l.b16 %v1130
    %v1891 = vunpack.c.h.b16 %v1130
    %v1892 = vunpack.c.l.b16 %v1131
    %v1893 = vunpack.c.h.b16 %v1131
    %v1894 = vunpack.c.l.b16 %v1132
    %v1895 = vunpack.c.h.b16 %v1132
    %v1896 = vunpack.c.l.b16 %v1133
    %v1897 = vunpack.c.h.b16 %v1133
    %v1898 = vunpack.c.l.b16 %v1134
    %v1899 = vunpack.c.h.b16 %v1134
    %v1900 = vunpack.c.l.b16 %v1135
    %v1901 = vunpack.c.h.b16 %v1135
    %v1902 = vunpack.c.l.b16 %v1136
    %v1903 = vunpack.c.h.b16 %v1136
    %v1904 = vunpack.c.l.b16 %v1137
    %v1905 = vunpack.c.h.b16 %v1137
    %v1906 = vunpack.c.l.b16 %v1138
    %v1907 = vunpack.c.h.b16 %v1138
    %v1908 = vunpack.c.l.b16 %v1139
    %v1909 = vunpack.c.h.b16 %v1139
    %v1910 = vunpack.c.l.b16 %v1140
    %v1911 = vunpack.c.h.b16 %v1140
    %v1912 = vunpack.c.l.b16 %v1141
    %v1913 = vunpack.c.h.b16 %v1141
    %v1914 = vunpack.c.l.b16 %v1142
    %v1915 = vunpack.c.h.b16 %v1142
    %v1916 = vunpack.c.l.b16 %v1143
    %v1917 = vunpack.c.h.b16 %v1143
    %v1918 = vunpack.c.l.b16 %v1144
    %v1919 = vunpack.c.h.b16 %v1144
    %v1920 = vunpack.c.l.b16 %v1145
    %v1921 = vunpack.c.h.b16 %v1145
    %v1922 = vunpack.c.l.b16 %v1146
    %v1923 = vunpack.c.h.b16 %v1146
    %v1924 = vunpack.c.l.b16 %v1147
    %v1925 = vunpack.c.h.b16 %v1147
    %v1926 = vunpack.c.l.b16 %v1148
    %v1927 = vunpack.c.h.b16 %v1148
    %v1928 = vunpack.c.l.b16 %v1149
    %v1929 = vunpack.c.h.b16 %v1149
    %v1930 = vunpack.c.l.b16 %v1150
    %v1931 = vunpack.c.h.b16 %v1150
    %v1932 = vunpack.c.l.b16 %v1151
    %v1933 = vunpack.c.h.b16 %v1151
    %v1934 = vunpack.c.l.b16 %v1152
    %v1935 = vunpack.c.h.b16 %v1152
    %v1936 = vunpack.c.l.b16 %v1153
    %v1937 = vunpack.c.h.b16 %v1153
    %v1938 = vunpack.c.l.b16 %v1154
    %v1939 = vunpack.c.h.b16 %v1154
    %v1940 = vunpack.c.l.b16 %v1155
    %v1941 = vunpack.c.h.b16 %v1155
    %v1942 = vpack.c.b16 %v1438, %v1430
    %v1943 = vpack.c.b16 %v1439, %v1431
    %v1944 = vpack.c.b16 %v1440, %v1432
    %v1945 = vpack.c.b16 %v1441, %v1433
    %v1946 = vpack.c.b16 %v1442, %v1434
    %v1947 = vpack.c.b16 %v1443, %v1435
    %v1948 = vpack.c.b16 %v1444, %v1436
    %v1949 = vpack.c.b16 %v1445, %v1437
    %v1950 = vpack.c.b16 %v1454, %v1446
    %v1951 = vpack.c.b16 %v1455, %v1447
    %v1952 = vpack.c.b16 %v1456, %v1448
    %v1953 = vpack.c.b16 %v1457, %v1449
    %v1954 = vpack.c.b16 %v1458, %v1450
    %v1955 = vpack.c.b16 %v1459, %v1451
    %v1956 = vpack.c.b16 %v1460, %v1452
    %v1957 = vpack.c.b16 %v1461, %v1453
    %v1958 = vpack.c.b16 %v1470, %v1462
    %v1959 = vpack.c.b16 %v1471, %v1463
    %v1960 = vpack.c.b16 %v1472, %v1464
    %v1961 = vpack.c.b16 %v1473, %v1465
    %v1962 = vpack.c.b16 %v1474, %v1466
    %v1963 = vpack.c.b16 %v1475, %v1467
    %v1964 = vpack.c.b16 %v1476, %v1468
    %v1965 = vpack.c.b16 %v1477, %v1469
    %v1966 = vpack.c.b16 %v1486, %v1478
    %v1967 = vpack.c.b16 %v1487, %v1479
    %v1968 = vpack.c.b16 %v1488, %v1480
    %v1969 = vpack.c.b16 %v1489, %v1481
    %v1970 = vpack.c.b16 %v1490, %v1482
    %v1971 = vpack.c.b16 %v1491, %v1483
    %v1972 = vpack.c.b16 %v1492, %v1484
    %v1973 = vpack.c.b16 %v1493, %v1485
    %v1974 = vpack.c.b16 %v1502, %v1494
    %v1975 = vpack.c.b16 %v1503, %v1495
    %v1976 = vpack.c.b16 %v1504, %v1496
    %v1977 = vpack.c.b16 %v1505, %v1497
    %v1978 = vpack.c.b16 %v1506, %v1498
    %v1979 = vpack.c.b16 %v1507, %v1499
    %v1980 = vpack.c.b16 %v1508, %v1500
    %v1981 = vpack.c.b16 %v1509, %v1501
    %v1982 = vpack.c.b16 %v1518, %v1510
    %v1983 = vpack.c.b16 %v1519, %v1511
    %v1984 = vpack.c.b16 %v1520, %v1512
    %v1985 = vpack.c.b16 %v1521, %v1513
    %v1986 = vpack.c.b16 %v1522, %v1514
    %v1987 = vpack.c.b16 %v1523, %v1515
    %v1988 = vpack.c.b16 %v1524, %v1516
    %v1989 = vpack.c.b16 %v1525, %v1517
    %v1990 = vpack.c.b16 %v1534, %v1526
    %v1991 = vpack.c.b16 %v1535, %v1527
    %v1992 = vpack.c.b16 %v1536, %v1528
    %v1993 = vpack.c.b16 %v1537, %v1529
    %v1994 = vpack.c.b16 %v1538, %v1530
    %v1995 = vpack.c.b16 %v1539, %v1531
    %v1996 = vpack.c.b16 %v1540, %v1532
    %v1997 = vpack.c.b16 %v1541, %v1533
    %v1998 = vpack.c.b16 %v1550, %v1542
    %v1999 = vpack.c.b16 %v1551, %v1543
    %v2000 = vpack.c.b16 %v1552, %v1544
    %v2001 = vpack.c.b16 %v1553, %v1545
    %v2002 = vpack.c.b16 %v1554, %v1546
    %v2003 = vpack.c.b16 %v1555, %v1547
    %v2004 = vpack.c.b16 %v1556, %v1548
    %v2005 = vpack.c.b16 %v1557, %v1549
    %v2006 = vpack.c.b16 %v1566, %v1558
    %v2007 = vpack.c.b16 %v1567, %v1559
    %v2008 = vpack.c.b16 %v1568, %v1560
    %v2009 = vpack.c.b16 %v1569, %v1561
    %v2010 = vpack.c.b16 %v1570, %v1562
    %v2011 = vpack.c.b16 %v1571, %v1563
    %v2012 = vpack.c.b16 %v1572, %v1564
    %v2013 = vpack.c.b16 %v1573, %v1565
    %v2014 = vpack.c.b16 %v1582, %v1574
    %v2015 = vpack.c.b16 %v1583, %v1575
    %v2016 = vpack.c.b16 %v1584, %v1576
    %v2017 = vpack.c.b16 %v1585, %v1577
    %v2018 = vpack.c.b16 %v1586, %v1578
    %v2019 = vpack.c.b16 %v1587, %v1579
    %v2020 = vpack.c.b16 %v1588, %v1580
    %v2021 = vpack.c.b16 %v1589, %v1581
    %v2022 = vpack.c.b16 %v1598, %v1590
    %v2023 = vpack.c.b16 %v1599, %v1591
    %v2024 = vpack.c.b16 %v1600, %v1592
    %v2025 = vpack.c.b16 %v1601, %v1593
    %v2026 = vpack.c.b16 %v1602, %v1594
    %v2027 = vpack.c.b16 %v1603, %v1595
    %v2028 = vpack.c.b16 %v1604, %v1596
    %v2029 = vpack.c.b16 %v1605, %v1597
    %v2030 = vpack.c.b16 %v1614, %v1606
    %v2031 = vpack.c.b16 %v1615, %v1607
    %v2032 = vpack.c.b16 %v1616, %v1608
    %v2033 = vpack.c.b16 %v1617, %v1609
    %v2034 = vpack.c.b16 %v1618, %v1610
    %v2035 = vpack.c.b16 %v1619, %v1611
    %v2036 = vpack.c.b16 %v1620, %v1612
    %v2037 = vpack.c.b16 %v1621, %v1613
    %v2038 = vpack.c.b16 %v1630, %v1622
    %v2039 = vpack.c.b16 %v1631, %v1623
    %v2040 = vpack.c.b16 %v1632, %v1624
    %v2041 = vpack.c.b16 %v1633, %v1625
    %v2042 = vpack.c.b16 %v1634, %v1626
    %v2043 = vpack.c.b16 %v1635, %v1627
    %v2044 = vpack.c.b16 %v1636, %v1628
    %v2045 = vpack.c.b16 %v1637, %v1629
    %v2046 = vpack.c.b16 %v1646, %v1638
    %v2047 = vpack.c.b16 %v1647, %v1639
    %v2048 = vpack.c.b16 %v1648, %v1640
    %v2049 = vpack.c.b16 %v1649, %v1641
    %v2050 = vpack.c.b16 %v1650, %v1642
    %v2051 = vpack.c.b16 %v1651, %v1643
    %v2052 = vpack.c.b16 %v1652, %v1644
    %v2053 = vpack.c.b16 %v1653, %v1645
    %v2054 = vpack.c.b16 %v1662, %v1654
    %v2055 = vpack.c.b16 %v1663, %v1655
    %v2056 = vpack.c.b16 %v1664, %v1656
    %v2057 = vpack.c.b16 %v1665, %v1657
    %v2058 = vpack.c.b16 %v1666, %v1658
    %v2059 = vpack.c.b16 %v1667, %v1659
    %v2060 = vpack.c.b16 %v1668, %v1660
    %v2061 = vpack.c.b16 %v1669, %v1661
    %v2062 = vpack.c.b16 %v1678, %v1670
    %v2063 = vpack.c.b16 %v1679, %v1671
    %v2064 = vpack.c.b16 %v1680, %v1672
    %v2065 = vpack.c.b16 %v1681, %v1673
    %v2066 = vpack.c.b16 %v1682, %v1674
    %v2067 = vpack.c.b16 %v1683, %v1675
    %v2068 = vpack.c.b16 %v1684, %v1676
    %v2069 = vpack.c.b16 %v1685, %v1677
    %v2070 = vpack.c.b16 %v1694, %v1686
    %v2071 = vpack.c.b16 %v1695, %v1687
    %v2072 = vpack.c.b16 %v1696, %v1688
    %v2073 = vpack.c.b16 %v1697, %v1689
    %v2074 = vpack.c.b16 %v1698, %v1690
    %v2075 = vpack.c.b16 %v1699, %v1691
    %v2076 = vpack.c.b16 %v1700, %v1692
    %v2077 = vpack.c.b16 %v1701, %v1693
    %v2078 = vpack.c.b16 %v1710, %v1702
    %v2079 = vpack.c.b16 %v1711, %v1703
    %v2080 = vpack.c.b16 %v1712, %v1704
    %v2081 = vpack.c.b16 %v1713, %v1705
    %v2082 = vpack.c.b16 %v1714, %v1706
    %v2083 = vpack.c.b16 %v1715, %v1707
    %v2084 = vpack.c.b16 %v1716, %v1708
    %v2085 = vpack.c.b16 %v1717, %v1709
    %v2086 = vpack.c.b16 %v1726, %v1718
    %v2087 = vpack.c.b16 %v1727, %v1719
    %v2088 = vpack.c.b16 %v1728, %v1720
    %v2089 = vpack.c.b16 %v1729, %v1721
    %v2090 = vpack.c.b16 %v1730, %v1722
    %v2091 = vpack.c.b16 %v1731, %v1723
    %v2092 = vpack.c.b16 %v1732, %v1724
    %v2093 = vpack.c.b16 %v1733, %v1725
    %v2094 = vpack.c.b16 %v1742, %v1734
    %v2095 = vpack.c.b16 %v1743, %v1735
    %v2096 = vpack.c.b16 %v1744, %v1736
    %v2097 = vpack.c.b16 %v1745, %v1737
    %v2098 = vpack.c.b16 %v1746, %v1738
    %v2099 = vpack.c.b16 %v1747, %v1739
    %v2100 = vpack.c.b16 %v1748, %v1740
    %v2101 = vpack.c.b16 %v1749, %v1741
    %v2102 = vpack.c.b16 %v1758, %v1750
    %v2103 = vpack.c.b16 %v1759, %v1751
    %v2104 = vpack.c.b16 %v1760, %v1752
    %v2105 = vpack.c.b16 %v1761, %v1753
    %v2106 = vpack.c.b16 %v1762, %v1754
    %v2107 = vpack.c.b16 %v1763, %v1755
    %v2108 = vpack.c.b16 %v1764, %v1756
    %v2109 = vpack.c.b16 %v1765, %v1757
    %v2110 = vpack.c.b16 %v1774, %v1766
    %v2111 = vpack.c.b16 %v1775, %v1767
    %v2112 = vpack.c.b16 %v1776, %v1768
    %v2113 = vpack.c.b16 %v1777, %v1769
    %v2114 = vpack.c.b16 %v1778, %v1770
    %v2115 = vpack.c.b16 %v1779, %v1771
    %v2116 = vpack.c.b16 %v1780, %v1772
    %v2117 = vpack.c.b16 %v1781, %v1773
    %v2118 = vpack.c.b16 %v1790, %v1782
    %v2119 = vpack.c.b16 %v1791, %v1783
    %v2120 = vpack.c.b16 %v1792, %v1784
    %v2121 = vpack.c.b16 %v1793, %v1785
    %v2122 = vpack.c.b16 %v1794, %v1786
    %v2123 = vpack.c.b16 %v1795, %v1787
    %v2124 = vpack.c.b16 %v1796, %v1788
    %v2125 = vpack.c.b16 %v1797, %v1789
    %v2126 = vpack.c.b16 %v1806, %v1798
    %v2127 = vpack.c.b16 %v1807, %v1799
    %v2128 = vpack.c.b16 %v1808, %v1800
    %v2129 = vpack.c.b16 %v1809, %v1801
    %v2130 = vpack.c.b16 %v1810, %v1802
    %v2131 = vpack.c.b16 %v1811, %v1803
    %v2132 = vpack.c.b16 %v1812, %v1804
    %v2133 = vpack.c.b16 %v1813, %v1805
    %v2134 = vpack.c.b16 %v1822, %v1814
    %v2135 = vpack.c.b16 %v1823, %v1815
    %v2136 = vpack.c.b16 %v1824, %v1816
    %v2137 = vpack.c.b16 %v1825, %v1817
    %v2138 = vpack.c.b16 %v1826, %v1818
    %v2139 = vpack.c.b16 %v1827, %v1819
    %v2140 = vpack.c.b16 %v1828, %v1820
    %v2141 = vpack.c.b16 %v1829, %v1821
    %v2142 = vpack.c.b16 %v1838, %v1830
    %v2143 = vpack.c.b16 %v1839, %v1831
    %v2144 = vpack.c.b16 %v1840, %v1832
    %v2145 = vpack.c.b16 %v1841, %v1833
    %v2146 = vpack.c.b16 %v1842, %v1834
    %v2147 = vpack.c.b16 %v1843, %v1835
    %v2148 = vpack.c.b16 %v1844, %v1836
    %v2149 = vpack.c.b16 %v1845, %v1837
    %v2150 = vpack.c.b16 %v1854, %v1846
    %v2151 = vpack.c.b16 %v1855, %v1847
    %v2152 = vpack.c.b16 %v1856, %v1848
    %v2153 = vpack.c.b16 %v1857, %v1849
    %v2154 = vpack.c.b16 %v1858, %v1850
    %v2155 = vpack.c.b16 %v1859, %v1851
    %v2156 = vpack.c.b16 %v1860, %v1852
    %v2157 = vpack.c.b16 %v1861, %v1853
    %v2158 = vpack.c.b16 %v1870, %v1862
    %v2159 = vpack.c.b16 %v1871, %v1863
    %v2160 = vpack.c.b16 %v1872, %v1864
    %v2161 = vpack.c.b16 %v1873, %v1865
    %v2162 = vpack.c.b16 %v1874, %v1866
    %v2163 = vpack.c.b16 %v1875, %v1867
    %v2164 = vpack.c.b16 %v1876, %v1868
    %v2165 = vpack.c.b16 %v1877, %v1869
    %v2166 = vpack.c.b16 %v1886, %v1878
    %v2167 = vpack.c.b16 %v1887, %v1879
    %v2168 = vpack.c.b16 %v1888, %v1880
    %v2169 = vpack.c.b16 %v1889, %v1881
    %v2170 = vpack.c.b16 %v1890, %v1882
    %v2171 = vpack.c.b16 %v1891, %v1883
    %v2172 = vpack.c.b16 %v1892, %v1884
    %v2173 = vpack.c.b16 %v1893, %v1885
    %v2174 = vpack.c.b16 %v1902, %v1894
    %v2175 = vpack.c.b16 %v1903, %v1895
    %v2176 = vpack.c.b16 %v1904, %v1896
    %v2177 = vpack.c.b16 %v1905, %v1897
    %v2178 = vpack.c.b16 %v1906, %v1898
    %v2179 = vpack.c.b16 %v1907, %v1899
    %v2180 = vpack.c.b16 %v1908, %v1900
    %v2181 = vpack.c.b16 %v1909, %v1901
    %v2182 = vpack.c.b16 %v1918, %v1910
    %v2183 = vpack.c.b16 %v1919, %v1911
    %v2184 = vpack.c.b16 %v1920, %v1912
    %v2185 = vpack.c.b16 %v1921, %v1913
    %v2186 = vpack.c.b16 %v1922, %v1914
    %v2187 = vpack.c.b16 %v1923, %v1915
    %v2188 = vpack.c.b16 %v1924, %v1916
    %v2189 = vpack.c.b16 %v1925, %v1917
    %v2190 = vpack.c.b16 %v1934, %v1926
    %v2191 = vpack.c.b16 %v1935, %v1927
    %v2192 = vpack.c.b16 %v1936, %v1928
    %v2193 = vpack.c.b16 %v1937, %v1929
    %v2194 = vpack.c.b16 %v1938, %v1930
    %v2195 = vpack.c.b16 %v1939, %v1931
    %v2196 = vpack.c.b16 %v1940, %v1932
    %v2197 = vpack.c.b16 %v1941, %v1933
    %2454 = vmatpush.bf16.msra.mxu0 %v1998
    %2455 = vmatpush.bf16.msra.mxu0 %v1990
    %2456 = vmatpush.bf16.msra.mxu0 %v1982
    %2457 = vmatpush.bf16.msra.mxu0 %v1974
    %2458 = vmatpush.bf16.msra.mxu0 %v1966
    %2459 = vmatpush.bf16.msra.mxu0 %v1958
    %2460 = vmatpush.bf16.msra.mxu0 %v1950
    %2461 = vmatpush.bf16.msra.mxu0 %v1942
    %2462 = vmatmul.bf16.gmra.mxu0 %v896
    %v2463 = vpop.f32.mrf.mxu0
    %v2464 = vadd.f32 %v1158, %v2463
    %v2465 = vpop.f32.mrf.mxu0
    %2466 = vdwg.mxu0
    %2467 = vmatpush.bf16.msra.mxu0 %v2062
    %2468 = vmatpush.bf16.msra.mxu0 %v2054
    %2469 = vmatpush.bf16.msra.mxu0 %v2046
    %2470 = vmatpush.bf16.msra.mxu0 %v2038
    %2471 = vmatpush.bf16.msra.mxu0 %v2030
    %2472 = vmatpush.bf16.msra.mxu0 %v2022
    %2473 = vmatpush.bf16.msra.mxu0 %v2014
    %2474 = vmatpush.bf16.msra.mxu0 %v2006
    %2475 = vmatmul.bf16.gmra.mxu0 %v897
    %v2476 = vpop.f32.mrf.mxu0
    %v2477 = vadd.f32 %v2464, %v2476
    %v2478 = vpop.f32.mrf.mxu0
    %2479 = vdwg.mxu0
    %2480 = vmatpush.bf16.msra.mxu0 %v2126
    %2481 = vmatpush.bf16.msra.mxu0 %v2118
    %2482 = vmatpush.bf16.msra.mxu0 %v2110
    %2483 = vmatpush.bf16.msra.mxu0 %v2102
    %2484 = vmatpush.bf16.msra.mxu0 %v2094
    %2485 = vmatpush.bf16.msra.mxu0 %v2086
    %2486 = vmatpush.bf16.msra.mxu0 %v2078
    %2487 = vmatpush.bf16.msra.mxu0 %v2070
    %2488 = vmatmul.bf16.gmra.mxu0 %v898
    %v2489 = vpop.f32.mrf.mxu0
    %v2490 = vadd.f32 %v2477, %v2489
    %v2491 = vpop.f32.mrf.mxu0
    %2492 = vdwg.mxu0
    %2493 = vmatpush.bf16.msra.mxu0 %v2190
    %2494 = vmatpush.bf16.msra.mxu0 %v2182
    %2495 = vmatpush.bf16.msra.mxu0 %v2174
    %2496 = vmatpush.bf16.msra.mxu0 %v2166
    %2497 = vmatpush.bf16.msra.mxu0 %v2158
    %2498 = vmatpush.bf16.msra.mxu0 %v2150
    %2499 = vmatpush.bf16.msra.mxu0 %v2142
    %2500 = vmatpush.bf16.msra.mxu0 %v2134
    %2501 = vmatmul.bf16.gmra.mxu0 %v899
    %v2502 = vpop.f32.mrf.mxu0
    %v2503 = vadd.f32 %v2490, %v2502
    %v2504 = vpop.f32.mrf.mxu0
    %2505 = vdwg.mxu0
    %2506 = vmatpush.bf16.msra.mxu0 %v1999
    %2507 = vmatpush.bf16.msra.mxu0 %v1991
    %2508 = vmatpush.bf16.msra.mxu0 %v1983
    %2509 = vmatpush.bf16.msra.mxu0 %v1975
    %2510 = vmatpush.bf16.msra.mxu0 %v1967
    %2511 = vmatpush.bf16.msra.mxu0 %v1959
    %2512 = vmatpush.bf16.msra.mxu0 %v1951
    %2513 = vmatpush.bf16.msra.mxu0 %v1943
    %2514 = vmatmul.bf16.gmra.mxu0 %v896
    %v2515 = vpop.f32.mrf.mxu0
    %v2516 = vadd.f32 %v1159, %v2515
    %v2517 = vpop.f32.mrf.mxu0
    %2518 = vdwg.mxu0
    %2519 = vmatpush.bf16.msra.mxu0 %v2063
    %2520 = vmatpush.bf16.msra.mxu0 %v2055
    %2521 = vmatpush.bf16.msra.mxu0 %v2047
    %2522 = vmatpush.bf16.msra.mxu0 %v2039
    %2523 = vmatpush.bf16.msra.mxu0 %v2031
    %2524 = vmatpush.bf16.msra.mxu0 %v2023
    %2525 = vmatpush.bf16.msra.mxu0 %v2015
    %2526 = vmatpush.bf16.msra.mxu0 %v2007
    %2527 = vmatmul.bf16.gmra.mxu0 %v897
    %v2528 = vpop.f32.mrf.mxu0
    %v2529 = vadd.f32 %v2516, %v2528
    %v2530 = vpop.f32.mrf.mxu0
    %2531 = vdwg.mxu0
    %2532 = vmatpush.bf16.msra.mxu0 %v2127
    %2533 = vmatpush.bf16.msra.mxu0 %v2119
    %2534 = vmatpush.bf16.msra.mxu0 %v2111
    %2535 = vmatpush.bf16.msra.mxu0 %v2103
    %2536 = vmatpush.bf16.msra.mxu0 %v2095
    %2537 = vmatpush.bf16.msra.mxu0 %v2087
    %2538 = vmatpush.bf16.msra.mxu0 %v2079
    %2539 = vmatpush.bf16.msra.mxu0 %v2071
    %2540 = vmatmul.bf16.gmra.mxu0 %v898
    %v2541 = vpop.f32.mrf.mxu0
    %v2542 = vadd.f32 %v2529, %v2541
    %v2543 = vpop.f32.mrf.mxu0
    %2544 = vdwg.mxu0
    %2545 = vmatpush.bf16.msra.mxu0 %v2191
    %2546 = vmatpush.bf16.msra.mxu0 %v2183
    %2547 = vmatpush.bf16.msra.mxu0 %v2175
    %2548 = vmatpush.bf16.msra.mxu0 %v2167
    %2549 = vmatpush.bf16.msra.mxu0 %v2159
    %2550 = vmatpush.bf16.msra.mxu0 %v2151
    %2551 = vmatpush.bf16.msra.mxu0 %v2143
    %2552 = vmatpush.bf16.msra.mxu0 %v2135
    %2553 = vmatmul.bf16.gmra.mxu0 %v899
    %v2554 = vpop.f32.mrf.mxu0
    %v2555 = vadd.f32 %v2542, %v2554
    %v2556 = vpop.f32.mrf.mxu0
    %2557 = vdwg.mxu0
    %2558 = vmatpush.bf16.msra.mxu0 %v2000
    %2559 = vmatpush.bf16.msra.mxu0 %v1992
    %2560 = vmatpush.bf16.msra.mxu0 %v1984
    %2561 = vmatpush.bf16.msra.mxu0 %v1976
    %2562 = vmatpush.bf16.msra.mxu0 %v1968
    %2563 = vmatpush.bf16.msra.mxu0 %v1960
    %2564 = vmatpush.bf16.msra.mxu0 %v1952
    %2565 = vmatpush.bf16.msra.mxu0 %v1944
    %2566 = vmatmul.bf16.gmra.mxu0 %v896
    %v2567 = vpop.f32.mrf.mxu0
    %v2568 = vadd.f32 %v1160, %v2567
    %v2569 = vpop.f32.mrf.mxu0
    %2570 = vdwg.mxu0
    %2571 = vmatpush.bf16.msra.mxu0 %v2064
    %2572 = vmatpush.bf16.msra.mxu0 %v2056
    %2573 = vmatpush.bf16.msra.mxu0 %v2048
    %2574 = vmatpush.bf16.msra.mxu0 %v2040
    %2575 = vmatpush.bf16.msra.mxu0 %v2032
    %2576 = vmatpush.bf16.msra.mxu0 %v2024
    %2577 = vmatpush.bf16.msra.mxu0 %v2016
    %2578 = vmatpush.bf16.msra.mxu0 %v2008
    %2579 = vmatmul.bf16.gmra.mxu0 %v897
    %v2580 = vpop.f32.mrf.mxu0
    %v2581 = vadd.f32 %v2568, %v2580
    %v2582 = vpop.f32.mrf.mxu0
    %2583 = vdwg.mxu0
    %2584 = vmatpush.bf16.msra.mxu0 %v2128
    %2585 = vmatpush.bf16.msra.mxu0 %v2120
    %2586 = vmatpush.bf16.msra.mxu0 %v2112
    %2587 = vmatpush.bf16.msra.mxu0 %v2104
    %2588 = vmatpush.bf16.msra.mxu0 %v2096
    %2589 = vmatpush.bf16.msra.mxu0 %v2088
    %2590 = vmatpush.bf16.msra.mxu0 %v2080
    %2591 = vmatpush.bf16.msra.mxu0 %v2072
    %2592 = vmatmul.bf16.gmra.mxu0 %v898
    %v2593 = vpop.f32.mrf.mxu0
    %v2594 = vadd.f32 %v2581, %v2593
    %v2595 = vpop.f32.mrf.mxu0
    %2596 = vdwg.mxu0
    %2597 = vmatpush.bf16.msra.mxu0 %v2192
    %2598 = vmatpush.bf16.msra.mxu0 %v2184
    %2599 = vmatpush.bf16.msra.mxu0 %v2176
    %2600 = vmatpush.bf16.msra.mxu0 %v2168
    %2601 = vmatpush.bf16.msra.mxu0 %v2160
    %2602 = vmatpush.bf16.msra.mxu0 %v2152
    %2603 = vmatpush.bf16.msra.mxu0 %v2144
    %2604 = vmatpush.bf16.msra.mxu0 %v2136
    %2605 = vmatmul.bf16.gmra.mxu0 %v899
    %v2606 = vpop.f32.mrf.mxu0
    %v2607 = vadd.f32 %v2594, %v2606
    %v2608 = vpop.f32.mrf.mxu0
    %2609 = vdwg.mxu0
    %2610 = vmatpush.bf16.msra.mxu0 %v2001
    %2611 = vmatpush.bf16.msra.mxu0 %v1993
    %2612 = vmatpush.bf16.msra.mxu0 %v1985
    %2613 = vmatpush.bf16.msra.mxu0 %v1977
    %2614 = vmatpush.bf16.msra.mxu0 %v1969
    %2615 = vmatpush.bf16.msra.mxu0 %v1961
    %2616 = vmatpush.bf16.msra.mxu0 %v1953
    %2617 = vmatpush.bf16.msra.mxu0 %v1945
    %2618 = vmatmul.bf16.gmra.mxu0 %v896
    %v2619 = vpop.f32.mrf.mxu0
    %v2620 = vadd.f32 %v1161, %v2619
    %v2621 = vpop.f32.mrf.mxu0
    %2622 = vdwg.mxu0
    %2623 = vmatpush.bf16.msra.mxu0 %v2065
    %2624 = vmatpush.bf16.msra.mxu0 %v2057
    %2625 = vmatpush.bf16.msra.mxu0 %v2049
    %2626 = vmatpush.bf16.msra.mxu0 %v2041
    %2627 = vmatpush.bf16.msra.mxu0 %v2033
    %2628 = vmatpush.bf16.msra.mxu0 %v2025
    %2629 = vmatpush.bf16.msra.mxu0 %v2017
    %2630 = vmatpush.bf16.msra.mxu0 %v2009
    %2631 = vmatmul.bf16.gmra.mxu0 %v897
    %v2632 = vpop.f32.mrf.mxu0
    %v2633 = vadd.f32 %v2620, %v2632
    %v2634 = vpop.f32.mrf.mxu0
    %2635 = vdwg.mxu0
    %2636 = vmatpush.bf16.msra.mxu0 %v2129
    %2637 = vmatpush.bf16.msra.mxu0 %v2121
    %2638 = vmatpush.bf16.msra.mxu0 %v2113
    %2639 = vmatpush.bf16.msra.mxu0 %v2105
    %2640 = vmatpush.bf16.msra.mxu0 %v2097
    %2641 = vmatpush.bf16.msra.mxu0 %v2089
    %2642 = vmatpush.bf16.msra.mxu0 %v2081
    %2643 = vmatpush.bf16.msra.mxu0 %v2073
    %2644 = vmatmul.bf16.gmra.mxu0 %v898
    %v2645 = vpop.f32.mrf.mxu0
    %v2646 = vadd.f32 %v2633, %v2645
    %v2647 = vpop.f32.mrf.mxu0
    %2648 = vdwg.mxu0
    %2649 = vmatpush.bf16.msra.mxu0 %v2193
    %2650 = vmatpush.bf16.msra.mxu0 %v2185
    %2651 = vmatpush.bf16.msra.mxu0 %v2177
    %2652 = vmatpush.bf16.msra.mxu0 %v2169
    %2653 = vmatpush.bf16.msra.mxu0 %v2161
    %2654 = vmatpush.bf16.msra.mxu0 %v2153
    %2655 = vmatpush.bf16.msra.mxu0 %v2145
    %2656 = vmatpush.bf16.msra.mxu0 %v2137
    %2657 = vmatmul.bf16.gmra.mxu0 %v899
    %v2658 = vpop.f32.mrf.mxu0
    %v2659 = vadd.f32 %v2646, %v2658
    %v2660 = vpop.f32.mrf.mxu0
    %2661 = vdwg.mxu0
    %2662 = vmatpush.bf16.msra.mxu0 %v2002
    %2663 = vmatpush.bf16.msra.mxu0 %v1994
    %2664 = vmatpush.bf16.msra.mxu0 %v1986
    %2665 = vmatpush.bf16.msra.mxu0 %v1978
    %2666 = vmatpush.bf16.msra.mxu0 %v1970
    %2667 = vmatpush.bf16.msra.mxu0 %v1962
    %2668 = vmatpush.bf16.msra.mxu0 %v1954
    %2669 = vmatpush.bf16.msra.mxu0 %v1946
    %2670 = vmatmul.bf16.gmra.mxu0 %v896
    %v2671 = vpop.f32.mrf.mxu0
    %v2672 = vadd.f32 %v1162, %v2671
    %v2673 = vpop.f32.mrf.mxu0
    %2674 = vdwg.mxu0
    %2675 = vmatpush.bf16.msra.mxu0 %v2066
    %2676 = vmatpush.bf16.msra.mxu0 %v2058
    %2677 = vmatpush.bf16.msra.mxu0 %v2050
    %2678 = vmatpush.bf16.msra.mxu0 %v2042
    %2679 = vmatpush.bf16.msra.mxu0 %v2034
    %2680 = vmatpush.bf16.msra.mxu0 %v2026
    %2681 = vmatpush.bf16.msra.mxu0 %v2018
    %2682 = vmatpush.bf16.msra.mxu0 %v2010
    %2683 = vmatmul.bf16.gmra.mxu0 %v897
    %v2684 = vpop.f32.mrf.mxu0
    %v2685 = vadd.f32 %v2672, %v2684
    %v2686 = vpop.f32.mrf.mxu0
    %2687 = vdwg.mxu0
    %2688 = vmatpush.bf16.msra.mxu0 %v2130
    %2689 = vmatpush.bf16.msra.mxu0 %v2122
    %2690 = vmatpush.bf16.msra.mxu0 %v2114
    %2691 = vmatpush.bf16.msra.mxu0 %v2106
    %2692 = vmatpush.bf16.msra.mxu0 %v2098
    %2693 = vmatpush.bf16.msra.mxu0 %v2090
    %2694 = vmatpush.bf16.msra.mxu0 %v2082
    %2695 = vmatpush.bf16.msra.mxu0 %v2074
    %2696 = vmatmul.bf16.gmra.mxu0 %v898
    %v2697 = vpop.f32.mrf.mxu0
    %v2698 = vadd.f32 %v2685, %v2697
    %v2699 = vpop.f32.mrf.mxu0
    %2700 = vdwg.mxu0
    %2701 = vmatpush.bf16.msra.mxu0 %v2194
    %2702 = vmatpush.bf16.msra.mxu0 %v2186
    %2703 = vmatpush.bf16.msra.mxu0 %v2178
    %2704 = vmatpush.bf16.msra.mxu0 %v2170
    %2705 = vmatpush.bf16.msra.mxu0 %v2162
    %2706 = vmatpush.bf16.msra.mxu0 %v2154
    %2707 = vmatpush.bf16.msra.mxu0 %v2146
    %2708 = vmatpush.bf16.msra.mxu0 %v2138
    %2709 = vmatmul.bf16.gmra.mxu0 %v899
    %v2710 = vpop.f32.mrf.mxu0
    %v2711 = vadd.f32 %v2698, %v2710
    %v2712 = vpop.f32.mrf.mxu0
    %2713 = vdwg.mxu0
    %2714 = vmatpush.bf16.msra.mxu0 %v2003
    %2715 = vmatpush.bf16.msra.mxu0 %v1995
    %2716 = vmatpush.bf16.msra.mxu0 %v1987
    %2717 = vmatpush.bf16.msra.mxu0 %v1979
    %2718 = vmatpush.bf16.msra.mxu0 %v1971
    %2719 = vmatpush.bf16.msra.mxu0 %v1963
    %2720 = vmatpush.bf16.msra.mxu0 %v1955
    %2721 = vmatpush.bf16.msra.mxu0 %v1947
    %2722 = vmatmul.bf16.gmra.mxu0 %v896
    %v2723 = vpop.f32.mrf.mxu0
    %v2724 = vadd.f32 %v1163, %v2723
    %v2725 = vpop.f32.mrf.mxu0
    %2726 = vdwg.mxu0
    %2727 = vmatpush.bf16.msra.mxu0 %v2067
    %2728 = vmatpush.bf16.msra.mxu0 %v2059
    %2729 = vmatpush.bf16.msra.mxu0 %v2051
    %2730 = vmatpush.bf16.msra.mxu0 %v2043
    %2731 = vmatpush.bf16.msra.mxu0 %v2035
    %2732 = vmatpush.bf16.msra.mxu0 %v2027
    %2733 = vmatpush.bf16.msra.mxu0 %v2019
    %2734 = vmatpush.bf16.msra.mxu0 %v2011
    %2735 = vmatmul.bf16.gmra.mxu0 %v897
    %v2736 = vpop.f32.mrf.mxu0
    %v2737 = vadd.f32 %v2724, %v2736
    %v2738 = vpop.f32.mrf.mxu0
    %2739 = vdwg.mxu0
    %2740 = vmatpush.bf16.msra.mxu0 %v2131
    %2741 = vmatpush.bf16.msra.mxu0 %v2123
    %2742 = vmatpush.bf16.msra.mxu0 %v2115
    %2743 = vmatpush.bf16.msra.mxu0 %v2107
    %2744 = vmatpush.bf16.msra.mxu0 %v2099
    %2745 = vmatpush.bf16.msra.mxu0 %v2091
    %2746 = vmatpush.bf16.msra.mxu0 %v2083
    %2747 = vmatpush.bf16.msra.mxu0 %v2075
    %2748 = vmatmul.bf16.gmra.mxu0 %v898
    %v2749 = vpop.f32.mrf.mxu0
    %v2750 = vadd.f32 %v2737, %v2749
    %v2751 = vpop.f32.mrf.mxu0
    %2752 = vdwg.mxu0
    %2753 = vmatpush.bf16.msra.mxu0 %v2195
    %2754 = vmatpush.bf16.msra.mxu0 %v2187
    %2755 = vmatpush.bf16.msra.mxu0 %v2179
    %2756 = vmatpush.bf16.msra.mxu0 %v2171
    %2757 = vmatpush.bf16.msra.mxu0 %v2163
    %2758 = vmatpush.bf16.msra.mxu0 %v2155
    %2759 = vmatpush.bf16.msra.mxu0 %v2147
    %2760 = vmatpush.bf16.msra.mxu0 %v2139
    %2761 = vmatmul.bf16.gmra.mxu0 %v899
    %v2762 = vpop.f32.mrf.mxu0
    %v2763 = vadd.f32 %v2750, %v2762
    %v2764 = vpop.f32.mrf.mxu0
    %2765 = vdwg.mxu0
    %2766 = vmatpush.bf16.msra.mxu0 %v2004
    %2767 = vmatpush.bf16.msra.mxu0 %v1996
    %2768 = vmatpush.bf16.msra.mxu0 %v1988
    %2769 = vmatpush.bf16.msra.mxu0 %v1980
    %2770 = vmatpush.bf16.msra.mxu0 %v1972
    %2771 = vmatpush.bf16.msra.mxu0 %v1964
    %2772 = vmatpush.bf16.msra.mxu0 %v1956
    %2773 = vmatpush.bf16.msra.mxu0 %v1948
    %2774 = vmatmul.bf16.gmra.mxu0 %v896
    %v2775 = vpop.f32.mrf.mxu0
    %v2776 = vadd.f32 %v1164, %v2775
    %v2777 = vpop.f32.mrf.mxu0
    %2778 = vdwg.mxu0
    %2779 = vmatpush.bf16.msra.mxu0 %v2068
    %2780 = vmatpush.bf16.msra.mxu0 %v2060
    %2781 = vmatpush.bf16.msra.mxu0 %v2052
    %2782 = vmatpush.bf16.msra.mxu0 %v2044
    %2783 = vmatpush.bf16.msra.mxu0 %v2036
    %2784 = vmatpush.bf16.msra.mxu0 %v2028
    %2785 = vmatpush.bf16.msra.mxu0 %v2020
    %2786 = vmatpush.bf16.msra.mxu0 %v2012
    %2787 = vmatmul.bf16.gmra.mxu0 %v897
    %v2788 = vpop.f32.mrf.mxu0
    %v2789 = vadd.f32 %v2776, %v2788
    %v2790 = vpop.f32.mrf.mxu0
    %2791 = vdwg.mxu0
    %2792 = vmatpush.bf16.msra.mxu0 %v2132
    %2793 = vmatpush.bf16.msra.mxu0 %v2124
    %2794 = vmatpush.bf16.msra.mxu0 %v2116
    %2795 = vmatpush.bf16.msra.mxu0 %v2108
    %2796 = vmatpush.bf16.msra.mxu0 %v2100
    %2797 = vmatpush.bf16.msra.mxu0 %v2092
    %2798 = vmatpush.bf16.msra.mxu0 %v2084
    %2799 = vmatpush.bf16.msra.mxu0 %v2076
    %2800 = vmatmul.bf16.gmra.mxu0 %v898
    %v2801 = vpop.f32.mrf.mxu0
    %v2802 = vadd.f32 %v2789, %v2801
    %v2803 = vpop.f32.mrf.mxu0
    %2804 = vdwg.mxu0
    %2805 = vmatpush.bf16.msra.mxu0 %v2196
    %2806 = vmatpush.bf16.msra.mxu0 %v2188
    %2807 = vmatpush.bf16.msra.mxu0 %v2180
    %2808 = vmatpush.bf16.msra.mxu0 %v2172
    %2809 = vmatpush.bf16.msra.mxu0 %v2164
    %2810 = vmatpush.bf16.msra.mxu0 %v2156
    %2811 = vmatpush.bf16.msra.mxu0 %v2148
    %2812 = vmatpush.bf16.msra.mxu0 %v2140
    %2813 = vmatmul.bf16.gmra.mxu0 %v899
    %v2814 = vpop.f32.mrf.mxu0
    %v2815 = vadd.f32 %v2802, %v2814
    %v2816 = vpop.f32.mrf.mxu0
    %2817 = vdwg.mxu0
    %2818 = vmatpush.bf16.msra.mxu0 %v2005
    %2819 = vmatpush.bf16.msra.mxu0 %v1997
    %2820 = vmatpush.bf16.msra.mxu0 %v1989
    %2821 = vmatpush.bf16.msra.mxu0 %v1981
    %2822 = vmatpush.bf16.msra.mxu0 %v1973
    %2823 = vmatpush.bf16.msra.mxu0 %v1965
    %2824 = vmatpush.bf16.msra.mxu0 %v1957
    %2825 = vmatpush.bf16.msra.mxu0 %v1949
    %2826 = vmatmul.bf16.gmra.mxu0 %v896
    %v2827 = vpop.f32.mrf.mxu0
    %v2828 = vadd.f32 %v1165, %v2827
    %v2829 = vpop.f32.mrf.mxu0
    %2830 = vdwg.mxu0
    %2831 = vmatpush.bf16.msra.mxu0 %v2069
    %2832 = vmatpush.bf16.msra.mxu0 %v2061
    %2833 = vmatpush.bf16.msra.mxu0 %v2053
    %2834 = vmatpush.bf16.msra.mxu0 %v2045
    %2835 = vmatpush.bf16.msra.mxu0 %v2037
    %2836 = vmatpush.bf16.msra.mxu0 %v2029
    %2837 = vmatpush.bf16.msra.mxu0 %v2021
    %2838 = vmatpush.bf16.msra.mxu0 %v2013
    %2839 = vmatmul.bf16.gmra.mxu0 %v897
    %v2840 = vpop.f32.mrf.mxu0
    %v2841 = vadd.f32 %v2828, %v2840
    %v2842 = vpop.f32.mrf.mxu0
    %2843 = vdwg.mxu0
    %2844 = vmatpush.bf16.msra.mxu0 %v2133
    %2845 = vmatpush.bf16.msra.mxu0 %v2125
    %2846 = vmatpush.bf16.msra.mxu0 %v2117
    %2847 = vmatpush.bf16.msra.mxu0 %v2109
    %2848 = vmatpush.bf16.msra.mxu0 %v2101
    %2849 = vmatpush.bf16.msra.mxu0 %v2093
    %2850 = vmatpush.bf16.msra.mxu0 %v2085
    %2851 = vmatpush.bf16.msra.mxu0 %v2077
    %2852 = vmatmul.bf16.gmra.mxu0 %v898
    %v2853 = vpop.f32.mrf.mxu0
    %v2854 = vadd.f32 %v2841, %v2853
    %v2855 = vpop.f32.mrf.mxu0
    %2856 = vdwg.mxu0
    %2857 = vmatpush.bf16.msra.mxu0 %v2197
    %2858 = vmatpush.bf16.msra.mxu0 %v2189
    %2859 = vmatpush.bf16.msra.mxu0 %v2181
    %2860 = vmatpush.bf16.msra.mxu0 %v2173
    %2861 = vmatpush.bf16.msra.mxu0 %v2165
    %2862 = vmatpush.bf16.msra.mxu0 %v2157
    %2863 = vmatpush.bf16.msra.mxu0 %v2149
    %2864 = vmatpush.bf16.msra.mxu0 %v2141
    %2865 = vmatmul.bf16.gmra.mxu0 %v899
    %v2866 = vpop.f32.mrf.mxu0
    %v2867 = vadd.f32 %v2854, %v2866
    %v2868 = vpop.f32.mrf.mxu0
    %2869 = vdwg.mxu0
    %v2870 = vpack.c.bf16 %v2555, %v2503
    %v2871 = vpack.c.bf16 %v2659, %v2607
    %v2872 = vpack.c.bf16 %v2763, %v2711
    %v2873 = vpack.c.bf16 %v2867, %v2815
    %v2874 = vunpack.c.l.bf16 %v2870
    %v2875 = vunpack.c.h.bf16 %v2870
    %v2876 = vunpack.c.l.bf16 %v2871
    %v2877 = vunpack.c.h.bf16 %v2871
    %v2878 = vunpack.c.l.bf16 %v2872
    %v2879 = vunpack.c.h.bf16 %v2872
    %v2880 = vunpack.c.l.bf16 %v2873
    %v2881 = vunpack.c.h.bf16 %v2873
    %v2882 = vmul.f32 %v2874, 0.20019531
    %v2883 = vmul.f32 %v2875, 0.20019531
    %v2884 = vmul.f32 %v2876, 0.20019531
    %v2885 = vmul.f32 %v2877, 0.20019531
    %v2886 = vmul.f32 %v2878, 0.20019531
    %v2887 = vmul.f32 %v2879, 0.20019531
    %v2888 = vmul.f32 %v2880, 0.20019531
    %v2889 = vmul.f32 %v2881, 0.20019531
    %v2890 = vpack.c.bf16 %v2883, %v2882
    %v2891 = vpack.c.bf16 %v2885, %v2884
    %v2892 = vpack.c.bf16 %v2887, %v2886
    %v2893 = vpack.c.bf16 %v2889, %v2888
    %v2894 = vunpack.c.l.bf16 %v2890
    %v2895 = vunpack.c.h.bf16 %v2890
    %v2896 = vunpack.c.l.bf16 %v2891
    %v2897 = vunpack.c.h.bf16 %v2891
    %v2898 = vunpack.c.l.bf16 %v2892
    %v2899 = vunpack.c.h.bf16 %v2892
    %v2900 = vunpack.c.l.bf16 %v2893
    %v2901 = vunpack.c.h.bf16 %v2893
    %v2902 = vmax.f32 %v2874, %v2894
    %v2903 = vmax.f32 %v2875, %v2895
    %v2904 = vmax.f32 %v2876, %v2896
    %v2905 = vmax.f32 %v2877, %v2897
    %v2906 = vmax.f32 %v2878, %v2898
    %v2907 = vmax.f32 %v2879, %v2899
    %v2908 = vmax.f32 %v2880, %v2900
    %v2909 = vmax.f32 %v2881, %v2901
    %v2910 = vpack.c.bf16 %v2902, %v2902
    %v2911 = vpack.c.bf16 %v2903, %v2903
    %v2912 = vpack.c.bf16 %v2904, %v2904
    %v2913 = vpack.c.bf16 %v2905, %v2905
    %v2914 = vpack.c.bf16 %v2906, %v2906
    %v2915 = vpack.c.bf16 %v2907, %v2907
    %v2916 = vpack.c.bf16 %v2908, %v2908
    %v2917 = vpack.c.bf16 %v2909, %v2909
    %v2918 = vld [vmem:[#allocation7] sm:$0xff]
    %v2919 = vld [vmem:[#allocation7 + $0x8] sm:$0xff]
    %v2920 = vld [vmem:[#allocation7 + $0x10] sm:$0xff]
    %v2921 = vld [vmem:[#allocation7 + $0x18] sm:$0xff]
    %v2922 = vld [vmem:[#allocation7 + $0x20] sm:$0xff]
    %v2923 = vld [vmem:[#allocation7 + $0x28] sm:$0xff]
    %v2924 = vld [vmem:[#allocation7 + $0x30] sm:$0xff]
    %v2925 = vld [vmem:[#allocation7 + $0x38] sm:$0xff]
    %v2926 = vld [vmem:[#allocation7 + $0x40] sm:$0xff]
    %v2927 = vld [vmem:[#allocation7 + $0x48] sm:$0xff]
    %v2928 = vld [vmem:[#allocation7 + $0x50] sm:$0xff]
    %v2929 = vld [vmem:[#allocation7 + $0x58] sm:$0xff]
    %v2930 = vld [vmem:[#allocation7 + $0x60] sm:$0xff]
    %v2931 = vld [vmem:[#allocation7 + $0x68] sm:$0xff]
    %v2932 = vld [vmem:[#allocation7 + $0x70] sm:$0xff]
    %v2933 = vld [vmem:[#allocation7 + $0x78] sm:$0xff]
    %v2934 = vld [vmem:[#allocation7 + $0x80] sm:$0xff]
    %v2935 = vld [vmem:[#allocation7 + $0x88] sm:$0xff]
    %v2936 = vld [vmem:[#allocation7 + $0x90] sm:$0xff]
    %v2937 = vld [vmem:[#allocation7 + $0x98] sm:$0xff]
    %v2938 = vld [vmem:[#allocation7 + $0xa0] sm:$0xff]
    %v2939 = vld [vmem:[#allocation7 + $0xa8] sm:$0xff]
    %v2940 = vld [vmem:[#allocation7 + $0xb0] sm:$0xff]
    %v2941 = vld [vmem:[#allocation7 + $0xb8] sm:$0xff]
    %v2942 = vld [vmem:[#allocation7 + $0xc0] sm:$0xff]
    %v2943 = vld [vmem:[#allocation7 + $0xc8] sm:$0xff]
    %v2944 = vld [vmem:[#allocation7 + $0xd0] sm:$0xff]
    %v2945 = vld [vmem:[#allocation7 + $0xd8] sm:$0xff]
    %v2946 = vld [vmem:[#allocation7 + $0xe0] sm:$0xff]
    %v2947 = vld [vmem:[#allocation7 + $0xe8] sm:$0xff]
    %v2948 = vld [vmem:[#allocation7 + $0xf0] sm:$0xff]
    %v2949 = vld [vmem:[#allocation7 + $0xf8] sm:$0xff]
    %v2950 = vld [vmem:[#allocation7 + $0x100] sm:$0xff]
    %v2951 = vld [vmem:[#allocation7 + $0x108] sm:$0xff]
    %v2952 = vld [vmem:[#allocation7 + $0x110] sm:$0xff]
    %v2953 = vld [vmem:[#allocation7 + $0x118] sm:$0xff]
    %v2954 = vld [vmem:[#allocation7 + $0x120] sm:$0xff]
    %v2955 = vld [vmem:[#allocation7 + $0x128] sm:$0xff]
    %v2956 = vld [vmem:[#allocation7 + $0x130] sm:$0xff]
    %v2957 = vld [vmem:[#allocation7 + $0x138] sm:$0xff]
    %v2958 = vld [vmem:[#allocation7 + $0x140] sm:$0xff]
    %v2959 = vld [vmem:[#allocation7 + $0x148] sm:$0xff]
    %v2960 = vld [vmem:[#allocation7 + $0x150] sm:$0xff]
    %v2961 = vld [vmem:[#allocation7 + $0x158] sm:$0xff]
    %v2962 = vld [vmem:[#allocation7 + $0x160] sm:$0xff]
    %v2963 = vld [vmem:[#allocation7 + $0x168] sm:$0xff]
    %v2964 = vld [vmem:[#allocation7 + $0x170] sm:$0xff]
    %v2965 = vld [vmem:[#allocation7 + $0x178] sm:$0xff]
    %v2966 = vld [vmem:[#allocation7 + $0x180] sm:$0xff]
    %v2967 = vld [vmem:[#allocation7 + $0x188] sm:$0xff]
    %v2968 = vld [vmem:[#allocation7 + $0x190] sm:$0xff]
    %v2969 = vld [vmem:[#allocation7 + $0x198] sm:$0xff]
    %v2970 = vld [vmem:[#allocation7 + $0x1a0] sm:$0xff]
    %v2971 = vld [vmem:[#allocation7 + $0x1a8] sm:$0xff]
    %v2972 = vld [vmem:[#allocation7 + $0x1b0] sm:$0xff]
    %v2973 = vld [vmem:[#allocation7 + $0x1b8] sm:$0xff]
    %v2974 = vld [vmem:[#allocation7 + $0x1c0] sm:$0xff]
    %v2975 = vld [vmem:[#allocation7 + $0x1c8] sm:$0xff]
    %v2976 = vld [vmem:[#allocation7 + $0x1d0] sm:$0xff]
    %v2977 = vld [vmem:[#allocation7 + $0x1d8] sm:$0xff]
    %v2978 = vld [vmem:[#allocation7 + $0x1e0] sm:$0xff]
    %v2979 = vld [vmem:[#allocation7 + $0x1e8] sm:$0xff]
    %v2980 = vld [vmem:[#allocation7 + $0x1f0] sm:$0xff]
    %v2981 = vld [vmem:[#allocation7 + $0x1f8] sm:$0xff]
    %v2982 = vld [vmem:[#allocation7 + $0x200] sm:$0xff]
    %v2983 = vld [vmem:[#allocation7 + $0x208] sm:$0xff]
    %v2984 = vld [vmem:[#allocation7 + $0x210] sm:$0xff]
    %v2985 = vld [vmem:[#allocation7 + $0x218] sm:$0xff]
    %v2986 = vld [vmem:[#allocation7 + $0x220] sm:$0xff]
    %v2987 = vld [vmem:[#allocation7 + $0x228] sm:$0xff]
    %v2988 = vld [vmem:[#allocation7 + $0x230] sm:$0xff]
    %v2989 = vld [vmem:[#allocation7 + $0x238] sm:$0xff]
    %v2990 = vld [vmem:[#allocation7 + $0x240] sm:$0xff]
    %v2991 = vld [vmem:[#allocation7 + $0x248] sm:$0xff]
    %v2992 = vld [vmem:[#allocation7 + $0x250] sm:$0xff]
    %v2993 = vld [vmem:[#allocation7 + $0x258] sm:$0xff]
    %v2994 = vld [vmem:[#allocation7 + $0x260] sm:$0xff]
    %v2995 = vld [vmem:[#allocation7 + $0x268] sm:$0xff]
    %v2996 = vld [vmem:[#allocation7 + $0x270] sm:$0xff]
    %v2997 = vld [vmem:[#allocation7 + $0x278] sm:$0xff]
    %v2998 = vld [vmem:[#allocation7 + $0x280] sm:$0xff]
    %v2999 = vld [vmem:[#allocation7 + $0x288] sm:$0xff]
    %v3000 = vld [vmem:[#allocation7 + $0x290] sm:$0xff]
    %v3001 = vld [vmem:[#allocation7 + $0x298] sm:$0xff]
    %v3002 = vld [vmem:[#allocation7 + $0x2a0] sm:$0xff]
    %v3003 = vld [vmem:[#allocation7 + $0x2a8] sm:$0xff]
    %v3004 = vld [vmem:[#allocation7 + $0x2b0] sm:$0xff]
    %v3005 = vld [vmem:[#allocation7 + $0x2b8] sm:$0xff]
    %v3006 = vld [vmem:[#allocation7 + $0x2c0] sm:$0xff]
    %v3007 = vld [vmem:[#allocation7 + $0x2c8] sm:$0xff]
    %v3008 = vld [vmem:[#allocation7 + $0x2d0] sm:$0xff]
    %v3009 = vld [vmem:[#allocation7 + $0x2d8] sm:$0xff]
    %v3010 = vld [vmem:[#allocation7 + $0x2e0] sm:$0xff]
    %v3011 = vld [vmem:[#allocation7 + $0x2e8] sm:$0xff]
    %v3012 = vld [vmem:[#allocation7 + $0x2f0] sm:$0xff]
    %v3013 = vld [vmem:[#allocation7 + $0x2f8] sm:$0xff]
    %v3014 = vld [vmem:[#allocation7 + $0x300] sm:$0xff]
    %v3015 = vld [vmem:[#allocation7 + $0x308] sm:$0xff]
    %v3016 = vld [vmem:[#allocation7 + $0x310] sm:$0xff]
    %v3017 = vld [vmem:[#allocation7 + $0x318] sm:$0xff]
    %v3018 = vld [vmem:[#allocation7 + $0x320] sm:$0xff]
    %v3019 = vld [vmem:[#allocation7 + $0x328] sm:$0xff]
    %v3020 = vld [vmem:[#allocation7 + $0x330] sm:$0xff]
    %v3021 = vld [vmem:[#allocation7 + $0x338] sm:$0xff]
    %v3022 = vld [vmem:[#allocation7 + $0x340] sm:$0xff]
    %v3023 = vld [vmem:[#allocation7 + $0x348] sm:$0xff]
    %v3024 = vld [vmem:[#allocation7 + $0x350] sm:$0xff]
    %v3025 = vld [vmem:[#allocation7 + $0x358] sm:$0xff]
    %v3026 = vld [vmem:[#allocation7 + $0x360] sm:$0xff]
    %v3027 = vld [vmem:[#allocation7 + $0x368] sm:$0xff]
    %v3028 = vld [vmem:[#allocation7 + $0x370] sm:$0xff]
    %v3029 = vld [vmem:[#allocation7 + $0x378] sm:$0xff]
    %v3030 = vld [vmem:[#allocation7 + $0x380] sm:$0xff]
    %v3031 = vld [vmem:[#allocation7 + $0x388] sm:$0xff]
    %v3032 = vld [vmem:[#allocation7 + $0x390] sm:$0xff]
    %v3033 = vld [vmem:[#allocation7 + $0x398] sm:$0xff]
    %v3034 = vld [vmem:[#allocation7 + $0x3a0] sm:$0xff]
    %v3035 = vld [vmem:[#allocation7 + $0x3a8] sm:$0xff]
    %v3036 = vld [vmem:[#allocation7 + $0x3b0] sm:$0xff]
    %v3037 = vld [vmem:[#allocation7 + $0x3b8] sm:$0xff]
    %v3038 = vld [vmem:[#allocation7 + $0x3c0] sm:$0xff]
    %v3039 = vld [vmem:[#allocation7 + $0x3c8] sm:$0xff]
    %v3040 = vld [vmem:[#allocation7 + $0x3d0] sm:$0xff]
    %v3041 = vld [vmem:[#allocation7 + $0x3d8] sm:$0xff]
    %v3042 = vld [vmem:[#allocation7 + $0x3e0] sm:$0xff]
    %v3043 = vld [vmem:[#allocation7 + $0x3e8] sm:$0xff]
    %v3044 = vld [vmem:[#allocation7 + $0x3f0] sm:$0xff]
    %v3045 = vld [vmem:[#allocation7 + $0x3f8] sm:$0xff]
    %v3046 = vld [vmem:[%s8] sm:$0x3]
    %v3048 = vperm.slane %v3046, 0
    %v3049 = vperm.slane %v3046, 1
    %v3180 = vunpack.c.l.b16 %v2918
    %v3181 = vunpack.c.h.b16 %v2918
    %v3182 = vunpack.c.l.b16 %v2919
    %v3183 = vunpack.c.h.b16 %v2919
    %v3184 = vunpack.c.l.b16 %v2920
    %v3185 = vunpack.c.h.b16 %v2920
    %v3186 = vunpack.c.l.b16 %v2921
    %v3187 = vunpack.c.h.b16 %v2921
    %v3188 = vunpack.c.l.b16 %v2922
    %v3189 = vunpack.c.h.b16 %v2922
    %v3190 = vunpack.c.l.b16 %v2923
    %v3191 = vunpack.c.h.b16 %v2923
    %v3192 = vunpack.c.l.b16 %v2924
    %v3193 = vunpack.c.h.b16 %v2924
    %v3194 = vunpack.c.l.b16 %v2925
    %v3195 = vunpack.c.h.b16 %v2925
    %v3196 = vunpack.c.l.b16 %v2926
    %v3197 = vunpack.c.h.b16 %v2926
    %v3198 = vunpack.c.l.b16 %v2927
    %v3199 = vunpack.c.h.b16 %v2927
    %v3200 = vunpack.c.l.b16 %v2928
    %v3201 = vunpack.c.h.b16 %v2928
    %v3202 = vunpack.c.l.b16 %v2929
    %v3203 = vunpack.c.h.b16 %v2929
    %v3204 = vunpack.c.l.b16 %v2930
    %v3205 = vunpack.c.h.b16 %v2930
    %v3206 = vunpack.c.l.b16 %v2931
    %v3207 = vunpack.c.h.b16 %v2931
    %v3208 = vunpack.c.l.b16 %v2932
    %v3209 = vunpack.c.h.b16 %v2932
    %v3210 = vunpack.c.l.b16 %v2933
    %v3211 = vunpack.c.h.b16 %v2933
    %v3212 = vunpack.c.l.b16 %v2934
    %v3213 = vunpack.c.h.b16 %v2934
    %v3214 = vunpack.c.l.b16 %v2935
    %v3215 = vunpack.c.h.b16 %v2935
    %v3216 = vunpack.c.l.b16 %v2936
    %v3217 = vunpack.c.h.b16 %v2936
    %v3218 = vunpack.c.l.b16 %v2937
    %v3219 = vunpack.c.h.b16 %v2937
    %v3220 = vunpack.c.l.b16 %v2938
    %v3221 = vunpack.c.h.b16 %v2938
    %v3222 = vunpack.c.l.b16 %v2939
    %v3223 = vunpack.c.h.b16 %v2939
    %v3224 = vunpack.c.l.b16 %v2940
    %v3225 = vunpack.c.h.b16 %v2940
    %v3226 = vunpack.c.l.b16 %v2941
    %v3227 = vunpack.c.h.b16 %v2941
    %v3228 = vunpack.c.l.b16 %v2942
    %v3229 = vunpack.c.h.b16 %v2942
    %v3230 = vunpack.c.l.b16 %v2943
    %v3231 = vunpack.c.h.b16 %v2943
    %v3232 = vunpack.c.l.b16 %v2944
    %v3233 = vunpack.c.h.b16 %v2944
    %v3234 = vunpack.c.l.b16 %v2945
    %v3235 = vunpack.c.h.b16 %v2945
    %v3236 = vunpack.c.l.b16 %v2946
    %v3237 = vunpack.c.h.b16 %v2946
    %v3238 = vunpack.c.l.b16 %v2947
    %v3239 = vunpack.c.h.b16 %v2947
    %v3240 = vunpack.c.l.b16 %v2948
    %v3241 = vunpack.c.h.b16 %v2948
    %v3242 = vunpack.c.l.b16 %v2949
    %v3243 = vunpack.c.h.b16 %v2949
    %v3244 = vunpack.c.l.b16 %v2950
    %v3245 = vunpack.c.h.b16 %v2950
    %v3246 = vunpack.c.l.b16 %v2951
    %v3247 = vunpack.c.h.b16 %v2951
    %v3248 = vunpack.c.l.b16 %v2952
    %v3249 = vunpack.c.h.b16 %v2952
    %v3250 = vunpack.c.l.b16 %v2953
    %v3251 = vunpack.c.h.b16 %v2953
    %v3252 = vunpack.c.l.b16 %v2954
    %v3253 = vunpack.c.h.b16 %v2954
    %v3254 = vunpack.c.l.b16 %v2955
    %v3255 = vunpack.c.h.b16 %v2955
    %v3256 = vunpack.c.l.b16 %v2956
    %v3257 = vunpack.c.h.b16 %v2956
    %v3258 = vunpack.c.l.b16 %v2957
    %v3259 = vunpack.c.h.b16 %v2957
    %v3260 = vunpack.c.l.b16 %v2958
    %v3261 = vunpack.c.h.b16 %v2958
    %v3262 = vunpack.c.l.b16 %v2959
    %v3263 = vunpack.c.h.b16 %v2959
    %v3264 = vunpack.c.l.b16 %v2960
    %v3265 = vunpack.c.h.b16 %v2960
    %v3266 = vunpack.c.l.b16 %v2961
    %v3267 = vunpack.c.h.b16 %v2961
    %v3268 = vunpack.c.l.b16 %v2962
    %v3269 = vunpack.c.h.b16 %v2962
    %v3270 = vunpack.c.l.b16 %v2963
    %v3271 = vunpack.c.h.b16 %v2963
    %v3272 = vunpack.c.l.b16 %v2964
    %v3273 = vunpack.c.h.b16 %v2964
    %v3274 = vunpack.c.l.b16 %v2965
    %v3275 = vunpack.c.h.b16 %v2965
    %v3276 = vunpack.c.l.b16 %v2966
    %v3277 = vunpack.c.h.b16 %v2966
    %v3278 = vunpack.c.l.b16 %v2967
    %v3279 = vunpack.c.h.b16 %v2967
    %v3280 = vunpack.c.l.b16 %v2968
    %v3281 = vunpack.c.h.b16 %v2968
    %v3282 = vunpack.c.l.b16 %v2969
    %v3283 = vunpack.c.h.b16 %v2969
    %v3284 = vunpack.c.l.b16 %v2970
    %v3285 = vunpack.c.h.b16 %v2970
    %v3286 = vunpack.c.l.b16 %v2971
    %v3287 = vunpack.c.h.b16 %v2971
    %v3288 = vunpack.c.l.b16 %v2972
    %v3289 = vunpack.c.h.b16 %v2972
    %v3290 = vunpack.c.l.b16 %v2973
    %v3291 = vunpack.c.h.b16 %v2973
    %v3292 = vunpack.c.l.b16 %v2974
    %v3293 = vunpack.c.h.b16 %v2974
    %v3294 = vunpack.c.l.b16 %v2975
    %v3295 = vunpack.c.h.b16 %v2975
    %v3296 = vunpack.c.l.b16 %v2976
    %v3297 = vunpack.c.h.b16 %v2976
    %v3298 = vunpack.c.l.b16 %v2977
    %v3299 = vunpack.c.h.b16 %v2977
    %v3300 = vunpack.c.l.b16 %v2978
    %v3301 = vunpack.c.h.b16 %v2978
    %v3302 = vunpack.c.l.b16 %v2979
    %v3303 = vunpack.c.h.b16 %v2979
    %v3304 = vunpack.c.l.b16 %v2980
    %v3305 = vunpack.c.h.b16 %v2980
    %v3306 = vunpack.c.l.b16 %v2981
    %v3307 = vunpack.c.h.b16 %v2981
    %v3308 = vunpack.c.l.b16 %v2982
    %v3309 = vunpack.c.h.b16 %v2982
    %v3310 = vunpack.c.l.b16 %v2983
    %v3311 = vunpack.c.h.b16 %v2983
    %v3312 = vunpack.c.l.b16 %v2984
    %v3313 = vunpack.c.h.b16 %v2984
    %v3314 = vunpack.c.l.b16 %v2985
    %v3315 = vunpack.c.h.b16 %v2985
    %v3316 = vunpack.c.l.b16 %v2986
    %v3317 = vunpack.c.h.b16 %v2986
    %v3318 = vunpack.c.l.b16 %v2987
    %v3319 = vunpack.c.h.b16 %v2987
    %v3320 = vunpack.c.l.b16 %v2988
    %v3321 = vunpack.c.h.b16 %v2988
    %v3322 = vunpack.c.l.b16 %v2989
    %v3323 = vunpack.c.h.b16 %v2989
    %v3324 = vunpack.c.l.b16 %v2990
    %v3325 = vunpack.c.h.b16 %v2990
    %v3326 = vunpack.c.l.b16 %v2991
    %v3327 = vunpack.c.h.b16 %v2991
    %v3328 = vunpack.c.l.b16 %v2992
    %v3329 = vunpack.c.h.b16 %v2992
    %v3330 = vunpack.c.l.b16 %v2993
    %v3331 = vunpack.c.h.b16 %v2993
    %v3332 = vunpack.c.l.b16 %v2994
    %v3333 = vunpack.c.h.b16 %v2994
    %v3334 = vunpack.c.l.b16 %v2995
    %v3335 = vunpack.c.h.b16 %v2995
    %v3336 = vunpack.c.l.b16 %v2996
    %v3337 = vunpack.c.h.b16 %v2996
    %v3338 = vunpack.c.l.b16 %v2997
    %v3339 = vunpack.c.h.b16 %v2997
    %v3340 = vunpack.c.l.b16 %v2998
    %v3341 = vunpack.c.h.b16 %v2998
    %v3342 = vunpack.c.l.b16 %v2999
    %v3343 = vunpack.c.h.b16 %v2999
    %v3344 = vunpack.c.l.b16 %v3000
    %v3345 = vunpack.c.h.b16 %v3000
    %v3346 = vunpack.c.l.b16 %v3001
    %v3347 = vunpack.c.h.b16 %v3001
    %v3348 = vunpack.c.l.b16 %v3002
    %v3349 = vunpack.c.h.b16 %v3002
    %v3350 = vunpack.c.l.b16 %v3003
    %v3351 = vunpack.c.h.b16 %v3003
    %v3352 = vunpack.c.l.b16 %v3004
    %v3353 = vunpack.c.h.b16 %v3004
    %v3354 = vunpack.c.l.b16 %v3005
    %v3355 = vunpack.c.h.b16 %v3005
    %v3356 = vunpack.c.l.b16 %v3006
    %v3357 = vunpack.c.h.b16 %v3006
    %v3358 = vunpack.c.l.b16 %v3007
    %v3359 = vunpack.c.h.b16 %v3007
    %v3360 = vunpack.c.l.b16 %v3008
    %v3361 = vunpack.c.h.b16 %v3008
    %v3362 = vunpack.c.l.b16 %v3009
    %v3363 = vunpack.c.h.b16 %v3009
    %v3364 = vunpack.c.l.b16 %v3010
    %v3365 = vunpack.c.h.b16 %v3010
    %v3366 = vunpack.c.l.b16 %v3011
    %v3367 = vunpack.c.h.b16 %v3011
    %v3368 = vunpack.c.l.b16 %v3012
    %v3369 = vunpack.c.h.b16 %v3012
    %v3370 = vunpack.c.l.b16 %v3013
    %v3371 = vunpack.c.h.b16 %v3013
    %v3372 = vunpack.c.l.b16 %v3014
    %v3373 = vunpack.c.h.b16 %v3014
    %v3374 = vunpack.c.l.b16 %v3015
    %v3375 = vunpack.c.h.b16 %v3015
    %v3376 = vunpack.c.l.b16 %v3016
    %v3377 = vunpack.c.h.b16 %v3016
    %v3378 = vunpack.c.l.b16 %v3017
    %v3379 = vunpack.c.h.b16 %v3017
    %v3380 = vunpack.c.l.b16 %v3018
    %v3381 = vunpack.c.h.b16 %v3018
    %v3382 = vunpack.c.l.b16 %v3019
    %v3383 = vunpack.c.h.b16 %v3019
    %v3384 = vunpack.c.l.b16 %v3020
    %v3385 = vunpack.c.h.b16 %v3020
    %v3386 = vunpack.c.l.b16 %v3021
    %v3387 = vunpack.c.h.b16 %v3021
    %v3388 = vunpack.c.l.b16 %v3022
    %v3389 = vunpack.c.h.b16 %v3022
    %v3390 = vunpack.c.l.b16 %v3023
    %v3391 = vunpack.c.h.b16 %v3023
    %v3392 = vunpack.c.l.b16 %v3024
    %v3393 = vunpack.c.h.b16 %v3024
    %v3394 = vunpack.c.l.b16 %v3025
    %v3395 = vunpack.c.h.b16 %v3025
    %v3396 = vunpack.c.l.b16 %v3026
    %v3397 = vunpack.c.h.b16 %v3026
    %v3398 = vunpack.c.l.b16 %v3027
    %v3399 = vunpack.c.h.b16 %v3027
    %v3400 = vunpack.c.l.b16 %v3028
    %v3401 = vunpack.c.h.b16 %v3028
    %v3402 = vunpack.c.l.b16 %v3029
    %v3403 = vunpack.c.h.b16 %v3029
    %v3404 = vunpack.c.l.b16 %v3030
    %v3405 = vunpack.c.h.b16 %v3030
    %v3406 = vunpack.c.l.b16 %v3031
    %v3407 = vunpack.c.h.b16 %v3031
    %v3408 = vunpack.c.l.b16 %v3032
    %v3409 = vunpack.c.h.b16 %v3032
    %v3410 = vunpack.c.l.b16 %v3033
    %v3411 = vunpack.c.h.b16 %v3033
    %v3412 = vunpack.c.l.b16 %v3034
    %v3413 = vunpack.c.h.b16 %v3034
    %v3414 = vunpack.c.l.b16 %v3035
    %v3415 = vunpack.c.h.b16 %v3035
    %v3416 = vunpack.c.l.b16 %v3036
    %v3417 = vunpack.c.h.b16 %v3036
    %v3418 = vunpack.c.l.b16 %v3037
    %v3419 = vunpack.c.h.b16 %v3037
    %v3420 = vunpack.c.l.b16 %v3038
    %v3421 = vunpack.c.h.b16 %v3038
    %v3422 = vunpack.c.l.b16 %v3039
    %v3423 = vunpack.c.h.b16 %v3039
    %v3424 = vunpack.c.l.b16 %v3040
    %v3425 = vunpack.c.h.b16 %v3040
    %v3426 = vunpack.c.l.b16 %v3041
    %v3427 = vunpack.c.h.b16 %v3041
    %v3428 = vunpack.c.l.b16 %v3042
    %v3429 = vunpack.c.h.b16 %v3042
    %v3430 = vunpack.c.l.b16 %v3043
    %v3431 = vunpack.c.h.b16 %v3043
    %v3432 = vunpack.c.l.b16 %v3044
    %v3433 = vunpack.c.h.b16 %v3044
    %v3434 = vunpack.c.l.b16 %v3045
    %v3435 = vunpack.c.h.b16 %v3045
    %v3436 = vpack.c.b16 %v3182, %v3180
    %v3437 = vpack.c.b16 %v3183, %v3181
    %v3438 = vpack.c.b16 %v3186, %v3184
    %v3439 = vpack.c.b16 %v3187, %v3185
    %v3440 = vpack.c.b16 %v3190, %v3188
    %v3441 = vpack.c.b16 %v3191, %v3189
    %v3442 = vpack.c.b16 %v3194, %v3192
    %v3443 = vpack.c.b16 %v3195, %v3193
    %v3444 = vpack.c.b16 %v3198, %v3196
    %v3445 = vpack.c.b16 %v3199, %v3197
    %v3446 = vpack.c.b16 %v3202, %v3200
    %v3447 = vpack.c.b16 %v3203, %v3201
    %v3448 = vpack.c.b16 %v3206, %v3204
    %v3449 = vpack.c.b16 %v3207, %v3205
    %v3450 = vpack.c.b16 %v3210, %v3208
    %v3451 = vpack.c.b16 %v3211, %v3209
    %v3452 = vpack.c.b16 %v3214, %v3212
    %v3453 = vpack.c.b16 %v3215, %v3213
    %v3454 = vpack.c.b16 %v3218, %v3216
    %v3455 = vpack.c.b16 %v3219, %v3217
    %v3456 = vpack.c.b16 %v3222, %v3220
    %v3457 = vpack.c.b16 %v3223, %v3221
    %v3458 = vpack.c.b16 %v3226, %v3224
    %v3459 = vpack.c.b16 %v3227, %v3225
    %v3460 = vpack.c.b16 %v3230, %v3228
    %v3461 = vpack.c.b16 %v3231, %v3229
    %v3462 = vpack.c.b16 %v3234, %v3232
    %v3463 = vpack.c.b16 %v3235, %v3233
    %v3464 = vpack.c.b16 %v3238, %v3236
    %v3465 = vpack.c.b16 %v3239, %v3237
    %v3466 = vpack.c.b16 %v3242, %v3240
    %v3467 = vpack.c.b16 %v3243, %v3241
    %v3468 = vpack.c.b16 %v3246, %v3244
    %v3469 = vpack.c.b16 %v3247, %v3245
    %v3470 = vpack.c.b16 %v3250, %v3248
    %v3471 = vpack.c.b16 %v3251, %v3249
    %v3472 = vpack.c.b16 %v3254, %v3252
    %v3473 = vpack.c.b16 %v3255, %v3253
    %v3474 = vpack.c.b16 %v3258, %v3256
    %v3475 = vpack.c.b16 %v3259, %v3257
    %v3476 = vpack.c.b16 %v3262, %v3260
    %v3477 = vpack.c.b16 %v3263, %v3261
    %v3478 = vpack.c.b16 %v3266, %v3264
    %v3479 = vpack.c.b16 %v3267, %v3265
    %v3480 = vpack.c.b16 %v3270, %v3268
    %v3481 = vpack.c.b16 %v3271, %v3269
    %v3482 = vpack.c.b16 %v3274, %v3272
    %v3483 = vpack.c.b16 %v3275, %v3273
    %v3484 = vpack.c.b16 %v3278, %v3276
    %v3485 = vpack.c.b16 %v3279, %v3277
    %v3486 = vpack.c.b16 %v3282, %v3280
    %v3487 = vpack.c.b16 %v3283, %v3281
    %v3488 = vpack.c.b16 %v3286, %v3284
    %v3489 = vpack.c.b16 %v3287, %v3285
    %v3490 = vpack.c.b16 %v3290, %v3288
    %v3491 = vpack.c.b16 %v3291, %v3289
    %v3492 = vpack.c.b16 %v3294, %v3292
    %v3493 = vpack.c.b16 %v3295, %v3293
    %v3494 = vpack.c.b16 %v3298, %v3296
    %v3495 = vpack.c.b16 %v3299, %v3297
    %v3496 = vpack.c.b16 %v3302, %v3300
    %v3497 = vpack.c.b16 %v3303, %v3301
    %v3498 = vpack.c.b16 %v3306, %v3304
    %v3499 = vpack.c.b16 %v3307, %v3305
    %v3500 = vpack.c.b16 %v3310, %v3308
    %v3501 = vpack.c.b16 %v3311, %v3309
    %v3502 = vpack.c.b16 %v3314, %v3312
    %v3503 = vpack.c.b16 %v3315, %v3313
    %v3504 = vpack.c.b16 %v3318, %v3316
    %v3505 = vpack.c.b16 %v3319, %v3317
    %v3506 = vpack.c.b16 %v3322, %v3320
    %v3507 = vpack.c.b16 %v3323, %v3321
    %v3508 = vpack.c.b16 %v3326, %v3324
    %v3509 = vpack.c.b16 %v3327, %v3325
    %v3510 = vpack.c.b16 %v3330, %v3328
    %v3511 = vpack.c.b16 %v3331, %v3329
    %v3512 = vpack.c.b16 %v3334, %v3332
    %v3513 = vpack.c.b16 %v3335, %v3333
    %v3514 = vpack.c.b16 %v3338, %v3336
    %v3515 = vpack.c.b16 %v3339, %v3337
    %v3516 = vpack.c.b16 %v3342, %v3340
    %v3517 = vpack.c.b16 %v3343, %v3341
    %v3518 = vpack.c.b16 %v3346, %v3344
    %v3519 = vpack.c.b16 %v3347, %v3345
    %v3520 = vpack.c.b16 %v3350, %v3348
    %v3521 = vpack.c.b16 %v3351, %v3349
    %v3522 = vpack.c.b16 %v3354, %v3352
    %v3523 = vpack.c.b16 %v3355, %v3353
    %v3524 = vpack.c.b16 %v3358, %v3356
    %v3525 = vpack.c.b16 %v3359, %v3357
    %v3526 = vpack.c.b16 %v3362, %v3360
    %v3527 = vpack.c.b16 %v3363, %v3361
    %v3528 = vpack.c.b16 %v3366, %v3364
    %v3529 = vpack.c.b16 %v3367, %v3365
    %v3530 = vpack.c.b16 %v3370, %v3368
    %v3531 = vpack.c.b16 %v3371, %v3369
    %v3532 = vpack.c.b16 %v3374, %v3372
    %v3533 = vpack.c.b16 %v3375, %v3373
    %v3534 = vpack.c.b16 %v3378, %v3376
    %v3535 = vpack.c.b16 %v3379, %v3377
    %v3536 = vpack.c.b16 %v3382, %v3380
    %v3537 = vpack.c.b16 %v3383, %v3381
    %v3538 = vpack.c.b16 %v3386, %v3384
    %v3539 = vpack.c.b16 %v3387, %v3385
    %v3540 = vpack.c.b16 %v3390, %v3388
    %v3541 = vpack.c.b16 %v3391, %v3389
    %v3542 = vpack.c.b16 %v3394, %v3392
    %v3543 = vpack.c.b16 %v3395, %v3393
    %v3544 = vpack.c.b16 %v3398, %v3396
    %v3545 = vpack.c.b16 %v3399, %v3397
    %v3546 = vpack.c.b16 %v3402, %v3400
    %v3547 = vpack.c.b16 %v3403, %v3401
    %v3548 = vpack.c.b16 %v3406, %v3404
    %v3549 = vpack.c.b16 %v3407, %v3405
    %v3550 = vpack.c.b16 %v3410, %v3408
    %v3551 = vpack.c.b16 %v3411, %v3409
    %v3552 = vpack.c.b16 %v3414, %v3412
    %v3553 = vpack.c.b16 %v3415, %v3413
    %v3554 = vpack.c.b16 %v3418, %v3416
    %v3555 = vpack.c.b16 %v3419, %v3417
    %v3556 = vpack.c.b16 %v3422, %v3420
    %v3557 = vpack.c.b16 %v3423, %v3421
    %v3558 = vpack.c.b16 %v3426, %v3424
    %v3559 = vpack.c.b16 %v3427, %v3425
    %v3560 = vpack.c.b16 %v3430, %v3428
    %v3561 = vpack.c.b16 %v3431, %v3429
    %v3562 = vpack.c.b16 %v3434, %v3432
    %v3563 = vpack.c.b16 %v3435, %v3433
    %3692 = vmatpush.bf16.msra.mxu0 %v3450
    %3693 = vmatpush.bf16.msra.mxu0 %v3448
    %3694 = vmatpush.bf16.msra.mxu0 %v3446
    %3695 = vmatpush.bf16.msra.mxu0 %v3444
    %3696 = vmatpush.bf16.msra.mxu0 %v3442
    %3697 = vmatpush.bf16.msra.mxu0 %v3440
    %3698 = vmatpush.bf16.msra.mxu0 %v3438
    %3699 = vmatpush.bf16.msra.mxu0 %v3436
    %3700 = vmatmul.bf16.gmra.mxu0 %v2910
    %v3701 = vpop.f32.mrf.mxu0
    %v3702 = vadd.f32 %v3048, %v3701
    %v3703 = vpop.f32.mrf.mxu0
    %3704 = vdwg.mxu0
    %3705 = vmatpush.bf16.msra.mxu0 %v3466
    %3706 = vmatpush.bf16.msra.mxu0 %v3464
    %3707 = vmatpush.bf16.msra.mxu0 %v3462
    %3708 = vmatpush.bf16.msra.mxu0 %v3460
    %3709 = vmatpush.bf16.msra.mxu0 %v3458
    %3710 = vmatpush.bf16.msra.mxu0 %v3456
    %3711 = vmatpush.bf16.msra.mxu0 %v3454
    %3712 = vmatpush.bf16.msra.mxu0 %v3452
    %3713 = vmatmul.bf16.gmra.mxu0 %v2911
    %v3714 = vpop.f32.mrf.mxu0
    %v3715 = vadd.f32 %v3702, %v3714
    %v3716 = vpop.f32.mrf.mxu0
    %3717 = vdwg.mxu0
    %3718 = vmatpush.bf16.msra.mxu0 %v3482
    %3719 = vmatpush.bf16.msra.mxu0 %v3480
    %3720 = vmatpush.bf16.msra.mxu0 %v3478
    %3721 = vmatpush.bf16.msra.mxu0 %v3476
    %3722 = vmatpush.bf16.msra.mxu0 %v3474
    %3723 = vmatpush.bf16.msra.mxu0 %v3472
    %3724 = vmatpush.bf16.msra.mxu0 %v3470
    %3725 = vmatpush.bf16.msra.mxu0 %v3468
    %3726 = vmatmul.bf16.gmra.mxu0 %v2912
    %v3727 = vpop.f32.mrf.mxu0
    %v3728 = vadd.f32 %v3715, %v3727
    %v3729 = vpop.f32.mrf.mxu0
    %3730 = vdwg.mxu0
    %3731 = vmatpush.bf16.msra.mxu0 %v3498
    %3732 = vmatpush.bf16.msra.mxu0 %v3496
    %3733 = vmatpush.bf16.msra.mxu0 %v3494
    %3734 = vmatpush.bf16.msra.mxu0 %v3492
    %3735 = vmatpush.bf16.msra.mxu0 %v3490
    %3736 = vmatpush.bf16.msra.mxu0 %v3488
    %3737 = vmatpush.bf16.msra.mxu0 %v3486
    %3738 = vmatpush.bf16.msra.mxu0 %v3484
    %3739 = vmatmul.bf16.gmra.mxu0 %v2913
    %v3740 = vpop.f32.mrf.mxu0
    %v3741 = vadd.f32 %v3728, %v3740
    %v3742 = vpop.f32.mrf.mxu0
    %3743 = vdwg.mxu0
    %3744 = vmatpush.bf16.msra.mxu0 %v3514
    %3745 = vmatpush.bf16.msra.mxu0 %v3512
    %3746 = vmatpush.bf16.msra.mxu0 %v3510
    %3747 = vmatpush.bf16.msra.mxu0 %v3508
    %3748 = vmatpush.bf16.msra.mxu0 %v3506
    %3749 = vmatpush.bf16.msra.mxu0 %v3504
    %3750 = vmatpush.bf16.msra.mxu0 %v3502
    %3751 = vmatpush.bf16.msra.mxu0 %v3500
    %3752 = vmatmul.bf16.gmra.mxu0 %v2914
    %v3753 = vpop.f32.mrf.mxu0
    %v3754 = vadd.f32 %v3741, %v3753
    %v3755 = vpop.f32.mrf.mxu0
    %3756 = vdwg.mxu0
    %3757 = vmatpush.bf16.msra.mxu0 %v3530
    %3758 = vmatpush.bf16.msra.mxu0 %v3528
    %3759 = vmatpush.bf16.msra.mxu0 %v3526
    %3760 = vmatpush.bf16.msra.mxu0 %v3524
    %3761 = vmatpush.bf16.msra.mxu0 %v3522
    %3762 = vmatpush.bf16.msra.mxu0 %v3520
    %3763 = vmatpush.bf16.msra.mxu0 %v3518
    %3764 = vmatpush.bf16.msra.mxu0 %v3516
    %3765 = vmatmul.bf16.gmra.mxu0 %v2915
    %v3766 = vpop.f32.mrf.mxu0
    %v3767 = vadd.f32 %v3754, %v3766
    %v3768 = vpop.f32.mrf.mxu0
    %3769 = vdwg.mxu0
    %3770 = vmatpush.bf16.msra.mxu0 %v3546
    %3771 = vmatpush.bf16.msra.mxu0 %v3544
    %3772 = vmatpush.bf16.msra.mxu0 %v3542
    %3773 = vmatpush.bf16.msra.mxu0 %v3540
    %3774 = vmatpush.bf16.msra.mxu0 %v3538
    %3775 = vmatpush.bf16.msra.mxu0 %v3536
    %3776 = vmatpush.bf16.msra.mxu0 %v3534
    %3777 = vmatpush.bf16.msra.mxu0 %v3532
    %3778 = vmatmul.bf16.gmra.mxu0 %v2916
    %v3779 = vpop.f32.mrf.mxu0
    %v3780 = vadd.f32 %v3767, %v3779
    %v3781 = vpop.f32.mrf.mxu0
    %3782 = vdwg.mxu0
    %3783 = vmatpush.bf16.msra.mxu0 %v3562
    %3784 = vmatpush.bf16.msra.mxu0 %v3560
    %3785 = vmatpush.bf16.msra.mxu0 %v3558
    %3786 = vmatpush.bf16.msra.mxu0 %v3556
    %3787 = vmatpush.bf16.msra.mxu0 %v3554
    %3788 = vmatpush.bf16.msra.mxu0 %v3552
    %3789 = vmatpush.bf16.msra.mxu0 %v3550
    %3790 = vmatpush.bf16.msra.mxu0 %v3548
    %3791 = vmatmul.bf16.gmra.mxu0 %v2917
    %v3792 = vpop.f32.mrf.mxu0
    %v3793 = vadd.f32 %v3780, %v3792
    %v3794 = vpop.f32.mrf.mxu0
    %3795 = vdwg.mxu0
    %3796 = vmatpush.bf16.msra.mxu0 %v3451
    %3797 = vmatpush.bf16.msra.mxu0 %v3449
    %3798 = vmatpush.bf16.msra.mxu0 %v3447
    %3799 = vmatpush.bf16.msra.mxu0 %v3445
    %3800 = vmatpush.bf16.msra.mxu0 %v3443
    %3801 = vmatpush.bf16.msra.mxu0 %v3441
    %3802 = vmatpush.bf16.msra.mxu0 %v3439
    %3803 = vmatpush.bf16.msra.mxu0 %v3437
    %3804 = vmatmul.bf16.gmra.mxu0 %v2910
    %v3805 = vpop.f32.mrf.mxu0
    %v3806 = vadd.f32 %v3049, %v3805
    %v3807 = vpop.f32.mrf.mxu0
    %3808 = vdwg.mxu0
    %3809 = vmatpush.bf16.msra.mxu0 %v3467
    %3810 = vmatpush.bf16.msra.mxu0 %v3465
    %3811 = vmatpush.bf16.msra.mxu0 %v3463
    %3812 = vmatpush.bf16.msra.mxu0 %v3461
    %3813 = vmatpush.bf16.msra.mxu0 %v3459
    %3814 = vmatpush.bf16.msra.mxu0 %v3457
    %3815 = vmatpush.bf16.msra.mxu0 %v3455
    %3816 = vmatpush.bf16.msra.mxu0 %v3453
    %3817 = vmatmul.bf16.gmra.mxu0 %v2911
    %v3818 = vpop.f32.mrf.mxu0
    %v3819 = vadd.f32 %v3806, %v3818
    %v3820 = vpop.f32.mrf.mxu0
    %3821 = vdwg.mxu0
    %3822 = vmatpush.bf16.msra.mxu0 %v3483
    %3823 = vmatpush.bf16.msra.mxu0 %v3481
    %3824 = vmatpush.bf16.msra.mxu0 %v3479
    %3825 = vmatpush.bf16.msra.mxu0 %v3477
    %3826 = vmatpush.bf16.msra.mxu0 %v3475
    %3827 = vmatpush.bf16.msra.mxu0 %v3473
    %3828 = vmatpush.bf16.msra.mxu0 %v3471
    %3829 = vmatpush.bf16.msra.mxu0 %v3469
    %3830 = vmatmul.bf16.gmra.mxu0 %v2912
    %v3831 = vpop.f32.mrf.mxu0
    %v3832 = vadd.f32 %v3819, %v3831
    %v3833 = vpop.f32.mrf.mxu0
    %3834 = vdwg.mxu0
    %3835 = vmatpush.bf16.msra.mxu0 %v3499
    %3836 = vmatpush.bf16.msra.mxu0 %v3497
    %3837 = vmatpush.bf16.msra.mxu0 %v3495
    %3838 = vmatpush.bf16.msra.mxu0 %v3493
    %3839 = vmatpush.bf16.msra.mxu0 %v3491
    %3840 = vmatpush.bf16.msra.mxu0 %v3489
    %3841 = vmatpush.bf16.msra.mxu0 %v3487
    %3842 = vmatpush.bf16.msra.mxu0 %v3485
    %3843 = vmatmul.bf16.gmra.mxu0 %v2913
    %v3844 = vpop.f32.mrf.mxu0
    %v3845 = vadd.f32 %v3832, %v3844
    %v3846 = vpop.f32.mrf.mxu0
    %3847 = vdwg.mxu0
    %3848 = vmatpush.bf16.msra.mxu0 %v3515
    %3849 = vmatpush.bf16.msra.mxu0 %v3513
    %3850 = vmatpush.bf16.msra.mxu0 %v3511
    %3851 = vmatpush.bf16.msra.mxu0 %v3509
    %3852 = vmatpush.bf16.msra.mxu0 %v3507
    %3853 = vmatpush.bf16.msra.mxu0 %v3505
    %3854 = vmatpush.bf16.msra.mxu0 %v3503
    %3855 = vmatpush.bf16.msra.mxu0 %v3501
    %3856 = vmatmul.bf16.gmra.mxu0 %v2914
    %v3857 = vpop.f32.mrf.mxu0
    %v3858 = vadd.f32 %v3845, %v3857
    %v3859 = vpop.f32.mrf.mxu0
    %3860 = vdwg.mxu0
    %3861 = vmatpush.bf16.msra.mxu0 %v3531
    %3862 = vmatpush.bf16.msra.mxu0 %v3529
    %3863 = vmatpush.bf16.msra.mxu0 %v3527
    %3864 = vmatpush.bf16.msra.mxu0 %v3525
    %3865 = vmatpush.bf16.msra.mxu0 %v3523
    %3866 = vmatpush.bf16.msra.mxu0 %v3521
    %3867 = vmatpush.bf16.msra.mxu0 %v3519
    %3868 = vmatpush.bf16.msra.mxu0 %v3517
    %3869 = vmatmul.bf16.gmra.mxu0 %v2915
    %v3870 = vpop.f32.mrf.mxu0
    %v3871 = vadd.f32 %v3858, %v3870
    %v3872 = vpop.f32.mrf.mxu0
    %3873 = vdwg.mxu0
    %3874 = vmatpush.bf16.msra.mxu0 %v3547
    %3875 = vmatpush.bf16.msra.mxu0 %v3545
    %3876 = vmatpush.bf16.msra.mxu0 %v3543
    %3877 = vmatpush.bf16.msra.mxu0 %v3541
    %3878 = vmatpush.bf16.msra.mxu0 %v3539
    %3879 = vmatpush.bf16.msra.mxu0 %v3537
    %3880 = vmatpush.bf16.msra.mxu0 %v3535
    %3881 = vmatpush.bf16.msra.mxu0 %v3533
    %3882 = vmatmul.bf16.gmra.mxu0 %v2916
    %v3883 = vpop.f32.mrf.mxu0
    %v3884 = vadd.f32 %v3871, %v3883
    %v3885 = vpop.f32.mrf.mxu0
    %3886 = vdwg.mxu0
    %3887 = vmatpush.bf16.msra.mxu0 %v3563
    %3888 = vmatpush.bf16.msra.mxu0 %v3561
    %3889 = vmatpush.bf16.msra.mxu0 %v3559
    %3890 = vmatpush.bf16.msra.mxu0 %v3557
    %3891 = vmatpush.bf16.msra.mxu0 %v3555
    %3892 = vmatpush.bf16.msra.mxu0 %v3553
    %3893 = vmatpush.bf16.msra.mxu0 %v3551
    %3894 = vmatpush.bf16.msra.mxu0 %v3549
    %3895 = vmatmul.bf16.gmra.mxu0 %v2917
    %v3896 = vpop.f32.mrf.mxu0
    %v3897 = vadd.f32 %v3884, %v3896
    %v3898 = vpop.f32.mrf.mxu0
    %3899 = vdwg.mxu0
    %v3900 = vtanh.pop %v3793
    %v3901 = vtanh.pop %v3897
    %v3902 = vpack.c.bf16 %v3901, %v3900
    %v3904 = vrot.slane %v3902, 3
    %vm3905 = vcmask 1040384
    %v3908 = vsel %vm3905, %v3902, %v3904
    %vm3909 = vcmask 1041409
    %v3910 = vsel %vm3909, %v3902, %v3904
    %v3912 = vrot.slane %v3910, 1
    %vm3913 = vcmask 1042434
    %v3914 = vsel %vm3913, %v3902, %v3904
    %v3916 = vrot.slane %v3914, 2
    %vm3917 = vcmask 1043459
    %v3918 = vsel %vm3917, %v3902, %v3904
    %v3920 = vrot.slane %v3918, 3
    %3925 = vst [vmem:[#allocation9] sm:$0x3] %v3908
    %3926 = vst [vmem:[#allocation9 + $0x2] sm:$0x3] %v3912
    %3927 = vst [vmem:[#allocation9 + $0x4] sm:$0x3] %v3916
    %3928 = vst [vmem:[#allocation9 + $0x6] sm:$0x3] %v3920
    // Predicated region
    $region54: #{simple_generator_forward.1} parent=1 // pred_check
      _
    $region55: #{simple_generator_forward.1} parent=1 // pred_check_branch
      %3930 = sbr.rel (0) target = $region57
    $region56: #{simple_generator_forward.1} parent=1 // pred_region
      // Predicated region
      $region58: #{simple_generator_forward.1} parent=56 // pred_check
        _
      $region59: #{simple_generator_forward.1} parent=56 // pred_check_branch
        %3932 = sbr.rel (0) target = $region61
      $region60: #{simple_generator_forward.1} parent=56 // pred_region
        // Predicated region
        $region62: #{simple_generator_forward.1} parent=60 // pred_check
          _
        $region63: #{simple_generator_forward.1} parent=60 // pred_check_branch
          %3934 = sbr.rel target = $region65
        $region64: #{simple_generator_forward.1} parent=60 // pred_region
          // Predicated region
          $region77: #{simple_generator_forward.1} parent=64 // pred_check
            _
          $region78: #{simple_generator_forward.1} parent=64 // pred_check_branch
            %3950 = sbr.rel (0) target = $region80
          $region79: #{simple_generator_forward.1} parent=64 // pred_region
            %s3952 = ssub.s32 4, 1
            loop: start=0, step=1, limit=1
            $region81: #{simple_generator_forward.1} parent=79 // loop_pre_header
              _
            $region82: #{simple_generator_forward.1} parent=79 // loop_header
              %s3954 = sphi 0, %s3958
              %p3955 = scmp.ge.s32.totalorder %s3954, 1
              %s3959 = sphi [#allocation9], [#allocation9]
              %s3960 = sphi %s9, %s9
            $region83: #{simple_generator_forward.1} parent=79 // loop_header_branch
              %3957 = sbr.rel (%p3955) target = $region87
            $region84: #{simple_generator_forward.1} parent=79 // loop_body
              %v3961 = vld [vmem:[%s3959] sm:%s3952]
              %3962 = vst [vmem:[%s3960] sm:%s3952] %v3961
            $region85: #{simple_generator_forward.1} parent=79 // loop_footer
              %s3958 = sadd.s32 1, %s3954
            $region86: #{simple_generator_forward.1} parent=79 // loop_footer_branch
              %3953 = sbr.rel target = $region82
            $region87: #{simple_generator_forward.1} parent=79 // loop_exit
              _
          $region80: #{simple_generator_forward.1} parent=64 // pred_fallthru
            _
        $region65: #{simple_generator_forward.1} parent=60 // pred_fallthru
          _
        // Predicated region
        $region66: #{simple_generator_forward.1} parent=60 // pred_check
          _
        $region67: #{simple_generator_forward.1} parent=60 // pred_check_branch
          %3936 = sbr.rel (0) target = $region69
        $region68: #{simple_generator_forward.1} parent=60 // pred_region
          %s3938 = ssub.s32 4, 1
          loop: start=0, step=1, limit=1
          $region70: #{simple_generator_forward.1} parent=68 // loop_pre_header
            _
          $region71: #{simple_generator_forward.1} parent=68 // loop_header
            %s3940 = sphi 0, %s3944
            %p3941 = scmp.ge.s32.totalorder %s3940, 1
            %s3945 = sphi [#allocation9], [#allocation9]
            %s3946 = sphi %s9, %s9
          $region72: #{simple_generator_forward.1} parent=68 // loop_header_branch
            %3943 = sbr.rel (%p3941) target = $region76
          $region73: #{simple_generator_forward.1} parent=68 // loop_body
            %v3947 = vld [vmem:[%s3945] sm:%s3938]
            %3948 = vst [vmem:[%s3946] sm:%s3938] %v3947
          $region74: #{simple_generator_forward.1} parent=68 // loop_footer
            %s3944 = sadd.s32 1, %s3940
          $region75: #{simple_generator_forward.1} parent=68 // loop_footer_branch
            %3939 = sbr.rel target = $region71
          $region76: #{simple_generator_forward.1} parent=68 // loop_exit
            _
        $region69: #{simple_generator_forward.1} parent=60 // pred_fallthru
          _
      $region61: #{simple_generator_forward.1} parent=56 // pred_fallthru
        _
      %3963 = vnop
    $region57: #{simple_generator_forward.1} parent=1 // pred_fallthru
      _
    // Predicated region
    $region88: #{simple_generator_forward.1} parent=1 // pred_check
      _
    $region89: #{simple_generator_forward.1} parent=1 // pred_check_branch
      %3965 = sbr.rel (0) target = $region91
    $region90: #{simple_generator_forward.1} parent=1 // pred_region
      _
    $region91: #{simple_generator_forward.1} parent=1 // pred_fallthru
      _
    %3966 = vsyncpa [#allocation3], 1
    %3967 = vsyncpa [#allocation5], 1
    %3968 = vsyncpa [#allocation8], 1

</llo_original>
